<compile_context>
chip_gen: v7x
topology: tpu7x:2x2x1
jax: 0.10.0
libtpu: 0.0.40
codegen_flags: <defaults>
</compile_context>

<pallas_src>
import functools

import jax
import jax.numpy as jnp
from jax.experimental import pallas as pl
from jax.experimental.pallas import tpu as pltpu

EMBED = 768          # backbone output channels / attention embed_dim
NUM_HEADS = 1        # SelfAttention(embed_dim=768, num_heads=1) -> head split is identity
BATCH_TILE = 32      # batch elements packed per grid step (M = BATCH_TILE * s_pad >= 256)


def _attn_cls_kernel(x_ref, wq_ref, wk_ref, wv_ref, bq_ref, bk_ref, bv_ref,
                     whead_ref, bhead_ref,
                     scores_ref, attn_ref, *, scale, seq_len, bt, s_pad):
    """One batch tile: qkv proj -> single-head attention -> fused (proj_out @ cls) logit."""
    # (bt, s_pad, E) -> (bt*s_pad, E): all batch elements share the matmul M dimension.
    # Both trailing dims are tile-aligned (16, 768) so the reshape is layout-free.
    x = x_ref[...].reshape(bt * s_pad, EMBED)                         # bf16 (M, E)

    # Three narrower projections instead of one (M, 3E) intermediate (lower vreg/VMEM
    # pressure); bf16 x bf16 -> f32 accumulation on the MXU.
    q = jnp.dot(x, wq_ref[...], preferred_element_type=jnp.float32) + bq_ref[...]
    k = jnp.dot(x, wk_ref[...], preferred_element_type=jnp.float32) + bk_ref[...]
    v = jnp.dot(x, wv_ref[...], preferred_element_type=jnp.float32) + bv_ref[...]

    q3 = q.reshape(bt, s_pad, EMBED).astype(jnp.bfloat16)
    k3 = k.reshape(bt, s_pad, EMBED).astype(jnp.bfloat16)
    v3 = v.reshape(bt, s_pad, EMBED).astype(jnp.bfloat16)

    # Block-diagonal (per batch element) scaled attention scores; contraction is on the
    # last dim of both operands, so no k.T is ever materialised.
    s = jnp.einsum('bqd,bkd->bqk', q3, k3,
                   preferred_element_type=jnp.float32) * scale        # (bt, s_pad, s_pad)
    attn_ref[...] = s      # pre-softmax scores == what SelfAttention returns as "weights"

    # Softmax on the CLS row only (the only row consumed downstream), masking the
    # zero-padded key columns so they cannot leak into the normalisation.
    s_cls = s[:, 0:1, :]                                              # (bt, 1, s_pad)
    col = jax.lax.broadcasted_iota(jnp.int32, (bt, 1, s_pad), 2)
    s_cls = jnp.where(col < seq_len, s_cls, -1e30)
    m = jnp.max(s_cls, axis=-1, keepdims=True)
    e = jnp.exp(s_cls - m)
    w_cls = e / jnp.sum(e, axis=-1, keepdims=True)

    # CLS row of (attn_weights @ v), then the fused proj_out+classifier head in f32.
    o_cls = jnp.einsum('bqk,bkd->bqd', w_cls.astype(jnp.bfloat16), v3,
                       preferred_element_type=jnp.float32)            # (bt, 1, E)
    o_cls = o_cls.reshape(bt, EMBED)                                  # f32 (bt, E)
    logits = (jnp.dot(o_cls, whead_ref[...], preferred_element_type=jnp.float32)
              + bhead_ref[...])                                       # f32 (bt, 1)
    scores_ref[...] = logits.reshape(1, bt, 1)


@functools.partial(jax.jit, static_argnames=("batch_tile",))
def _head_arrays(feat, params, batch_tile):
    b, c, h, w, d = feat.shape
    assert c == EMBED
    t = h * w * d
    seq = t + 1                                    # CLS + tokens
    s_pad = ((seq + 15) // 16) * 16                # bf16 sublane-tile aligned

    # Batch tiling: pack up to `batch_tile` elements per step (M = bt*s_pad >= 256 on
    # large batches), but always emit >= 2 grid steps when b > 1 so "parallel" can use
    # both of v7x's TensorCores.
    n_tiles = 1 if b == 1 else max(2, pl.cdiv(b, batch_tile))
    bt = pl.cdiv(b, n_tiles)
    b_pad = n_tiles * bt

    # 'b c h w d -> b (h w d) c', prepend CLS, pad seq/batch.  Under jit this is a single
    # fused XLA pass over the (small) final feature map; all heavy math is in the kernel.
    tokens = jnp.transpose(feat.reshape(b, c, t), (0, 2, 1))          # (b, t, E)
    cls = jnp.broadcast_to(params["cls_token"][None, :, :], (b, 1, c))
    x = jnp.concatenate([cls, tokens], axis=1)
    x = jnp.pad(x, ((0, b_pad - b), (0, s_pad - seq), (0, 0))).astype(jnp.bfloat16)

    # bf16 weights for the MXU projections (halves weight traffic); biases stay f32.
    wq = params["w_qkv"][:, 0 * EMBED:1 * EMBED].astype(jnp.bfloat16)
    wk = params["w_qkv"][:, 1 * EMBED:2 * EMBED].astype(jnp.bfloat16)
    wv = params["w_qkv"][:, 2 * EMBED:3 * EMBED].astype(jnp.bfloat16)
    bq = params["b_qkv"][:, 0 * EMBED:1 * EMBED]
    bk = params["b_qkv"][:, 1 * EMBED:2 * EMBED]
    bv = params["b_qkv"][:, 2 * EMBED:3 * EMBED]

    # Fold proj_out into the classifier head (done in f32 -> exact): the attention output
    # is only ever consumed through tumor_classifier, so
    #   (o @ W_out + b_out) @ W_cls + b_cls == o @ (W_out @ W_cls) + (b_out @ W_cls + b_cls)
    w_head = jnp.dot(params["w_out"], params["w_cls"],
                     preferred_element_type=jnp.float32)              # (E, 1) f32
    b_head = (jnp.dot(params["b_out"], params["w_cls"],
                      preferred_element_type=jnp.float32)
              + params["b_cls"])                                      # (1, 1) f32

    scale = float(EMBED // NUM_HEADS) ** -0.5
    kernel = functools.partial(_attn_cls_kernel, scale=scale, seq_len=seq,
                               bt=bt, s_pad=s_pad)

    const2 = lambda i: (0, 0)      # weights stay resident: block index never changes
    resident = dict(pipeline_mode=pl.Buffered(1))   # never refetched -> single-buffer
    grid_spec = pltpu.PrefetchScalarGridSpec(
        num_scalar_prefetch=0,
        grid=(n_tiles,),
        in_specs=[
            pl.BlockSpec((bt, s_pad, EMBED), lambda i: (i, 0, 0)),    # x (batch tile)
            pl.BlockSpec((EMBED, EMBED), const2, **resident),         # W_q
            pl.BlockSpec((EMBED, EMBED), const2, **resident),         # W_k
            pl.BlockSpec((EMBED, EMBED), const2, **resident),         # W_v
            pl.BlockSpec((1, EMBED), const2, **resident),             # b_q
            pl.BlockSpec((1, EMBED), const2, **resident),             # b_k
            pl.BlockSpec((1, EMBED), const2, **resident),             # b_v
            pl.BlockSpec((EMBED, 1), const2, **resident),             # w_head (fused)
            pl.BlockSpec((1, 1), const2, **resident),                 # b_head (fused)
        ],
        out_specs=[
            pl.BlockSpec((1, bt, 1), lambda i: (i, 0, 0)),            # logits
            pl.BlockSpec((bt, s_pad, s_pad), lambda i: (i, 0, 0)),    # attention scores
        ],
    )

    scores_pad, attn_pad = pl.pallas_call(
        kernel,
        out_shape=(
            jax.ShapeDtypeStruct((n_tiles, bt, 1), jnp.float32),
            jax.ShapeDtypeStruct((b_pad, s_pad, s_pad), jnp.float32),
        ),
        grid_spec=grid_spec,
        compiler_params=pltpu.CompilerParams(
            dimension_semantics=("parallel",),       # shards batch tiles across v7x's 2 TCs
            vmem_limit_bytes=32 * 1024 * 1024,       # well inside v7x's 64 MiB physical VMEM
        ),
    )(x, wq, wk, wv, bq, bk, bv, w_head, b_head)

    scores = scores_pad.reshape(b_pad, 1)[:b]
    # sigmoid(x) >= 0.5  <=>  x >= 0, so the in-kernel sigmoid is dropped entirely.
    preds = (scores >= 0.0).astype(jnp.float32)
    weights = attn_pad[:b, :seq, :seq].reshape(b, NUM_HEADS, seq, seq)
    return scores, preds, weights


def swin_classifier_head(feat, params, *, batch_tile=BATCH_TILE):
    """feat: (b, 768, h, w, d) backbone feature map (PyTorch NC-spatial layout)."""
    _, _, h, w, d = feat.shape
    scores, preds, weights = _head_arrays(feat, params, batch_tile=batch_tile)
    out = {"predictions": preds, "scores": scores}
    return out, weights, (h, w, d)


def init_params(key):
    """Deterministic synthetic parameters (shapes match the PyTorch module; linear
    weights are stored pre-transposed as (in, out) so the kernel does x @ W)."""
    ks = jax.random.split(key, 7)

    def lin_w(k, fan_in, fan_out):
        return jax.random.normal(k, (fan_in, fan_out), jnp.float32) * 0.02

    return {
        "cls_token": jax.random.truncated_normal(ks[0], -2.0, 2.0, (1, EMBED),
                                                 jnp.float32),
        "w_qkv": lin_w(ks[1], EMBED, 3 * EMBED),
        "b_qkv": jax.random.normal(ks[2], (1, 3 * EMBED), jnp.float32) * 0.02,
        "w_out": lin_w(ks[3], EMBED, EMBED),
        "b_out": jax.random.normal(ks[4], (1, EMBED), jnp.float32) * 0.02,
        "w_cls": jax.random.normal(ks[5], (EMBED, 1), jnp.float32) * 0.02,
        "b_cls": jax.random.normal(ks[6], (1, 1), jnp.float32) * 0.02,
    }


if __name__ == "__main__":
    key = jax.random.PRNGKey(0)
    pkey, fkey = jax.random.split(key)
    params = init_params(pkey)

    # Small synthetic "backbone output": batch=2, channels=768, spatial 2x2x2
    # (what the Swin-3D backbone would emit for a 64^3 input).
    b, h, w, d = 2, 2, 2, 2
    feat = jax.random.normal(fkey, (b, EMBED, h, w, d), jnp.float32)

    out, weights, hwd = swin_classifier_head(feat, params)
    jax.block_until_ready((out["predictions"], out["scores"], weights))

    S = 1 + h * w * d
    assert out["scores"].shape == (b, 1)
    assert out["predictions"].shape == (b, 1)
    assert weights.shape == (b, NUM_HEADS, S, S)
    assert hwd == (h, w, d)
    print("KERNEL_OK")
</pallas_src>

<mosaic_0001>
module attributes {stable_mosaic.version = 11 : i64} {
  func.func @_attn_cls_kernel(%arg0: i32, %arg1: memref<1x16x768xbf16, #tpu.memory_space<vmem>>, %arg2: memref<768x768xbf16, #tpu.memory_space<vmem>>, %arg3: memref<768x768xbf16, #tpu.memory_space<vmem>>, %arg4: memref<768x768xbf16, #tpu.memory_space<vmem>>, %arg5: memref<1x768xf32, #tpu.memory_space<vmem>>, %arg6: memref<1x768xf32, #tpu.memory_space<vmem>>, %arg7: memref<1x768xf32, #tpu.memory_space<vmem>>, %arg8: memref<768x1xf32, #tpu.memory_space<vmem>>, %arg9: memref<1x1xf32, #tpu.memory_space<vmem>>, %arg10: memref<1x1x1xf32, #tpu.memory_space<vmem>>, %arg11: memref<1x16x16xf32, #tpu.memory_space<vmem>>) attributes {dimension_semantics = [#tpu.dimension_semantics<parallel>], iteration_bounds = array<i64: 2>, scalar_prefetch = 0 : i64, scratch_operands = 0 : i64, tpu.core_type = #tpu.core_type<tc>, window_params = [{transform_indices = @transform_0, window_bounds = array<i64: 1, 16, 768>}, {pipeline_mode = #tpu.pipeline_mode<synchronous>, transform_indices = @transform_1, window_bounds = array<i64: 768, 768>}, {pipeline_mode = #tpu.pipeline_mode<synchronous>, transform_indices = @transform_2, window_bounds = array<i64: 768, 768>}, {pipeline_mode = #tpu.pipeline_mode<synchronous>, transform_indices = @transform_3, window_bounds = array<i64: 768, 768>}, {pipeline_mode = #tpu.pipeline_mode<synchronous>, transform_indices = @transform_4, window_bounds = array<i64: 1, 768>}, {pipeline_mode = #tpu.pipeline_mode<synchronous>, transform_indices = @transform_5, window_bounds = array<i64: 1, 768>}, {pipeline_mode = #tpu.pipeline_mode<synchronous>, transform_indices = @transform_6, window_bounds = array<i64: 1, 768>}, {pipeline_mode = #tpu.pipeline_mode<synchronous>, transform_indices = @transform_7, window_bounds = array<i64: 768, 1>}, {pipeline_mode = #tpu.pipeline_mode<synchronous>, transform_indices = @transform_8, window_bounds = array<i64: 1, 1>}, {transform_indices = @transform_9, window_bounds = array<i64: 1, 1, 1>}, {transform_indices = @transform_10, window_bounds = array<i64: 1, 16, 16>}]} {
    %c0 = arith.constant 0 : index
    %c0_0 = arith.constant 0 : index
    %c0_1 = arith.constant 0 : index
    %0 = vector.load %arg1[%c0, %c0_0, %c0_1] : memref<1x16x768xbf16, #tpu.memory_space<vmem>>, vector<1x16x768xbf16>
    %1 = vector.shape_cast %0 : vector<1x16x768xbf16> to vector<16x768xbf16>
    %c0_2 = arith.constant 0 : index
    %c0_3 = arith.constant 0 : index
    %2 = vector.load %arg2[%c0_2, %c0_3] : memref<768x768xbf16, #tpu.memory_space<vmem>>, vector<768x768xbf16>
    %cst = arith.constant dense<0.000000e+00> : vector<16x768xf32>
    %3 = tpu.matmul %1, %2, %cst {dimension_numbers = #tpu.dot_dimension_numbers<[1], [0], [0], [1], [0, 0, 1, 1], [], []>} : vector<16x768xbf16>, vector<768x768xbf16>, vector<16x768xf32> -> vector<16x768xf32>
    %c0_4 = arith.constant 0 : index
    %c0_5 = arith.constant 0 : index
    %4 = vector.load %arg5[%c0_4, %c0_5] : memref<1x768xf32, #tpu.memory_space<vmem>>, vector<1x768xf32>
    %5 = vector.broadcast %4 : vector<1x768xf32> to vector<16x768xf32>
    %6 = arith.addf %3, %5 : vector<16x768xf32>
    %c0_6 = arith.constant 0 : index
    %c0_7 = arith.constant 0 : index
    %7 = vector.load %arg3[%c0_6, %c0_7] : memref<768x768xbf16, #tpu.memory_space<vmem>>, vector<768x768xbf16>
    %cst_8 = arith.constant dense<0.000000e+00> : vector<16x768xf32>
    %8 = tpu.matmul %1, %7, %cst_8 {dimension_numbers = #tpu.dot_dimension_numbers<[1], [0], [0], [1], [0, 0, 1, 1], [], []>} : vector<16x768xbf16>, vector<768x768xbf16>, vector<16x768xf32> -> vector<16x768xf32>
    %c0_9 = arith.constant 0 : index
    %c0_10 = arith.constant 0 : index
    %9 = vector.load %arg6[%c0_9, %c0_10] : memref<1x768xf32, #tpu.memory_space<vmem>>, vector<1x768xf32>
    %10 = vector.broadcast %9 : vector<1x768xf32> to vector<16x768xf32>
    %11 = arith.addf %8, %10 : vector<16x768xf32>
    %c0_11 = arith.constant 0 : index
    %c0_12 = arith.constant 0 : index
    %12 = vector.load %arg4[%c0_11, %c0_12] : memref<768x768xbf16, #tpu.memory_space<vmem>>, vector<768x768xbf16>
    %cst_13 = arith.constant dense<0.000000e+00> : vector<16x768xf32>
    %13 = tpu.matmul %1, %12, %cst_13 {dimension_numbers = #tpu.dot_dimension_numbers<[1], [0], [0], [1], [0, 0, 1, 1], [], []>} : vector<16x768xbf16>, vector<768x768xbf16>, vector<16x768xf32> -> vector<16x768xf32>
    %c0_14 = arith.constant 0 : index
    %c0_15 = arith.constant 0 : index
    %14 = vector.load %arg7[%c0_14, %c0_15] : memref<1x768xf32, #tpu.memory_space<vmem>>, vector<1x768xf32>
    %15 = vector.broadcast %14 : vector<1x768xf32> to vector<16x768xf32>
    %16 = arith.addf %13, %15 : vector<16x768xf32>
    %17 = vector.shape_cast %6 : vector<16x768xf32> to vector<1x16x768xf32>
    %18 = arith.truncf %17 : vector<1x16x768xf32> to vector<1x16x768xbf16>
    %19 = vector.shape_cast %11 : vector<16x768xf32> to vector<1x16x768xf32>
    %20 = arith.truncf %19 : vector<1x16x768xf32> to vector<1x16x768xbf16>
    %21 = vector.shape_cast %16 : vector<16x768xf32> to vector<1x16x768xf32>
    %22 = arith.truncf %21 : vector<1x16x768xf32> to vector<1x16x768xbf16>
    "tpu.trace_start"() <{level = 10 : i32, message = "bqd,bkd->bqk"}> : () -> ()
    %cst_16 = arith.constant dense<0.000000e+00> : vector<1x16x16xf32>
    %23 = tpu.matmul %18, %20, %cst_16 {dimension_numbers = #tpu.dot_dimension_numbers<[2], [2], [1], [1], [0, 0, 0, 1, 1, 1], [0], [0]>} : vector<1x16x768xbf16>, vector<1x16x768xbf16>, vector<1x16x16xf32> -> vector<1x16x16xf32>
    "tpu.trace_stop"() : () -> ()
    %cst_17 = arith.constant 0.0360843912 : f32
    %24 = vector.broadcast %cst_17 : f32 to vector<1x16x16xf32>
    %25 = arith.mulf %23, %24 : vector<1x16x16xf32>
    %c0_18 = arith.constant 0 : index
    %c0_19 = arith.constant 0 : index
    %c0_20 = arith.constant 0 : index
    %26 = vector.load %arg11[%c0_18, %c0_19, %c0_20] : memref<1x16x16xf32, #tpu.memory_space<vmem>>, vector<1x16x16xf32>
    tpu.vector_store %arg11[%c0_18, %c0_19, %c0_20], %25 {strides = array<i32>} : memref<1x16x16xf32, #tpu.memory_space<vmem>>, vector<1x16x16xf32>,
    %27 = vector.extract_strided_slice %25 {offsets = [0, 0, 0], sizes = [1, 1, 16], strides = [1, 1, 1]} : vector<1x16x16xf32> to vector<1x1x16xf32>
    %28 = tpu.iota {dimensions = array<i32: 2>} : vector<1x1x16xi32>
    %c9_i32 = arith.constant 9 : i32
    %29 = vector.broadcast %c9_i32 : i32 to vector<1x1x16xi32>
    %30 = arith.cmpi slt, %28, %29 : vector<1x1x16xi32>
    %cst_21 = arith.constant -1.000000e+30 : f32
    %31 = vector.broadcast %cst_21 : f32 to vector<1x1x16xf32>
    %32 = arith.select %30, %27, %31 : vector<1x1x16xi1>, vector<1x1x16xf32>
    %cst_22 = arith.constant dense<0xFF800000> : vector<1x1xf32>
    %33 = vector.multi_reduction <maximumf>, %32, %cst_22 [2] : vector<1x1x16xf32> to vector<1x1xf32>
    %34 = vector.shape_cast %33 : vector<1x1xf32> to vector<1x1x1xf32>
    %35 = vector.broadcast %34 : vector<1x1x1xf32> to vector<1x1x16xf32>
    %36 = arith.subf %32, %35 : vector<1x1x16xf32>
    %37 = math.exp %36 : vector<1x1x16xf32>
    %cst_23 = arith.constant dense<0.000000e+00> : vector<1x1xf32>
    %38 = vector.multi_reduction <add>, %37, %cst_23 [2] : vector<1x1x16xf32> to vector<1x1xf32>
    %39 = vector.shape_cast %38 : vector<1x1xf32> to vector<1x1x1xf32>
    %40 = vector.broadcast %39 : vector<1x1x1xf32> to vector<1x1x16xf32>
    %41 = arith.divf %37, %40 : vector<1x1x16xf32>
    %42 = arith.truncf %41 : vector<1x1x16xf32> to vector<1x1x16xbf16>
    "tpu.trace_start"() <{level = 10 : i32, message = "bqk,bkd->bqd"}> : () -> ()
    %cst_24 = arith.constant dense<0.000000e+00> : vector<1x1x768xf32>
    %43 = tpu.matmul %42, %22, %cst_24 {dimension_numbers = #tpu.dot_dimension_numbers<[2], [1], [1], [2], [0, 0, 0, 1, 1, 2], [0], [0]>} : vector<1x1x16xbf16>, vector<1x16x768xbf16>, vector<1x1x768xf32> -> vector<1x1x768xf32>
    "tpu.trace_stop"() : () -> ()
    %44 = vector.shape_cast %43 : vector<1x1x768xf32> to vector<1x768xf32>
    %c0_25 = arith.constant 0 : index
    %c0_26 = arith.constant 0 : index
    %45 = vector.load %arg8[%c0_25, %c0_26] : memref<768x1xf32, #tpu.memory_space<vmem>>, vector<768x1xf32>
    %cst_27 = arith.constant dense<0.000000e+00> : vector<1x1xf32>
    %46 = tpu.matmul %44, %45, %cst_27 {dimension_numbers = #tpu.dot_dimension_numbers<[1], [0], [0], [1], [0, 0, 1, 1], [], []>} : vector<1x768xf32>, vector<768x1xf32>, vector<1x1xf32> -> vector<1x1xf32>
    %c0_28 = arith.constant 0 : index
    %c0_29 = arith.constant 0 : index
    %47 = vector.load %arg9[%c0_28, %c0_29] : memref<1x1xf32, #tpu.memory_space<vmem>>, vector<1x1xf32>
    %48 = arith.addf %46, %47 : vector<1x1xf32>
    %49 = vector.shape_cast %48 : vector<1x1xf32> to vector<1x1x1xf32>
    %c0_30 = arith.constant 0 : index
    %c0_31 = arith.constant 0 : index
    %c0_32 = arith.constant 0 : index
    %50 = vector.load %arg10[%c0_30, %c0_31, %c0_32] : memref<1x1x1xf32, #tpu.memory_space<vmem>>, vector<1x1x1xf32>
    tpu.vector_store %arg10[%c0_30, %c0_31, %c0_32], %49 {strides = array<i32>} : memref<1x1x1xf32, #tpu.memory_space<vmem>>, vector<1x1x1xf32>,
    return
  }
  func.func @transform_0(%arg0: i32) -> (i32, i32, i32) {
    %c0_i32 = arith.constant 0 : i32
    %c0_i32_0 = arith.constant 0 : i32
    %c0_i32_1 = arith.constant 0 : i32
    return %arg0, %c0_i32, %c0_i32_0 : i32, i32, i32
  }
  func.func @transform_1(%arg0: i32) -> (i32, i32) {
    %c0_i32 = arith.constant 0 : i32
    %c0_i32_0 = arith.constant 0 : i32
    %c0_i32_1 = arith.constant 0 : i32
    return %c0_i32, %c0_i32_0 : i32, i32
  }
  func.func @transform_2(%arg0: i32) -> (i32, i32) {
    %c0_i32 = arith.constant 0 : i32
    %c0_i32_0 = arith.constant 0 : i32
    %c0_i32_1 = arith.constant 0 : i32
    return %c0_i32, %c0_i32_0 : i32, i32
  }
  func.func @transform_3(%arg0: i32) -> (i32, i32) {
    %c0_i32 = arith.constant 0 : i32
    %c0_i32_0 = arith.constant 0 : i32
    %c0_i32_1 = arith.constant 0 : i32
    return %c0_i32, %c0_i32_0 : i32, i32
  }
  func.func @transform_4(%arg0: i32) -> (i32, i32) {
    %c0_i32 = arith.constant 0 : i32
    %c0_i32_0 = arith.constant 0 : i32
    %c0_i32_1 = arith.constant 0 : i32
    return %c0_i32, %c0_i32_0 : i32, i32
  }
  func.func @transform_5(%arg0: i32) -> (i32, i32) {
    %c0_i32 = arith.constant 0 : i32
    %c0_i32_0 = arith.constant 0 : i32
    %c0_i32_1 = arith.constant 0 : i32
    return %c0_i32, %c0_i32_0 : i32, i32
  }
  func.func @transform_6(%arg0: i32) -> (i32, i32) {
    %c0_i32 = arith.constant 0 : i32
    %c0_i32_0 = arith.constant 0 : i32
    %c0_i32_1 = arith.constant 0 : i32
    return %c0_i32, %c0_i32_0 : i32, i32
  }
  func.func @transform_7(%arg0: i32) -> (i32, i32) {
    %c0_i32 = arith.constant 0 : i32
    %c0_i32_0 = arith.constant 0 : i32
    %c0_i32_1 = arith.constant 0 : i32
    return %c0_i32, %c0_i32_0 : i32, i32
  }
  func.func @transform_8(%arg0: i32) -> (i32, i32) {
    %c0_i32 = arith.constant 0 : i32
    %c0_i32_0 = arith.constant 0 : i32
    %c0_i32_1 = arith.constant 0 : i32
    return %c0_i32, %c0_i32_0 : i32, i32
  }
  func.func @transform_9(%arg0: i32) -> (i32, i32, i32) {
    %c0_i32 = arith.constant 0 : i32
    %c0_i32_0 = arith.constant 0 : i32
    %c0_i32_1 = arith.constant 0 : i32
    return %arg0, %c0_i32, %c0_i32_0 : i32, i32, i32
  }
  func.func @transform_10(%arg0: i32) -> (i32, i32, i32) {
    %c0_i32 = arith.constant 0 : i32
    %c0_i32_0 = arith.constant 0 : i32
    %c0_i32_1 = arith.constant 0 : i32
    return %arg0, %c0_i32, %c0_i32_0 : i32, i32, i32
  }
}

</mosaic_0001>

<llo_original>
// kernel: _head_arrays.1
$region0: #{_head_arrays.1}
  #allocation0 [shape = 'u32[]', space=smem, size = 0x4, offset = 0x4, fixed_abs, tag = 'smem constant byte address 0x4 - core index']
  #allocation1 [shape = 'u32[144,128]{1,0:T(1,128)}', space=vmem, size = 0x12000, scoped, tag = 'internal scratch']
  #allocation2 [shape = 'f32[1,1]{1,0:T(1,128)S(1)}', space=vmem, size = 0x200, scoped, tag = 'scoped memory for _head_arrays.1']
  %s0 = inlined_call_operand.vmem [shape: bf16[2,16,768], index: 0, kind: input, shape index: {}]
  %s1 = inlined_call_operand.vmem [shape: bf16[768,768], index: 1, kind: input, shape index: {}]
  %s2 = inlined_call_operand.vmem [shape: bf16[768,768], index: 2, kind: input, shape index: {}]
  %s3 = inlined_call_operand.vmem [shape: bf16[768,768], index: 3, kind: input, shape index: {}]
  %s4 = inlined_call_operand.vmem [shape: f32[1,768], index: 4, kind: input, shape index: {}]
  %s5 = inlined_call_operand.vmem [shape: f32[1,768], index: 5, kind: input, shape index: {}]
  %s6 = inlined_call_operand.vmem [shape: f32[1,768], index: 6, kind: input, shape index: {}]
  %s7 = inlined_call_operand.vmem [shape: f32[768,1], index: 7, kind: input, shape index: {}]
  %s8 = inlined_call_operand.<no memory space> [shape: f32[1,1], index: 8, kind: input, shape index: {}]
  %s9 = inlined_call_operand.vmem [shape: f32[2,1,1], index: 9, kind: output, shape index: {0}]
  %s10 = inlined_call_operand.vmem [shape: f32[2,16,16], index: 10, kind: output, shape index: {1}]
  %11 = xla_tuple %s9, %s10
  %s12 = sld [smem:[#allocation0]]
  $region77: #{_head_arrays.1} parent=0
    _
  %s14 = ssub.s32 1, %s12
  %s15 = scalar_select 0, %s14, %s12
  %v16 = vstv %s8
  %17 = vst [vmem:[#allocation2] sm:$0x1] %v16
  loop: start=0, step=1, limit=4
  $region2: #{_head_arrays.1} parent=0 // loop_pre_header
    _
  $region3: #{_head_arrays.1} parent=0 // loop_header
    %s19 = sphi 0, %s23
    %p20 = scmp.ge.s32.totalorder %s19, 4
    %s29 = sphi 0, %s31
    %s32 = sphi 0, %s29
    %s33 = sphi 0, %s32
    %s49 = sphi 0, %s33
    %s53 = sphi 0, %s53
    %s55 = sphi 0, %s53
    %s56 = sphi 0, %s55
    %s70 = sphi 0, %s56
    %s74 = sphi 0, %s74
    %s76 = sphi 0, %s74
    %s77 = sphi 0, %s76
    %s91 = sphi 0, %s77
    %s95 = sphi 0, %s95
    %s97 = sphi 0, %s95
    %s98 = sphi 0, %s97
    %s112 = sphi 0, %s98
    %s116 = sphi 0, %s116
    %s118 = sphi 0, %s116
    %s119 = sphi 0, %s118
    %s133 = sphi 0, %s119
    %s137 = sphi 0, %s137
    %s139 = sphi 0, %s137
    %s140 = sphi 0, %s139
    %s154 = sphi 0, %s140
    %s158 = sphi 0, %s158
    %s160 = sphi 0, %s158
    %s161 = sphi 0, %s160
    %s175 = sphi 0, %s161
    %s179 = sphi 0, %s179
    %s181 = sphi 0, %s179
    %s182 = sphi 0, %s181
    %s196 = sphi 0, %s182
    %s200 = sphi 0, %s200
    %s202 = sphi 0, %s200
    %s203 = sphi 0, %s202
    %s217 = sphi 0, %s203
    %s223 = sphi 0, %s225
    %s226 = sphi 0, %s223
    %s227 = sphi 0, %s226
    %s243 = sphi 0, %s227
    %s249 = sphi 0, %s251
    %s252 = sphi 0, %s249
    %s253 = sphi 0, %s252
    %s269 = sphi 0, %s253
  $region4: #{_head_arrays.1} parent=0 // loop_header_branch
    %22 = sbr.rel (%p20) target = $region8
  $region5: #{_head_arrays.1} parent=0 // loop_body
    %s24 = ssub.s32 %s19, 1
    %s25 = ssub.s32 %s19, 2
    %s26 = sadd.s32 %s19, 1
    %s27 = ssub.s32 %s19, %s26
    %p28 = scmp.eq.s32.totalorder %s27, 0
    %s30 = sadd.s32 %s29, 1
    %s31 = scalar_select %p28, %s29, %s30
    %p34 = pneg %p28
    %p35 = scmp.eq.s32.totalorder %s19, 1
    %p36 = por %p34, %p35
    %p37 = scmp.ne.s32.totalorder %s29, %s32
    %p38 = scmp.eq.s32.totalorder %s19, 0
    %p39 = por %p37, %p38
    %p40 = scmp.ne.s32.totalorder %s29, %s32
    %p41 = scmp.eq.s32.totalorder %s24, 1
    %p42 = por %p40, %p41
    %p43 = scmp.ne.s32.totalorder %s32, %s33
    %p44 = scmp.eq.s32.totalorder %s24, 0
    %p45 = por %p43, %p44
    %p46 = scmp.ne.s32.totalorder %s32, %s33
    %p47 = scmp.eq.s32.totalorder %s25, 1
    %p48 = por %p46, %p47
    %p50 = scmp.ne.s32.totalorder %s33, %s49
    %p51 = scmp.eq.s32.totalorder %s25, 0
    %p52 = por %p50, %p51
    %s54 = sadd.s32 %s53, 1
    %p57 = scmp.eq.s32.totalorder %s19, 1
    %p58 = scmp.ne.s32.totalorder %s53, %s55
    %p59 = scmp.eq.s32.totalorder %s19, 0
    %p60 = por %p58, %p59
    %p61 = scmp.ne.s32.totalorder %s53, %s55
    %p62 = scmp.eq.s32.totalorder %s24, 1
    %p63 = por %p61, %p62
    %p64 = scmp.ne.s32.totalorder %s55, %s56
    %p65 = scmp.eq.s32.totalorder %s24, 0
    %p66 = por %p64, %p65
    %p67 = scmp.ne.s32.totalorder %s55, %s56
    %p68 = scmp.eq.s32.totalorder %s25, 1
    %p69 = por %p67, %p68
    %p71 = scmp.ne.s32.totalorder %s56, %s70
    %p72 = scmp.eq.s32.totalorder %s25, 0
    %p73 = por %p71, %p72
    %s75 = sadd.s32 %s74, 1
    %p78 = scmp.eq.s32.totalorder %s19, 1
    %p79 = scmp.ne.s32.totalorder %s74, %s76
    %p80 = scmp.eq.s32.totalorder %s19, 0
    %p81 = por %p79, %p80
    %p82 = scmp.ne.s32.totalorder %s74, %s76
    %p83 = scmp.eq.s32.totalorder %s24, 1
    %p84 = por %p82, %p83
    %p85 = scmp.ne.s32.totalorder %s76, %s77
    %p86 = scmp.eq.s32.totalorder %s24, 0
    %p87 = por %p85, %p86
    %p88 = scmp.ne.s32.totalorder %s76, %s77
    %p89 = scmp.eq.s32.totalorder %s25, 1
    %p90 = por %p88, %p89
    %p92 = scmp.ne.s32.totalorder %s77, %s91
    %p93 = scmp.eq.s32.totalorder %s25, 0
    %p94 = por %p92, %p93
    %s96 = sadd.s32 %s95, 1
    %p99 = scmp.eq.s32.totalorder %s19, 1
    %p100 = scmp.ne.s32.totalorder %s95, %s97
    %p101 = scmp.eq.s32.totalorder %s19, 0
    %p102 = por %p100, %p101
    %p103 = scmp.ne.s32.totalorder %s95, %s97
    %p104 = scmp.eq.s32.totalorder %s24, 1
    %p105 = por %p103, %p104
    %p106 = scmp.ne.s32.totalorder %s97, %s98
    %p107 = scmp.eq.s32.totalorder %s24, 0
    %p108 = por %p106, %p107
    %p109 = scmp.ne.s32.totalorder %s97, %s98
    %p110 = scmp.eq.s32.totalorder %s25, 1
    %p111 = por %p109, %p110
    %p113 = scmp.ne.s32.totalorder %s98, %s112
    %p114 = scmp.eq.s32.totalorder %s25, 0
    %p115 = por %p113, %p114
    %s117 = sadd.s32 %s116, 1
    %p120 = scmp.eq.s32.totalorder %s19, 1
    %p121 = scmp.ne.s32.totalorder %s116, %s118
    %p122 = scmp.eq.s32.totalorder %s19, 0
    %p123 = por %p121, %p122
    %p124 = scmp.ne.s32.totalorder %s116, %s118
    %p125 = scmp.eq.s32.totalorder %s24, 1
    %p126 = por %p124, %p125
    %p127 = scmp.ne.s32.totalorder %s118, %s119
    %p128 = scmp.eq.s32.totalorder %s24, 0
    %p129 = por %p127, %p128
    %p130 = scmp.ne.s32.totalorder %s118, %s119
    %p131 = scmp.eq.s32.totalorder %s25, 1
    %p132 = por %p130, %p131
    %p134 = scmp.ne.s32.totalorder %s119, %s133
    %p135 = scmp.eq.s32.totalorder %s25, 0
    %p136 = por %p134, %p135
    %s138 = sadd.s32 %s137, 1
    %p141 = scmp.eq.s32.totalorder %s19, 1
    %p142 = scmp.ne.s32.totalorder %s137, %s139
    %p143 = scmp.eq.s32.totalorder %s19, 0
    %p144 = por %p142, %p143
    %p145 = scmp.ne.s32.totalorder %s137, %s139
    %p146 = scmp.eq.s32.totalorder %s24, 1
    %p147 = por %p145, %p146
    %p148 = scmp.ne.s32.totalorder %s139, %s140
    %p149 = scmp.eq.s32.totalorder %s24, 0
    %p150 = por %p148, %p149
    %p151 = scmp.ne.s32.totalorder %s139, %s140
    %p152 = scmp.eq.s32.totalorder %s25, 1
    %p153 = por %p151, %p152
    %p155 = scmp.ne.s32.totalorder %s140, %s154
    %p156 = scmp.eq.s32.totalorder %s25, 0
    %p157 = por %p155, %p156
    %s159 = sadd.s32 %s158, 1
    %p162 = scmp.eq.s32.totalorder %s19, 1
    %p163 = scmp.ne.s32.totalorder %s158, %s160
    %p164 = scmp.eq.s32.totalorder %s19, 0
    %p165 = por %p163, %p164
    %p166 = scmp.ne.s32.totalorder %s158, %s160
    %p167 = scmp.eq.s32.totalorder %s24, 1
    %p168 = por %p166, %p167
    %p169 = scmp.ne.s32.totalorder %s160, %s161
    %p170 = scmp.eq.s32.totalorder %s24, 0
    %p171 = por %p169, %p170
    %p172 = scmp.ne.s32.totalorder %s160, %s161
    %p173 = scmp.eq.s32.totalorder %s25, 1
    %p174 = por %p172, %p173
    %p176 = scmp.ne.s32.totalorder %s161, %s175
    %p177 = scmp.eq.s32.totalorder %s25, 0
    %p178 = por %p176, %p177
    %s180 = sadd.s32 %s179, 1
    %p183 = scmp.eq.s32.totalorder %s19, 1
    %p184 = scmp.ne.s32.totalorder %s179, %s181
    %p185 = scmp.eq.s32.totalorder %s19, 0
    %p186 = por %p184, %p185
    %p187 = scmp.ne.s32.totalorder %s179, %s181
    %p188 = scmp.eq.s32.totalorder %s24, 1
    %p189 = por %p187, %p188
    %p190 = scmp.ne.s32.totalorder %s181, %s182
    %p191 = scmp.eq.s32.totalorder %s24, 0
    %p192 = por %p190, %p191
    %p193 = scmp.ne.s32.totalorder %s181, %s182
    %p194 = scmp.eq.s32.totalorder %s25, 1
    %p195 = por %p193, %p194
    %p197 = scmp.ne.s32.totalorder %s182, %s196
    %p198 = scmp.eq.s32.totalorder %s25, 0
    %p199 = por %p197, %p198
    %s201 = sadd.s32 %s200, 1
    %p204 = scmp.eq.s32.totalorder %s19, 1
    %p205 = scmp.ne.s32.totalorder %s200, %s202
    %p206 = scmp.eq.s32.totalorder %s19, 0
    %p207 = por %p205, %p206
    %p208 = scmp.ne.s32.totalorder %s200, %s202
    %p209 = scmp.eq.s32.totalorder %s24, 1
    %p210 = por %p208, %p209
    %p211 = scmp.ne.s32.totalorder %s202, %s203
    %p212 = scmp.eq.s32.totalorder %s24, 0
    %p213 = por %p211, %p212
    %p214 = scmp.ne.s32.totalorder %s202, %s203
    %p215 = scmp.eq.s32.totalorder %s25, 1
    %p216 = por %p214, %p215
    %p218 = scmp.ne.s32.totalorder %s203, %s217
    %p219 = scmp.eq.s32.totalorder %s25, 0
    %p220 = por %p218, %p219
    %s221 = ssub.s32 %s19, %s26
    %p222 = scmp.eq.s32.totalorder %s221, 0
    %s224 = sadd.s32 %s223, 1
    %s225 = scalar_select %p222, %s223, %s224
    %p228 = pneg %p222
    %p229 = scmp.eq.s32.totalorder %s19, 1
    %p230 = por %p228, %p229
    %p231 = scmp.ne.s32.totalorder %s223, %s226
    %p232 = scmp.eq.s32.totalorder %s19, 0
    %p233 = por %p231, %p232
    %p234 = scmp.ne.s32.totalorder %s223, %s226
    %p235 = scmp.eq.s32.totalorder %s24, 1
    %p236 = por %p234, %p235
    %p237 = scmp.ne.s32.totalorder %s226, %s227
    %p238 = scmp.eq.s32.totalorder %s24, 0
    %p239 = por %p237, %p238
    %p240 = scmp.ne.s32.totalorder %s226, %s227
    %p241 = scmp.eq.s32.totalorder %s25, 1
    %p242 = por %p240, %p241
    %p244 = scmp.ne.s32.totalorder %s227, %s243
    %p245 = scmp.eq.s32.totalorder %s25, 0
    %p246 = por %p244, %p245
    %s247 = ssub.s32 %s19, %s26
    %p248 = scmp.eq.s32.totalorder %s247, 0
    %s250 = sadd.s32 %s249, 1
    %s251 = scalar_select %p248, %s249, %s250
    %p254 = pneg %p248
    %p255 = scmp.eq.s32.totalorder %s19, 1
    %p256 = por %p254, %p255
    %p257 = scmp.ne.s32.totalorder %s249, %s252
    %p258 = scmp.eq.s32.totalorder %s19, 0
    %p259 = por %p257, %p258
    %p260 = scmp.ne.s32.totalorder %s249, %s252
    %p261 = scmp.eq.s32.totalorder %s24, 1
    %p262 = por %p260, %p261
    %p263 = scmp.ne.s32.totalorder %s252, %s253
    %p264 = scmp.eq.s32.totalorder %s24, 0
    %p265 = por %p263, %p264
    %p266 = scmp.ne.s32.totalorder %s252, %s253
    %p267 = scmp.eq.s32.totalorder %s25, 1
    %p268 = por %p266, %p267
    %p270 = scmp.ne.s32.totalorder %s253, %s269
    %p271 = scmp.eq.s32.totalorder %s25, 0
    %p272 = por %p270, %p271
    %p273 = scmp.le.s32.totalorder 1, %s19
    %p274 = scmp.lt.s32.totalorder %s19, 3
    %p275 = pnand %p273, %p274
    %p276 = pneg %p275
    // Predicated region
    $region9: #{_head_arrays.1} parent=5 // pred_check
      _
    $region10: #{_head_arrays.1} parent=5 // pred_check_branch
      %278 = sbr.rel (%p275) target = $region12
    $region11: #{_head_arrays.1} parent=5 // pred_region
      %s279 = ssub.s32 %s19, 1
      // Predicated region
      $region13: #{_head_arrays.1} parent=11 // pred_check
        %p280 = pneg %p66
      $region14: #{_head_arrays.1} parent=11 // pred_check_branch
        %282 = sbr.rel (%p280) target = $region16
      $region15: #{_head_arrays.1} parent=11 // pred_region
        _
      $region16: #{_head_arrays.1} parent=11 // pred_fallthru
        _
      // Predicated region
      $region17: #{_head_arrays.1} parent=11 // pred_check
        %p283 = pneg %p87
      $region18: #{_head_arrays.1} parent=11 // pred_check_branch
        %285 = sbr.rel (%p283) target = $region20
      $region19: #{_head_arrays.1} parent=11 // pred_region
        _
      $region20: #{_head_arrays.1} parent=11 // pred_fallthru
        _
      // Predicated region
      $region21: #{_head_arrays.1} parent=11 // pred_check
        %p286 = pneg %p108
      $region22: #{_head_arrays.1} parent=11 // pred_check_branch
        %288 = sbr.rel (%p286) target = $region24
      $region23: #{_head_arrays.1} parent=11 // pred_region
        _
      $region24: #{_head_arrays.1} parent=11 // pred_fallthru
        _
      // Predicated region
      $region25: #{_head_arrays.1} parent=11 // pred_check
        %p289 = pneg %p129
      $region26: #{_head_arrays.1} parent=11 // pred_check_branch
        %291 = sbr.rel (%p289) target = $region28
      $region27: #{_head_arrays.1} parent=11 // pred_region
        _
      $region28: #{_head_arrays.1} parent=11 // pred_fallthru
        _
      // Predicated region
      $region29: #{_head_arrays.1} parent=11 // pred_check
        %p292 = pneg %p150
      $region30: #{_head_arrays.1} parent=11 // pred_check_branch
        %294 = sbr.rel (%p292) target = $region32
      $region31: #{_head_arrays.1} parent=11 // pred_region
        _
      $region32: #{_head_arrays.1} parent=11 // pred_fallthru
        _
      // Predicated region
      $region33: #{_head_arrays.1} parent=11 // pred_check
        %p295 = pneg %p171
      $region34: #{_head_arrays.1} parent=11 // pred_check_branch
        %297 = sbr.rel (%p295) target = $region36
      $region35: #{_head_arrays.1} parent=11 // pred_region
        _
      $region36: #{_head_arrays.1} parent=11 // pred_fallthru
        _
      // Predicated region
      $region37: #{_head_arrays.1} parent=11 // pred_check
        %p298 = pneg %p192
      $region38: #{_head_arrays.1} parent=11 // pred_check_branch
        %300 = sbr.rel (%p298) target = $region40
      $region39: #{_head_arrays.1} parent=11 // pred_region
        _
      $region40: #{_head_arrays.1} parent=11 // pred_fallthru
        _
      // Predicated region
      $region41: #{_head_arrays.1} parent=11 // pred_check
        %p301 = pneg %p213
      $region42: #{_head_arrays.1} parent=11 // pred_check_branch
        %303 = sbr.rel (%p301) target = $region44
      $region43: #{_head_arrays.1} parent=11 // pred_region
        _
      $region44: #{_head_arrays.1} parent=11 // pred_fallthru
        _
    $region12: #{_head_arrays.1} parent=5 // pred_fallthru
      _
    %p304 = scmp.lt.s32.totalorder %s19, 2
    // Predicated region
    $region45: #{_head_arrays.1} parent=5 // pred_check
      %p305 = pneg %p304
    $region46: #{_head_arrays.1} parent=5 // pred_check_branch
      %307 = sbr.rel (%p305) target = $region48
    $region47: #{_head_arrays.1} parent=5 // pred_region
      // Predicated region
      $region49: #{_head_arrays.1} parent=47 // pred_check
        %p308 = pneg %p39
      $region50: #{_head_arrays.1} parent=47 // pred_check_branch
        %310 = sbr.rel (%p308) target = $region52
      $region51: #{_head_arrays.1} parent=47 // pred_region
        %p311 = scmp.lt.s32.totalorder %s19, 1
        %s312 = scalar_select %p311, %s19, 1
        %s313 = smul.addr %s312, 12
        %s314 = smul.addr %s313, 4
        %s315 = scalar_lea.vmem %s0, %s314
      $region52: #{_head_arrays.1} parent=47 // pred_fallthru
        _
    $region48: #{_head_arrays.1} parent=5 // pred_fallthru
      _
    %p316 = scmp.le.s32.totalorder 1, %s19
    %p317 = scmp.lt.s32.totalorder %s19, 3
    %p318 = pnand %p316, %p317
    %p319 = pneg %p318
    // Predicated region
    $region53: #{_head_arrays.1} parent=5 // pred_check
      _
    $region54: #{_head_arrays.1} parent=5 // pred_check_branch
      %321 = sbr.rel (%p318) target = $region56
    $region55: #{_head_arrays.1} parent=5 // pred_region
      %s322 = ssub.s32 %s19, 1
      %p323 = scmp.lt.s32.totalorder %s24, 1
      %s324 = scalar_select %p323, %s24, 1
      %s325 = smul.addr %s324, 12
      %s326 = smul.addr %s325, 4
      %s327 = scalar_lea.vmem %s0, %s326
      %p328 = pneg %p45
      %p329 = pneg %p42
      %p330 = pneg %p66
      %p331 = pneg %p63
      %p332 = pneg %p87
      %p333 = pneg %p84
      %p334 = pneg %p108
      %p335 = pneg %p105
      %p336 = pneg %p129
      %p337 = pneg %p126
      %p338 = pneg %p150
      %p339 = pneg %p147
      %p340 = pneg %p171
      %p341 = pneg %p168
      %p342 = pneg %p192
      %p343 = pneg %p189
      %p344 = pneg %p213
      %p345 = pneg %p210
      %p346 = pneg %p239
      %p347 = pneg %p236
      %p348 = scmp.lt.s32.totalorder %s24, 1
      %s349 = scalar_select %p348, %s24, 1
      %s350 = scalar_lea.vmem %s9, %s349
      %p351 = pneg %p265
      %p352 = pneg %p262
      %p353 = scmp.lt.s32.totalorder %s24, 1
      %s354 = scalar_select %p353, %s24, 1
      %s355 = smul.addr %s354, 2
      %s356 = smul.addr %s355, 8
      %s357 = scalar_lea.vmem %s10, %s356
      %p358 = scmp.lt.s32.totalorder %s24, 1
      %s359 = scalar_select %p358, %s24, 1
      %s360 = smul.addr %s359, 12
      %s361 = smul.addr %s360, 4
      %s362 = scalar_lea.vmem %s0, %s361
      %p363 = scmp.lt.s32.totalorder %s24, 1
      %s364 = scalar_select %p363, %s24, 1
      %s365 = scalar_lea.vmem %s9, %s364
      %p366 = scmp.lt.s32.totalorder %s24, 1
      %s367 = scalar_select %p366, %s24, 1
      %s368 = smul.addr %s367, 2
      %s369 = smul.addr %s368, 8
      %s370 = scalar_lea.vmem %s10, %s369
      %v372 = vld [vmem:[%s362] sm:$0xff]
      %v373 = vld [vmem:[%s362 + $0x8] sm:$0xff]
      %v374 = vld [vmem:[%s362 + $0x10] sm:$0xff]
      %v375 = vld [vmem:[%s362 + $0x18] sm:$0xff]
      %v376 = vld [vmem:[%s362 + $0x20] sm:$0xff]
      %v377 = vld [vmem:[%s362 + $0x28] sm:$0xff]
      %v378 = vld [vmem:[%s1] sm:$0xff]
      %v379 = vld [vmem:[%s1 + $0x8] sm:$0xff]
      %v380 = vld [vmem:[%s1 + $0x10] sm:$0xff]
      %v381 = vld [vmem:[%s1 + $0x18] sm:$0xff]
      %v382 = vld [vmem:[%s1 + $0x20] sm:$0xff]
      %v383 = vld [vmem:[%s1 + $0x28] sm:$0xff]
      %v384 = vld [vmem:[%s1 + $0x30] sm:$0xff]
      %v385 = vld [vmem:[%s1 + $0x38] sm:$0xff]
      %v386 = vld [vmem:[%s1 + $0x40] sm:$0xff]
      %v387 = vld [vmem:[%s1 + $0x48] sm:$0xff]
      %v388 = vld [vmem:[%s1 + $0x50] sm:$0xff]
      %v389 = vld [vmem:[%s1 + $0x58] sm:$0xff]
      %v390 = vld [vmem:[%s1 + $0x60] sm:$0xff]
      %v391 = vld [vmem:[%s1 + $0x68] sm:$0xff]
      %v392 = vld [vmem:[%s1 + $0x70] sm:$0xff]
      %v393 = vld [vmem:[%s1 + $0x78] sm:$0xff]
      %v394 = vld [vmem:[%s1 + $0x80] sm:$0xff]
      %v395 = vld [vmem:[%s1 + $0x88] sm:$0xff]
      %v396 = vld [vmem:[%s1 + $0x90] sm:$0xff]
      %v397 = vld [vmem:[%s1 + $0x98] sm:$0xff]
      %v398 = vld [vmem:[%s1 + $0xa0] sm:$0xff]
      %v399 = vld [vmem:[%s1 + $0xa8] sm:$0xff]
      %v400 = vld [vmem:[%s1 + $0xb0] sm:$0xff]
      %v401 = vld [vmem:[%s1 + $0xb8] sm:$0xff]
      %v402 = vld [vmem:[%s1 + $0xc0] sm:$0xff]
      %v403 = vld [vmem:[%s1 + $0xc8] sm:$0xff]
      %v404 = vld [vmem:[%s1 + $0xd0] sm:$0xff]
      %v405 = vld [vmem:[%s1 + $0xd8] sm:$0xff]
      %v406 = vld [vmem:[%s1 + $0xe0] sm:$0xff]
      %v407 = vld [vmem:[%s1 + $0xe8] sm:$0xff]
      %v408 = vld [vmem:[%s1 + $0xf0] sm:$0xff]
      %v409 = vld [vmem:[%s1 + $0xf8] sm:$0xff]
      %v410 = vld [vmem:[%s1 + $0x100] sm:$0xff]
      %v411 = vld [vmem:[%s1 + $0x108] sm:$0xff]
      %v412 = vld [vmem:[%s1 + $0x110] sm:$0xff]
      %v413 = vld [vmem:[%s1 + $0x118] sm:$0xff]
      %v414 = vld [vmem:[%s1 + $0x120] sm:$0xff]
      %v415 = vld [vmem:[%s1 + $0x128] sm:$0xff]
      %v416 = vld [vmem:[%s1 + $0x130] sm:$0xff]
      %v417 = vld [vmem:[%s1 + $0x138] sm:$0xff]
      %v418 = vld [vmem:[%s1 + $0x140] sm:$0xff]
      %v419 = vld [vmem:[%s1 + $0x148] sm:$0xff]
      %v420 = vld [vmem:[%s1 + $0x150] sm:$0xff]
      %v421 = vld [vmem:[%s1 + $0x158] sm:$0xff]
      %v422 = vld [vmem:[%s1 + $0x160] sm:$0xff]
      %v423 = vld [vmem:[%s1 + $0x168] sm:$0xff]
      %v424 = vld [vmem:[%s1 + $0x170] sm:$0xff]
      %v425 = vld [vmem:[%s1 + $0x178] sm:$0xff]
      %v426 = vld [vmem:[%s1 + $0x180] sm:$0xff]
      %v427 = vld [vmem:[%s1 + $0x188] sm:$0xff]
      %v428 = vld [vmem:[%s1 + $0x190] sm:$0xff]
      %v429 = vld [vmem:[%s1 + $0x198] sm:$0xff]
      %v430 = vld [vmem:[%s1 + $0x1a0] sm:$0xff]
      %v431 = vld [vmem:[%s1 + $0x1a8] sm:$0xff]
      %v432 = vld [vmem:[%s1 + $0x1b0] sm:$0xff]
      %v433 = vld [vmem:[%s1 + $0x1b8] sm:$0xff]
      %v434 = vld [vmem:[%s1 + $0x1c0] sm:$0xff]
      %v435 = vld [vmem:[%s1 + $0x1c8] sm:$0xff]
      %v436 = vld [vmem:[%s1 + $0x1d0] sm:$0xff]
      %v437 = vld [vmem:[%s1 + $0x1d8] sm:$0xff]
      %v438 = vld [vmem:[%s1 + $0x1e0] sm:$0xff]
      %v439 = vld [vmem:[%s1 + $0x1e8] sm:$0xff]
      %v440 = vld [vmem:[%s1 + $0x1f0] sm:$0xff]
      %v441 = vld [vmem:[%s1 + $0x1f8] sm:$0xff]
      %v442 = vld [vmem:[%s1 + $0x200] sm:$0xff]
      %v443 = vld [vmem:[%s1 + $0x208] sm:$0xff]
      %v444 = vld [vmem:[%s1 + $0x210] sm:$0xff]
      %v445 = vld [vmem:[%s1 + $0x218] sm:$0xff]
      %v446 = vld [vmem:[%s1 + $0x220] sm:$0xff]
      %v447 = vld [vmem:[%s1 + $0x228] sm:$0xff]
      %v448 = vld [vmem:[%s1 + $0x230] sm:$0xff]
      %v449 = vld [vmem:[%s1 + $0x238] sm:$0xff]
      %v450 = vld [vmem:[%s1 + $0x240] sm:$0xff]
      %v451 = vld [vmem:[%s1 + $0x248] sm:$0xff]
      %v452 = vld [vmem:[%s1 + $0x250] sm:$0xff]
      %v453 = vld [vmem:[%s1 + $0x258] sm:$0xff]
      %v454 = vld [vmem:[%s1 + $0x260] sm:$0xff]
      %v455 = vld [vmem:[%s1 + $0x268] sm:$0xff]
      %v456 = vld [vmem:[%s1 + $0x270] sm:$0xff]
      %v457 = vld [vmem:[%s1 + $0x278] sm:$0xff]
      %v458 = vld [vmem:[%s1 + $0x280] sm:$0xff]
      %v459 = vld [vmem:[%s1 + $0x288] sm:$0xff]
      %v460 = vld [vmem:[%s1 + $0x290] sm:$0xff]
      %v461 = vld [vmem:[%s1 + $0x298] sm:$0xff]
      %v462 = vld [vmem:[%s1 + $0x2a0] sm:$0xff]
      %v463 = vld [vmem:[%s1 + $0x2a8] sm:$0xff]
      %v464 = vld [vmem:[%s1 + $0x2b0] sm:$0xff]
      %v465 = vld [vmem:[%s1 + $0x2b8] sm:$0xff]
      %v466 = vld [vmem:[%s1 + $0x2c0] sm:$0xff]
      %v467 = vld [vmem:[%s1 + $0x2c8] sm:$0xff]
      %v468 = vld [vmem:[%s1 + $0x2d0] sm:$0xff]
      %v469 = vld [vmem:[%s1 + $0x2d8] sm:$0xff]
      %v470 = vld [vmem:[%s1 + $0x2e0] sm:$0xff]
      %v471 = vld [vmem:[%s1 + $0x2e8] sm:$0xff]
      %v472 = vld [vmem:[%s1 + $0x2f0] sm:$0xff]
      %v473 = vld [vmem:[%s1 + $0x2f8] sm:$0xff]
      %v474 = vld [vmem:[%s1 + $0x300] sm:$0xff]
      %v475 = vld [vmem:[%s1 + $0x308] sm:$0xff]
      %v476 = vld [vmem:[%s1 + $0x310] sm:$0xff]
      %v477 = vld [vmem:[%s1 + $0x318] sm:$0xff]
      %v478 = vld [vmem:[%s1 + $0x320] sm:$0xff]
      %v479 = vld [vmem:[%s1 + $0x328] sm:$0xff]
      %v480 = vld [vmem:[%s1 + $0x330] sm:$0xff]
      %v481 = vld [vmem:[%s1 + $0x338] sm:$0xff]
      %v482 = vld [vmem:[%s1 + $0x340] sm:$0xff]
      %v483 = vld [vmem:[%s1 + $0x348] sm:$0xff]
      %v484 = vld [vmem:[%s1 + $0x350] sm:$0xff]
      %v485 = vld [vmem:[%s1 + $0x358] sm:$0xff]
      %v486 = vld [vmem:[%s1 + $0x360] sm:$0xff]
      %v487 = vld [vmem:[%s1 + $0x368] sm:$0xff]
      %v488 = vld [vmem:[%s1 + $0x370] sm:$0xff]
      %v489 = vld [vmem:[%s1 + $0x378] sm:$0xff]
      %v490 = vld [vmem:[%s1 + $0x380] sm:$0xff]
      %v491 = vld [vmem:[%s1 + $0x388] sm:$0xff]
      %v492 = vld [vmem:[%s1 + $0x390] sm:$0xff]
      %v493 = vld [vmem:[%s1 + $0x398] sm:$0xff]
      %v494 = vld [vmem:[%s1 + $0x3a0] sm:$0xff]
      %v495 = vld [vmem:[%s1 + $0x3a8] sm:$0xff]
      %v496 = vld [vmem:[%s1 + $0x3b0] sm:$0xff]
      %v497 = vld [vmem:[%s1 + $0x3b8] sm:$0xff]
      %v498 = vld [vmem:[%s1 + $0x3c0] sm:$0xff]
      %v499 = vld [vmem:[%s1 + $0x3c8] sm:$0xff]
      %v500 = vld [vmem:[%s1 + $0x3d0] sm:$0xff]
      %v501 = vld [vmem:[%s1 + $0x3d8] sm:$0xff]
      %v502 = vld [vmem:[%s1 + $0x3e0] sm:$0xff]
      %v503 = vld [vmem:[%s1 + $0x3e8] sm:$0xff]
      %v504 = vld [vmem:[%s1 + $0x3f0] sm:$0xff]
      %v505 = vld [vmem:[%s1 + $0x3f8] sm:$0xff]
      %v506 = vld [vmem:[%s1 + $0x400] sm:$0xff]
      %v507 = vld [vmem:[%s1 + $0x408] sm:$0xff]
      %v508 = vld [vmem:[%s1 + $0x410] sm:$0xff]
      %v509 = vld [vmem:[%s1 + $0x418] sm:$0xff]
      %v510 = vld [vmem:[%s1 + $0x420] sm:$0xff]
      %v511 = vld [vmem:[%s1 + $0x428] sm:$0xff]
      %v512 = vld [vmem:[%s1 + $0x430] sm:$0xff]
      %v513 = vld [vmem:[%s1 + $0x438] sm:$0xff]
      %v514 = vld [vmem:[%s1 + $0x440] sm:$0xff]
      %v515 = vld [vmem:[%s1 + $0x448] sm:$0xff]
      %v516 = vld [vmem:[%s1 + $0x450] sm:$0xff]
      %v517 = vld [vmem:[%s1 + $0x458] sm:$0xff]
      %v518 = vld [vmem:[%s1 + $0x460] sm:$0xff]
      %v519 = vld [vmem:[%s1 + $0x468] sm:$0xff]
      %v520 = vld [vmem:[%s1 + $0x470] sm:$0xff]
      %v521 = vld [vmem:[%s1 + $0x478] sm:$0xff]
      %v522 = vld [vmem:[%s1 + $0x480] sm:$0xff]
      %v523 = vld [vmem:[%s1 + $0x488] sm:$0xff]
      %v524 = vld [vmem:[%s1 + $0x490] sm:$0xff]
      %v525 = vld [vmem:[%s1 + $0x498] sm:$0xff]
      %v526 = vld [vmem:[%s1 + $0x4a0] sm:$0xff]
      %v527 = vld [vmem:[%s1 + $0x4a8] sm:$0xff]
      %v528 = vld [vmem:[%s1 + $0x4b0] sm:$0xff]
      %v529 = vld [vmem:[%s1 + $0x4b8] sm:$0xff]
      %v530 = vld [vmem:[%s1 + $0x4c0] sm:$0xff]
      %v531 = vld [vmem:[%s1 + $0x4c8] sm:$0xff]
      %v532 = vld [vmem:[%s1 + $0x4d0] sm:$0xff]
      %v533 = vld [vmem:[%s1 + $0x4d8] sm:$0xff]
      %v534 = vld [vmem:[%s1 + $0x4e0] sm:$0xff]
      %v535 = vld [vmem:[%s1 + $0x4e8] sm:$0xff]
      %v536 = vld [vmem:[%s1 + $0x4f0] sm:$0xff]
      %v537 = vld [vmem:[%s1 + $0x4f8] sm:$0xff]
      %v538 = vld [vmem:[%s1 + $0x500] sm:$0xff]
      %v539 = vld [vmem:[%s1 + $0x508] sm:$0xff]
      %v540 = vld [vmem:[%s1 + $0x510] sm:$0xff]
      %v541 = vld [vmem:[%s1 + $0x518] sm:$0xff]
      %v542 = vld [vmem:[%s1 + $0x520] sm:$0xff]
      %v543 = vld [vmem:[%s1 + $0x528] sm:$0xff]
      %v544 = vld [vmem:[%s1 + $0x530] sm:$0xff]
      %v545 = vld [vmem:[%s1 + $0x538] sm:$0xff]
      %v546 = vld [vmem:[%s1 + $0x540] sm:$0xff]
      %v547 = vld [vmem:[%s1 + $0x548] sm:$0xff]
      %v548 = vld [vmem:[%s1 + $0x550] sm:$0xff]
      %v549 = vld [vmem:[%s1 + $0x558] sm:$0xff]
      %v550 = vld [vmem:[%s1 + $0x560] sm:$0xff]
      %v551 = vld [vmem:[%s1 + $0x568] sm:$0xff]
      %v552 = vld [vmem:[%s1 + $0x570] sm:$0xff]
      %v553 = vld [vmem:[%s1 + $0x578] sm:$0xff]
      %v554 = vld [vmem:[%s1 + $0x580] sm:$0xff]
      %v555 = vld [vmem:[%s1 + $0x588] sm:$0xff]
      %v556 = vld [vmem:[%s1 + $0x590] sm:$0xff]
      %v557 = vld [vmem:[%s1 + $0x598] sm:$0xff]
      %v558 = vld [vmem:[%s1 + $0x5a0] sm:$0xff]
      %v559 = vld [vmem:[%s1 + $0x5a8] sm:$0xff]
      %v560 = vld [vmem:[%s1 + $0x5b0] sm:$0xff]
      %v561 = vld [vmem:[%s1 + $0x5b8] sm:$0xff]
      %v562 = vld [vmem:[%s1 + $0x5c0] sm:$0xff]
      %v563 = vld [vmem:[%s1 + $0x5c8] sm:$0xff]
      %v564 = vld [vmem:[%s1 + $0x5d0] sm:$0xff]
      %v565 = vld [vmem:[%s1 + $0x5d8] sm:$0xff]
      %v566 = vld [vmem:[%s1 + $0x5e0] sm:$0xff]
      %v567 = vld [vmem:[%s1 + $0x5e8] sm:$0xff]
      %v568 = vld [vmem:[%s1 + $0x5f0] sm:$0xff]
      %v569 = vld [vmem:[%s1 + $0x5f8] sm:$0xff]
      %v570 = vld [vmem:[%s1 + $0x600] sm:$0xff]
      %v571 = vld [vmem:[%s1 + $0x608] sm:$0xff]
      %v572 = vld [vmem:[%s1 + $0x610] sm:$0xff]
      %v573 = vld [vmem:[%s1 + $0x618] sm:$0xff]
      %v574 = vld [vmem:[%s1 + $0x620] sm:$0xff]
      %v575 = vld [vmem:[%s1 + $0x628] sm:$0xff]
      %v576 = vld [vmem:[%s1 + $0x630] sm:$0xff]
      %v577 = vld [vmem:[%s1 + $0x638] sm:$0xff]
      %v578 = vld [vmem:[%s1 + $0x640] sm:$0xff]
      %v579 = vld [vmem:[%s1 + $0x648] sm:$0xff]
      %v580 = vld [vmem:[%s1 + $0x650] sm:$0xff]
      %v581 = vld [vmem:[%s1 + $0x658] sm:$0xff]
      %v582 = vld [vmem:[%s1 + $0x660] sm:$0xff]
      %v583 = vld [vmem:[%s1 + $0x668] sm:$0xff]
      %v584 = vld [vmem:[%s1 + $0x670] sm:$0xff]
      %v585 = vld [vmem:[%s1 + $0x678] sm:$0xff]
      %v586 = vld [vmem:[%s1 + $0x680] sm:$0xff]
      %v587 = vld [vmem:[%s1 + $0x688] sm:$0xff]
      %v588 = vld [vmem:[%s1 + $0x690] sm:$0xff]
      %v589 = vld [vmem:[%s1 + $0x698] sm:$0xff]
      %v590 = vld [vmem:[%s1 + $0x6a0] sm:$0xff]
      %v591 = vld [vmem:[%s1 + $0x6a8] sm:$0xff]
      %v592 = vld [vmem:[%s1 + $0x6b0] sm:$0xff]
      %v593 = vld [vmem:[%s1 + $0x6b8] sm:$0xff]
      %v594 = vld [vmem:[%s1 + $0x6c0] sm:$0xff]
      %v595 = vld [vmem:[%s1 + $0x6c8] sm:$0xff]
      %v596 = vld [vmem:[%s1 + $0x6d0] sm:$0xff]
      %v597 = vld [vmem:[%s1 + $0x6d8] sm:$0xff]
      %v598 = vld [vmem:[%s1 + $0x6e0] sm:$0xff]
      %v599 = vld [vmem:[%s1 + $0x6e8] sm:$0xff]
      %v600 = vld [vmem:[%s1 + $0x6f0] sm:$0xff]
      %v601 = vld [vmem:[%s1 + $0x6f8] sm:$0xff]
      %v602 = vld [vmem:[%s1 + $0x700] sm:$0xff]
      %v603 = vld [vmem:[%s1 + $0x708] sm:$0xff]
      %v604 = vld [vmem:[%s1 + $0x710] sm:$0xff]
      %v605 = vld [vmem:[%s1 + $0x718] sm:$0xff]
      %v606 = vld [vmem:[%s1 + $0x720] sm:$0xff]
      %v607 = vld [vmem:[%s1 + $0x728] sm:$0xff]
      %v608 = vld [vmem:[%s1 + $0x730] sm:$0xff]
      %v609 = vld [vmem:[%s1 + $0x738] sm:$0xff]
      %v610 = vld [vmem:[%s1 + $0x740] sm:$0xff]
      %v611 = vld [vmem:[%s1 + $0x748] sm:$0xff]
      %v612 = vld [vmem:[%s1 + $0x750] sm:$0xff]
      %v613 = vld [vmem:[%s1 + $0x758] sm:$0xff]
      %v614 = vld [vmem:[%s1 + $0x760] sm:$0xff]
      %v615 = vld [vmem:[%s1 + $0x768] sm:$0xff]
      %v616 = vld [vmem:[%s1 + $0x770] sm:$0xff]
      %v617 = vld [vmem:[%s1 + $0x778] sm:$0xff]
      %v618 = vld [vmem:[%s1 + $0x780] sm:$0xff]
      %v619 = vld [vmem:[%s1 + $0x788] sm:$0xff]
      %v620 = vld [vmem:[%s1 + $0x790] sm:$0xff]
      %v621 = vld [vmem:[%s1 + $0x798] sm:$0xff]
      %v622 = vld [vmem:[%s1 + $0x7a0] sm:$0xff]
      %v623 = vld [vmem:[%s1 + $0x7a8] sm:$0xff]
      %v624 = vld [vmem:[%s1 + $0x7b0] sm:$0xff]
      %v625 = vld [vmem:[%s1 + $0x7b8] sm:$0xff]
      %v626 = vld [vmem:[%s1 + $0x7c0] sm:$0xff]
      %v627 = vld [vmem:[%s1 + $0x7c8] sm:$0xff]
      %v628 = vld [vmem:[%s1 + $0x7d0] sm:$0xff]
      %v629 = vld [vmem:[%s1 + $0x7d8] sm:$0xff]
      %v630 = vld [vmem:[%s1 + $0x7e0] sm:$0xff]
      %v631 = vld [vmem:[%s1 + $0x7e8] sm:$0xff]
      %v632 = vld [vmem:[%s1 + $0x7f0] sm:$0xff]
      %v633 = vld [vmem:[%s1 + $0x7f8] sm:$0xff]
      %v634 = vld [vmem:[%s1 + $0x800] sm:$0xff]
      %v635 = vld [vmem:[%s1 + $0x808] sm:$0xff]
      %v636 = vld [vmem:[%s1 + $0x810] sm:$0xff]
      %v637 = vld [vmem:[%s1 + $0x818] sm:$0xff]
      %v638 = vld [vmem:[%s1 + $0x820] sm:$0xff]
      %v639 = vld [vmem:[%s1 + $0x828] sm:$0xff]
      %v640 = vld [vmem:[%s1 + $0x830] sm:$0xff]
      %v641 = vld [vmem:[%s1 + $0x838] sm:$0xff]
      %v642 = vld [vmem:[%s1 + $0x840] sm:$0xff]
      %v643 = vld [vmem:[%s1 + $0x848] sm:$0xff]
      %v644 = vld [vmem:[%s1 + $0x850] sm:$0xff]
      %v645 = vld [vmem:[%s1 + $0x858] sm:$0xff]
      %v646 = vld [vmem:[%s1 + $0x860] sm:$0xff]
      %v647 = vld [vmem:[%s1 + $0x868] sm:$0xff]
      %v648 = vld [vmem:[%s1 + $0x870] sm:$0xff]
      %v649 = vld [vmem:[%s1 + $0x878] sm:$0xff]
      %v650 = vld [vmem:[%s1 + $0x880] sm:$0xff]
      %v651 = vld [vmem:[%s1 + $0x888] sm:$0xff]
      %v652 = vld [vmem:[%s1 + $0x890] sm:$0xff]
      %v653 = vld [vmem:[%s1 + $0x898] sm:$0xff]
      %v654 = vld [vmem:[%s1 + $0x8a0] sm:$0xff]
      %v655 = vld [vmem:[%s1 + $0x8a8] sm:$0xff]
      %v656 = vld [vmem:[%s1 + $0x8b0] sm:$0xff]
      %v657 = vld [vmem:[%s1 + $0x8b8] sm:$0xff]
      %v658 = vld [vmem:[%s1 + $0x8c0] sm:$0xff]
      %v659 = vld [vmem:[%s1 + $0x8c8] sm:$0xff]
      %v660 = vld [vmem:[%s1 + $0x8d0] sm:$0xff]
      %v661 = vld [vmem:[%s1 + $0x8d8] sm:$0xff]
      %v662 = vld [vmem:[%s1 + $0x8e0] sm:$0xff]
      %v663 = vld [vmem:[%s1 + $0x8e8] sm:$0xff]
      %v664 = vld [vmem:[%s1 + $0x8f0] sm:$0xff]
      %v665 = vld [vmem:[%s1 + $0x8f8] sm:$0xff]
      %v666 = vld [vmem:[%s4] sm:$0x3f]
      %v668 = vlaneseq
      %v669 = vshrl.u32 %v668, 7
      %v670 = vsub.s32 0, %v669
      %v671 = vrot.slane %v666, %v670
      %v672 = vlaneseq
      %v673 = vshrl.u32 %v672, 7
      %v674 = vsub.s32 1, %v673
      %v675 = vrot.slane %v666, %v674
      %v676 = vlaneseq
      %v677 = vshrl.u32 %v676, 7
      %v678 = vsub.s32 2, %v677
      %v679 = vrot.slane %v666, %v678
      %v680 = vlaneseq
      %v681 = vshrl.u32 %v680, 7
      %v682 = vsub.s32 3, %v681
      %v683 = vrot.slane %v666, %v682
      %v684 = vlaneseq
      %v685 = vshrl.u32 %v684, 7
      %v686 = vsub.s32 4, %v685
      %v687 = vrot.slane %v666, %v686
      %v688 = vlaneseq
      %v689 = vshrl.u32 %v688, 7
      %v690 = vsub.s32 5, %v689
      %v691 = vrot.slane %v666, %v690
      %v704 = vunpack.c.l.b16 %v372
      %v705 = vunpack.c.h.b16 %v372
      %v706 = vunpack.c.l.b16 %v373
      %v707 = vunpack.c.h.b16 %v373
      %v708 = vunpack.c.l.b16 %v374
      %v709 = vunpack.c.h.b16 %v374
      %v710 = vunpack.c.l.b16 %v375
      %v711 = vunpack.c.h.b16 %v375
      %v712 = vunpack.c.l.b16 %v376
      %v713 = vunpack.c.h.b16 %v376
      %v714 = vunpack.c.l.b16 %v377
      %v715 = vunpack.c.h.b16 %v377
      %v716 = vpack.c.b16 %v710, %v704
      %v717 = vpack.c.b16 %v711, %v705
      %v718 = vpack.c.b16 %v712, %v706
      %v719 = vpack.c.b16 %v713, %v707
      %v720 = vpack.c.b16 %v714, %v708
      %v721 = vpack.c.b16 %v715, %v709
      %v1016 = vunpack.c.l.b16 %v378
      %v1017 = vunpack.c.h.b16 %v378
      %v1018 = vunpack.c.l.b16 %v379
      %v1019 = vunpack.c.h.b16 %v379
      %v1020 = vunpack.c.l.b16 %v380
      %v1021 = vunpack.c.h.b16 %v380
      %v1022 = vunpack.c.l.b16 %v381
      %v1023 = vunpack.c.h.b16 %v381
      %v1024 = vunpack.c.l.b16 %v382
      %v1025 = vunpack.c.h.b16 %v382
      %v1026 = vunpack.c.l.b16 %v383
      %v1027 = vunpack.c.h.b16 %v383
      %v1028 = vunpack.c.l.b16 %v384
      %v1029 = vunpack.c.h.b16 %v384
      %v1030 = vunpack.c.l.b16 %v385
      %v1031 = vunpack.c.h.b16 %v385
      %v1032 = vunpack.c.l.b16 %v386
      %v1033 = vunpack.c.h.b16 %v386
      %v1034 = vunpack.c.l.b16 %v387
      %v1035 = vunpack.c.h.b16 %v387
      %v1036 = vunpack.c.l.b16 %v388
      %v1037 = vunpack.c.h.b16 %v388
      %v1038 = vunpack.c.l.b16 %v389
      %v1039 = vunpack.c.h.b16 %v389
      %v1040 = vunpack.c.l.b16 %v390
      %v1041 = vunpack.c.h.b16 %v390
      %v1042 = vunpack.c.l.b16 %v391
      %v1043 = vunpack.c.h.b16 %v391
      %v1044 = vunpack.c.l.b16 %v392
      %v1045 = vunpack.c.h.b16 %v392
      %v1046 = vunpack.c.l.b16 %v393
      %v1047 = vunpack.c.h.b16 %v393
      %v1048 = vunpack.c.l.b16 %v394
      %v1049 = vunpack.c.h.b16 %v394
      %v1050 = vunpack.c.l.b16 %v395
      %v1051 = vunpack.c.h.b16 %v395
      %v1052 = vunpack.c.l.b16 %v396
      %v1053 = vunpack.c.h.b16 %v396
      %v1054 = vunpack.c.l.b16 %v397
      %v1055 = vunpack.c.h.b16 %v397
      %v1056 = vunpack.c.l.b16 %v398
      %v1057 = vunpack.c.h.b16 %v398
      %v1058 = vunpack.c.l.b16 %v399
      %v1059 = vunpack.c.h.b16 %v399
      %v1060 = vunpack.c.l.b16 %v400
      %v1061 = vunpack.c.h.b16 %v400
      %v1062 = vunpack.c.l.b16 %v401
      %v1063 = vunpack.c.h.b16 %v401
      %v1064 = vunpack.c.l.b16 %v402
      %v1065 = vunpack.c.h.b16 %v402
      %v1066 = vunpack.c.l.b16 %v403
      %v1067 = vunpack.c.h.b16 %v403
      %v1068 = vunpack.c.l.b16 %v404
      %v1069 = vunpack.c.h.b16 %v404
      %v1070 = vunpack.c.l.b16 %v405
      %v1071 = vunpack.c.h.b16 %v405
      %v1072 = vunpack.c.l.b16 %v406
      %v1073 = vunpack.c.h.b16 %v406
      %v1074 = vunpack.c.l.b16 %v407
      %v1075 = vunpack.c.h.b16 %v407
      %v1076 = vunpack.c.l.b16 %v408
      %v1077 = vunpack.c.h.b16 %v408
      %v1078 = vunpack.c.l.b16 %v409
      %v1079 = vunpack.c.h.b16 %v409
      %v1080 = vunpack.c.l.b16 %v410
      %v1081 = vunpack.c.h.b16 %v410
      %v1082 = vunpack.c.l.b16 %v411
      %v1083 = vunpack.c.h.b16 %v411
      %v1084 = vunpack.c.l.b16 %v412
      %v1085 = vunpack.c.h.b16 %v412
      %v1086 = vunpack.c.l.b16 %v413
      %v1087 = vunpack.c.h.b16 %v413
      %v1088 = vunpack.c.l.b16 %v414
      %v1089 = vunpack.c.h.b16 %v414
      %v1090 = vunpack.c.l.b16 %v415
      %v1091 = vunpack.c.h.b16 %v415
      %v1092 = vunpack.c.l.b16 %v416
      %v1093 = vunpack.c.h.b16 %v416
      %v1094 = vunpack.c.l.b16 %v417
      %v1095 = vunpack.c.h.b16 %v417
      %v1096 = vunpack.c.l.b16 %v418
      %v1097 = vunpack.c.h.b16 %v418
      %v1098 = vunpack.c.l.b16 %v419
      %v1099 = vunpack.c.h.b16 %v419
      %v1100 = vunpack.c.l.b16 %v420
      %v1101 = vunpack.c.h.b16 %v420
      %v1102 = vunpack.c.l.b16 %v421
      %v1103 = vunpack.c.h.b16 %v421
      %v1104 = vunpack.c.l.b16 %v422
      %v1105 = vunpack.c.h.b16 %v422
      %v1106 = vunpack.c.l.b16 %v423
      %v1107 = vunpack.c.h.b16 %v423
      %v1108 = vunpack.c.l.b16 %v424
      %v1109 = vunpack.c.h.b16 %v424
      %v1110 = vunpack.c.l.b16 %v425
      %v1111 = vunpack.c.h.b16 %v425
      %v1112 = vunpack.c.l.b16 %v426
      %v1113 = vunpack.c.h.b16 %v426
      %v1114 = vunpack.c.l.b16 %v427
      %v1115 = vunpack.c.h.b16 %v427
      %v1116 = vunpack.c.l.b16 %v428
      %v1117 = vunpack.c.h.b16 %v428
      %v1118 = vunpack.c.l.b16 %v429
      %v1119 = vunpack.c.h.b16 %v429
      %v1120 = vunpack.c.l.b16 %v430
      %v1121 = vunpack.c.h.b16 %v430
      %v1122 = vunpack.c.l.b16 %v431
      %v1123 = vunpack.c.h.b16 %v431
      %v1124 = vunpack.c.l.b16 %v432
      %v1125 = vunpack.c.h.b16 %v432
      %v1126 = vunpack.c.l.b16 %v433
      %v1127 = vunpack.c.h.b16 %v433
      %v1128 = vunpack.c.l.b16 %v434
      %v1129 = vunpack.c.h.b16 %v434
      %v1130 = vunpack.c.l.b16 %v435
      %v1131 = vunpack.c.h.b16 %v435
      %v1132 = vunpack.c.l.b16 %v436
      %v1133 = vunpack.c.h.b16 %v436
      %v1134 = vunpack.c.l.b16 %v437
      %v1135 = vunpack.c.h.b16 %v437
      %v1136 = vunpack.c.l.b16 %v438
      %v1137 = vunpack.c.h.b16 %v438
      %v1138 = vunpack.c.l.b16 %v439
      %v1139 = vunpack.c.h.b16 %v439
      %v1140 = vunpack.c.l.b16 %v440
      %v1141 = vunpack.c.h.b16 %v440
      %v1142 = vunpack.c.l.b16 %v441
      %v1143 = vunpack.c.h.b16 %v441
      %v1144 = vunpack.c.l.b16 %v442
      %v1145 = vunpack.c.h.b16 %v442
      %v1146 = vunpack.c.l.b16 %v443
      %v1147 = vunpack.c.h.b16 %v443
      %v1148 = vunpack.c.l.b16 %v444
      %v1149 = vunpack.c.h.b16 %v444
      %v1150 = vunpack.c.l.b16 %v445
      %v1151 = vunpack.c.h.b16 %v445
      %v1152 = vunpack.c.l.b16 %v446
      %v1153 = vunpack.c.h.b16 %v446
      %v1154 = vunpack.c.l.b16 %v447
      %v1155 = vunpack.c.h.b16 %v447
      %v1156 = vunpack.c.l.b16 %v448
      %v1157 = vunpack.c.h.b16 %v448
      %v1158 = vunpack.c.l.b16 %v449
      %v1159 = vunpack.c.h.b16 %v449
      %v1160 = vunpack.c.l.b16 %v450
      %v1161 = vunpack.c.h.b16 %v450
      %v1162 = vunpack.c.l.b16 %v451
      %v1163 = vunpack.c.h.b16 %v451
      %v1164 = vunpack.c.l.b16 %v452
      %v1165 = vunpack.c.h.b16 %v452
      %v1166 = vunpack.c.l.b16 %v453
      %v1167 = vunpack.c.h.b16 %v453
      %v1168 = vunpack.c.l.b16 %v454
      %v1169 = vunpack.c.h.b16 %v454
      %v1170 = vunpack.c.l.b16 %v455
      %v1171 = vunpack.c.h.b16 %v455
      %v1172 = vunpack.c.l.b16 %v456
      %v1173 = vunpack.c.h.b16 %v456
      %v1174 = vunpack.c.l.b16 %v457
      %v1175 = vunpack.c.h.b16 %v457
      %v1176 = vunpack.c.l.b16 %v458
      %v1177 = vunpack.c.h.b16 %v458
      %v1178 = vunpack.c.l.b16 %v459
      %v1179 = vunpack.c.h.b16 %v459
      %v1180 = vunpack.c.l.b16 %v460
      %v1181 = vunpack.c.h.b16 %v460
      %v1182 = vunpack.c.l.b16 %v461
      %v1183 = vunpack.c.h.b16 %v461
      %v1184 = vunpack.c.l.b16 %v462
      %v1185 = vunpack.c.h.b16 %v462
      %v1186 = vunpack.c.l.b16 %v463
      %v1187 = vunpack.c.h.b16 %v463
      %v1188 = vunpack.c.l.b16 %v464
      %v1189 = vunpack.c.h.b16 %v464
      %v1190 = vunpack.c.l.b16 %v465
      %v1191 = vunpack.c.h.b16 %v465
      %v1192 = vunpack.c.l.b16 %v466
      %v1193 = vunpack.c.h.b16 %v466
      %v1194 = vunpack.c.l.b16 %v467
      %v1195 = vunpack.c.h.b16 %v467
      %v1196 = vunpack.c.l.b16 %v468
      %v1197 = vunpack.c.h.b16 %v468
      %v1198 = vunpack.c.l.b16 %v469
      %v1199 = vunpack.c.h.b16 %v469
      %v1200 = vunpack.c.l.b16 %v470
      %v1201 = vunpack.c.h.b16 %v470
      %v1202 = vunpack.c.l.b16 %v471
      %v1203 = vunpack.c.h.b16 %v471
      %v1204 = vunpack.c.l.b16 %v472
      %v1205 = vunpack.c.h.b16 %v472
      %v1206 = vunpack.c.l.b16 %v473
      %v1207 = vunpack.c.h.b16 %v473
      %v1208 = vunpack.c.l.b16 %v474
      %v1209 = vunpack.c.h.b16 %v474
      %v1210 = vunpack.c.l.b16 %v475
      %v1211 = vunpack.c.h.b16 %v475
      %v1212 = vunpack.c.l.b16 %v476
      %v1213 = vunpack.c.h.b16 %v476
      %v1214 = vunpack.c.l.b16 %v477
      %v1215 = vunpack.c.h.b16 %v477
      %v1216 = vunpack.c.l.b16 %v478
      %v1217 = vunpack.c.h.b16 %v478
      %v1218 = vunpack.c.l.b16 %v479
      %v1219 = vunpack.c.h.b16 %v479
      %v1220 = vunpack.c.l.b16 %v480
      %v1221 = vunpack.c.h.b16 %v480
      %v1222 = vunpack.c.l.b16 %v481
      %v1223 = vunpack.c.h.b16 %v481
      %v1224 = vunpack.c.l.b16 %v482
      %v1225 = vunpack.c.h.b16 %v482
      %v1226 = vunpack.c.l.b16 %v483
      %v1227 = vunpack.c.h.b16 %v483
      %v1228 = vunpack.c.l.b16 %v484
      %v1229 = vunpack.c.h.b16 %v484
      %v1230 = vunpack.c.l.b16 %v485
      %v1231 = vunpack.c.h.b16 %v485
      %v1232 = vunpack.c.l.b16 %v486
      %v1233 = vunpack.c.h.b16 %v486
      %v1234 = vunpack.c.l.b16 %v487
      %v1235 = vunpack.c.h.b16 %v487
      %v1236 = vunpack.c.l.b16 %v488
      %v1237 = vunpack.c.h.b16 %v488
      %v1238 = vunpack.c.l.b16 %v489
      %v1239 = vunpack.c.h.b16 %v489
      %v1240 = vunpack.c.l.b16 %v490
      %v1241 = vunpack.c.h.b16 %v490
      %v1242 = vunpack.c.l.b16 %v491
      %v1243 = vunpack.c.h.b16 %v491
      %v1244 = vunpack.c.l.b16 %v492
      %v1245 = vunpack.c.h.b16 %v492
      %v1246 = vunpack.c.l.b16 %v493
      %v1247 = vunpack.c.h.b16 %v493
      %v1248 = vunpack.c.l.b16 %v494
      %v1249 = vunpack.c.h.b16 %v494
      %v1250 = vunpack.c.l.b16 %v495
      %v1251 = vunpack.c.h.b16 %v495
      %v1252 = vunpack.c.l.b16 %v496
      %v1253 = vunpack.c.h.b16 %v496
      %v1254 = vunpack.c.l.b16 %v497
      %v1255 = vunpack.c.h.b16 %v497
      %v1256 = vunpack.c.l.b16 %v498
      %v1257 = vunpack.c.h.b16 %v498
      %v1258 = vunpack.c.l.b16 %v499
      %v1259 = vunpack.c.h.b16 %v499
      %v1260 = vunpack.c.l.b16 %v500
      %v1261 = vunpack.c.h.b16 %v500
      %v1262 = vunpack.c.l.b16 %v501
      %v1263 = vunpack.c.h.b16 %v501
      %v1264 = vunpack.c.l.b16 %v502
      %v1265 = vunpack.c.h.b16 %v502
      %v1266 = vunpack.c.l.b16 %v503
      %v1267 = vunpack.c.h.b16 %v503
      %v1268 = vunpack.c.l.b16 %v504
      %v1269 = vunpack.c.h.b16 %v504
      %v1270 = vunpack.c.l.b16 %v505
      %v1271 = vunpack.c.h.b16 %v505
      %v1272 = vunpack.c.l.b16 %v506
      %v1273 = vunpack.c.h.b16 %v506
      %v1274 = vunpack.c.l.b16 %v507
      %v1275 = vunpack.c.h.b16 %v507
      %v1276 = vunpack.c.l.b16 %v508
      %v1277 = vunpack.c.h.b16 %v508
      %v1278 = vunpack.c.l.b16 %v509
      %v1279 = vunpack.c.h.b16 %v509
      %v1280 = vunpack.c.l.b16 %v510
      %v1281 = vunpack.c.h.b16 %v510
      %v1282 = vunpack.c.l.b16 %v511
      %v1283 = vunpack.c.h.b16 %v511
      %v1284 = vunpack.c.l.b16 %v512
      %v1285 = vunpack.c.h.b16 %v512
      %v1286 = vunpack.c.l.b16 %v513
      %v1287 = vunpack.c.h.b16 %v513
      %v1288 = vunpack.c.l.b16 %v514
      %v1289 = vunpack.c.h.b16 %v514
      %v1290 = vunpack.c.l.b16 %v515
      %v1291 = vunpack.c.h.b16 %v515
      %v1292 = vunpack.c.l.b16 %v516
      %v1293 = vunpack.c.h.b16 %v516
      %v1294 = vunpack.c.l.b16 %v517
      %v1295 = vunpack.c.h.b16 %v517
      %v1296 = vunpack.c.l.b16 %v518
      %v1297 = vunpack.c.h.b16 %v518
      %v1298 = vunpack.c.l.b16 %v519
      %v1299 = vunpack.c.h.b16 %v519
      %v1300 = vunpack.c.l.b16 %v520
      %v1301 = vunpack.c.h.b16 %v520
      %v1302 = vunpack.c.l.b16 %v521
      %v1303 = vunpack.c.h.b16 %v521
      %v1304 = vunpack.c.l.b16 %v522
      %v1305 = vunpack.c.h.b16 %v522
      %v1306 = vunpack.c.l.b16 %v523
      %v1307 = vunpack.c.h.b16 %v523
      %v1308 = vunpack.c.l.b16 %v524
      %v1309 = vunpack.c.h.b16 %v524
      %v1310 = vunpack.c.l.b16 %v525
      %v1311 = vunpack.c.h.b16 %v525
      %v1312 = vunpack.c.l.b16 %v526
      %v1313 = vunpack.c.h.b16 %v526
      %v1314 = vunpack.c.l.b16 %v527
      %v1315 = vunpack.c.h.b16 %v527
      %v1316 = vunpack.c.l.b16 %v528
      %v1317 = vunpack.c.h.b16 %v528
      %v1318 = vunpack.c.l.b16 %v529
      %v1319 = vunpack.c.h.b16 %v529
      %v1320 = vunpack.c.l.b16 %v530
      %v1321 = vunpack.c.h.b16 %v530
      %v1322 = vunpack.c.l.b16 %v531
      %v1323 = vunpack.c.h.b16 %v531
      %v1324 = vunpack.c.l.b16 %v532
      %v1325 = vunpack.c.h.b16 %v532
      %v1326 = vunpack.c.l.b16 %v533
      %v1327 = vunpack.c.h.b16 %v533
      %v1328 = vunpack.c.l.b16 %v534
      %v1329 = vunpack.c.h.b16 %v534
      %v1330 = vunpack.c.l.b16 %v535
      %v1331 = vunpack.c.h.b16 %v535
      %v1332 = vunpack.c.l.b16 %v536
      %v1333 = vunpack.c.h.b16 %v536
      %v1334 = vunpack.c.l.b16 %v537
      %v1335 = vunpack.c.h.b16 %v537
      %v1336 = vunpack.c.l.b16 %v538
      %v1337 = vunpack.c.h.b16 %v538
      %v1338 = vunpack.c.l.b16 %v539
      %v1339 = vunpack.c.h.b16 %v539
      %v1340 = vunpack.c.l.b16 %v540
      %v1341 = vunpack.c.h.b16 %v540
      %v1342 = vunpack.c.l.b16 %v541
      %v1343 = vunpack.c.h.b16 %v541
      %v1344 = vunpack.c.l.b16 %v542
      %v1345 = vunpack.c.h.b16 %v542
      %v1346 = vunpack.c.l.b16 %v543
      %v1347 = vunpack.c.h.b16 %v543
      %v1348 = vunpack.c.l.b16 %v544
      %v1349 = vunpack.c.h.b16 %v544
      %v1350 = vunpack.c.l.b16 %v545
      %v1351 = vunpack.c.h.b16 %v545
      %v1352 = vunpack.c.l.b16 %v546
      %v1353 = vunpack.c.h.b16 %v546
      %v1354 = vunpack.c.l.b16 %v547
      %v1355 = vunpack.c.h.b16 %v547
      %v1356 = vunpack.c.l.b16 %v548
      %v1357 = vunpack.c.h.b16 %v548
      %v1358 = vunpack.c.l.b16 %v549
      %v1359 = vunpack.c.h.b16 %v549
      %v1360 = vunpack.c.l.b16 %v550
      %v1361 = vunpack.c.h.b16 %v550
      %v1362 = vunpack.c.l.b16 %v551
      %v1363 = vunpack.c.h.b16 %v551
      %v1364 = vunpack.c.l.b16 %v552
      %v1365 = vunpack.c.h.b16 %v552
      %v1366 = vunpack.c.l.b16 %v553
      %v1367 = vunpack.c.h.b16 %v553
      %v1368 = vunpack.c.l.b16 %v554
      %v1369 = vunpack.c.h.b16 %v554
      %v1370 = vunpack.c.l.b16 %v555
      %v1371 = vunpack.c.h.b16 %v555
      %v1372 = vunpack.c.l.b16 %v556
      %v1373 = vunpack.c.h.b16 %v556
      %v1374 = vunpack.c.l.b16 %v557
      %v1375 = vunpack.c.h.b16 %v557
      %v1376 = vunpack.c.l.b16 %v558
      %v1377 = vunpack.c.h.b16 %v558
      %v1378 = vunpack.c.l.b16 %v559
      %v1379 = vunpack.c.h.b16 %v559
      %v1380 = vunpack.c.l.b16 %v560
      %v1381 = vunpack.c.h.b16 %v560
      %v1382 = vunpack.c.l.b16 %v561
      %v1383 = vunpack.c.h.b16 %v561
      %v1384 = vunpack.c.l.b16 %v562
      %v1385 = vunpack.c.h.b16 %v562
      %v1386 = vunpack.c.l.b16 %v563
      %v1387 = vunpack.c.h.b16 %v563
      %v1388 = vunpack.c.l.b16 %v564
      %v1389 = vunpack.c.h.b16 %v564
      %v1390 = vunpack.c.l.b16 %v565
      %v1391 = vunpack.c.h.b16 %v565
      %v1392 = vunpack.c.l.b16 %v566
      %v1393 = vunpack.c.h.b16 %v566
      %v1394 = vunpack.c.l.b16 %v567
      %v1395 = vunpack.c.h.b16 %v567
      %v1396 = vunpack.c.l.b16 %v568
      %v1397 = vunpack.c.h.b16 %v568
      %v1398 = vunpack.c.l.b16 %v569
      %v1399 = vunpack.c.h.b16 %v569
      %v1400 = vunpack.c.l.b16 %v570
      %v1401 = vunpack.c.h.b16 %v570
      %v1402 = vunpack.c.l.b16 %v571
      %v1403 = vunpack.c.h.b16 %v571
      %v1404 = vunpack.c.l.b16 %v572
      %v1405 = vunpack.c.h.b16 %v572
      %v1406 = vunpack.c.l.b16 %v573
      %v1407 = vunpack.c.h.b16 %v573
      %v1408 = vunpack.c.l.b16 %v574
      %v1409 = vunpack.c.h.b16 %v574
      %v1410 = vunpack.c.l.b16 %v575
      %v1411 = vunpack.c.h.b16 %v575
      %v1412 = vunpack.c.l.b16 %v576
      %v1413 = vunpack.c.h.b16 %v576
      %v1414 = vunpack.c.l.b16 %v577
      %v1415 = vunpack.c.h.b16 %v577
      %v1416 = vunpack.c.l.b16 %v578
      %v1417 = vunpack.c.h.b16 %v578
      %v1418 = vunpack.c.l.b16 %v579
      %v1419 = vunpack.c.h.b16 %v579
      %v1420 = vunpack.c.l.b16 %v580
      %v1421 = vunpack.c.h.b16 %v580
      %v1422 = vunpack.c.l.b16 %v581
      %v1423 = vunpack.c.h.b16 %v581
      %v1424 = vunpack.c.l.b16 %v582
      %v1425 = vunpack.c.h.b16 %v582
      %v1426 = vunpack.c.l.b16 %v583
      %v1427 = vunpack.c.h.b16 %v583
      %v1428 = vunpack.c.l.b16 %v584
      %v1429 = vunpack.c.h.b16 %v584
      %v1430 = vunpack.c.l.b16 %v585
      %v1431 = vunpack.c.h.b16 %v585
      %v1432 = vunpack.c.l.b16 %v586
      %v1433 = vunpack.c.h.b16 %v586
      %v1434 = vunpack.c.l.b16 %v587
      %v1435 = vunpack.c.h.b16 %v587
      %v1436 = vunpack.c.l.b16 %v588
      %v1437 = vunpack.c.h.b16 %v588
      %v1438 = vunpack.c.l.b16 %v589
      %v1439 = vunpack.c.h.b16 %v589
      %v1440 = vunpack.c.l.b16 %v590
      %v1441 = vunpack.c.h.b16 %v590
      %v1442 = vunpack.c.l.b16 %v591
      %v1443 = vunpack.c.h.b16 %v591
      %v1444 = vunpack.c.l.b16 %v592
      %v1445 = vunpack.c.h.b16 %v592
      %v1446 = vunpack.c.l.b16 %v593
      %v1447 = vunpack.c.h.b16 %v593
      %v1448 = vunpack.c.l.b16 %v594
      %v1449 = vunpack.c.h.b16 %v594
      %v1450 = vunpack.c.l.b16 %v595
      %v1451 = vunpack.c.h.b16 %v595
      %v1452 = vunpack.c.l.b16 %v596
      %v1453 = vunpack.c.h.b16 %v596
      %v1454 = vunpack.c.l.b16 %v597
      %v1455 = vunpack.c.h.b16 %v597
      %v1456 = vunpack.c.l.b16 %v598
      %v1457 = vunpack.c.h.b16 %v598
      %v1458 = vunpack.c.l.b16 %v599
      %v1459 = vunpack.c.h.b16 %v599
      %v1460 = vunpack.c.l.b16 %v600
      %v1461 = vunpack.c.h.b16 %v600
      %v1462 = vunpack.c.l.b16 %v601
      %v1463 = vunpack.c.h.b16 %v601
      %v1464 = vunpack.c.l.b16 %v602
      %v1465 = vunpack.c.h.b16 %v602
      %v1466 = vunpack.c.l.b16 %v603
      %v1467 = vunpack.c.h.b16 %v603
      %v1468 = vunpack.c.l.b16 %v604
      %v1469 = vunpack.c.h.b16 %v604
      %v1470 = vunpack.c.l.b16 %v605
      %v1471 = vunpack.c.h.b16 %v605
      %v1472 = vunpack.c.l.b16 %v606
      %v1473 = vunpack.c.h.b16 %v606
      %v1474 = vunpack.c.l.b16 %v607
      %v1475 = vunpack.c.h.b16 %v607
      %v1476 = vunpack.c.l.b16 %v608
      %v1477 = vunpack.c.h.b16 %v608
      %v1478 = vunpack.c.l.b16 %v609
      %v1479 = vunpack.c.h.b16 %v609
      %v1480 = vunpack.c.l.b16 %v610
      %v1481 = vunpack.c.h.b16 %v610
      %v1482 = vunpack.c.l.b16 %v611
      %v1483 = vunpack.c.h.b16 %v611
      %v1484 = vunpack.c.l.b16 %v612
      %v1485 = vunpack.c.h.b16 %v612
      %v1486 = vunpack.c.l.b16 %v613
      %v1487 = vunpack.c.h.b16 %v613
      %v1488 = vunpack.c.l.b16 %v614
      %v1489 = vunpack.c.h.b16 %v614
      %v1490 = vunpack.c.l.b16 %v615
      %v1491 = vunpack.c.h.b16 %v615
      %v1492 = vunpack.c.l.b16 %v616
      %v1493 = vunpack.c.h.b16 %v616
      %v1494 = vunpack.c.l.b16 %v617
      %v1495 = vunpack.c.h.b16 %v617
      %v1496 = vunpack.c.l.b16 %v618
      %v1497 = vunpack.c.h.b16 %v618
      %v1498 = vunpack.c.l.b16 %v619
      %v1499 = vunpack.c.h.b16 %v619
      %v1500 = vunpack.c.l.b16 %v620
      %v1501 = vunpack.c.h.b16 %v620
      %v1502 = vunpack.c.l.b16 %v621
      %v1503 = vunpack.c.h.b16 %v621
      %v1504 = vunpack.c.l.b16 %v622
      %v1505 = vunpack.c.h.b16 %v622
      %v1506 = vunpack.c.l.b16 %v623
      %v1507 = vunpack.c.h.b16 %v623
      %v1508 = vunpack.c.l.b16 %v624
      %v1509 = vunpack.c.h.b16 %v624
      %v1510 = vunpack.c.l.b16 %v625
      %v1511 = vunpack.c.h.b16 %v625
      %v1512 = vunpack.c.l.b16 %v626
      %v1513 = vunpack.c.h.b16 %v626
      %v1514 = vunpack.c.l.b16 %v627
      %v1515 = vunpack.c.h.b16 %v627
      %v1516 = vunpack.c.l.b16 %v628
      %v1517 = vunpack.c.h.b16 %v628
      %v1518 = vunpack.c.l.b16 %v629
      %v1519 = vunpack.c.h.b16 %v629
      %v1520 = vunpack.c.l.b16 %v630
      %v1521 = vunpack.c.h.b16 %v630
      %v1522 = vunpack.c.l.b16 %v631
      %v1523 = vunpack.c.h.b16 %v631
      %v1524 = vunpack.c.l.b16 %v632
      %v1525 = vunpack.c.h.b16 %v632
      %v1526 = vunpack.c.l.b16 %v633
      %v1527 = vunpack.c.h.b16 %v633
      %v1528 = vunpack.c.l.b16 %v634
      %v1529 = vunpack.c.h.b16 %v634
      %v1530 = vunpack.c.l.b16 %v635
      %v1531 = vunpack.c.h.b16 %v635
      %v1532 = vunpack.c.l.b16 %v636
      %v1533 = vunpack.c.h.b16 %v636
      %v1534 = vunpack.c.l.b16 %v637
      %v1535 = vunpack.c.h.b16 %v637
      %v1536 = vunpack.c.l.b16 %v638
      %v1537 = vunpack.c.h.b16 %v638
      %v1538 = vunpack.c.l.b16 %v639
      %v1539 = vunpack.c.h.b16 %v639
      %v1540 = vunpack.c.l.b16 %v640
      %v1541 = vunpack.c.h.b16 %v640
      %v1542 = vunpack.c.l.b16 %v641
      %v1543 = vunpack.c.h.b16 %v641
      %v1544 = vunpack.c.l.b16 %v642
      %v1545 = vunpack.c.h.b16 %v642
      %v1546 = vunpack.c.l.b16 %v643
      %v1547 = vunpack.c.h.b16 %v643
      %v1548 = vunpack.c.l.b16 %v644
      %v1549 = vunpack.c.h.b16 %v644
      %v1550 = vunpack.c.l.b16 %v645
      %v1551 = vunpack.c.h.b16 %v645
      %v1552 = vunpack.c.l.b16 %v646
      %v1553 = vunpack.c.h.b16 %v646
      %v1554 = vunpack.c.l.b16 %v647
      %v1555 = vunpack.c.h.b16 %v647
      %v1556 = vunpack.c.l.b16 %v648
      %v1557 = vunpack.c.h.b16 %v648
      %v1558 = vunpack.c.l.b16 %v649
      %v1559 = vunpack.c.h.b16 %v649
      %v1560 = vunpack.c.l.b16 %v650
      %v1561 = vunpack.c.h.b16 %v650
      %v1562 = vunpack.c.l.b16 %v651
      %v1563 = vunpack.c.h.b16 %v651
      %v1564 = vunpack.c.l.b16 %v652
      %v1565 = vunpack.c.h.b16 %v652
      %v1566 = vunpack.c.l.b16 %v653
      %v1567 = vunpack.c.h.b16 %v653
      %v1568 = vunpack.c.l.b16 %v654
      %v1569 = vunpack.c.h.b16 %v654
      %v1570 = vunpack.c.l.b16 %v655
      %v1571 = vunpack.c.h.b16 %v655
      %v1572 = vunpack.c.l.b16 %v656
      %v1573 = vunpack.c.h.b16 %v656
      %v1574 = vunpack.c.l.b16 %v657
      %v1575 = vunpack.c.h.b16 %v657
      %v1576 = vunpack.c.l.b16 %v658
      %v1577 = vunpack.c.h.b16 %v658
      %v1578 = vunpack.c.l.b16 %v659
      %v1579 = vunpack.c.h.b16 %v659
      %v1580 = vunpack.c.l.b16 %v660
      %v1581 = vunpack.c.h.b16 %v660
      %v1582 = vunpack.c.l.b16 %v661
      %v1583 = vunpack.c.h.b16 %v661
      %v1584 = vunpack.c.l.b16 %v662
      %v1585 = vunpack.c.h.b16 %v662
      %v1586 = vunpack.c.l.b16 %v663
      %v1587 = vunpack.c.h.b16 %v663
      %v1588 = vunpack.c.l.b16 %v664
      %v1589 = vunpack.c.h.b16 %v664
      %v1590 = vunpack.c.l.b16 %v665
      %v1591 = vunpack.c.h.b16 %v665
      %v1592 = vpack.c.b16 %v1022, %v1016
      %v1593 = vpack.c.b16 %v1023, %v1017
      %v1594 = vpack.c.b16 %v1024, %v1018
      %v1595 = vpack.c.b16 %v1025, %v1019
      %v1596 = vpack.c.b16 %v1026, %v1020
      %v1597 = vpack.c.b16 %v1027, %v1021
      %v1598 = vpack.c.b16 %v1034, %v1028
      %v1599 = vpack.c.b16 %v1035, %v1029
      %v1600 = vpack.c.b16 %v1036, %v1030
      %v1601 = vpack.c.b16 %v1037, %v1031
      %v1602 = vpack.c.b16 %v1038, %v1032
      %v1603 = vpack.c.b16 %v1039, %v1033
      %v1604 = vpack.c.b16 %v1046, %v1040
      %v1605 = vpack.c.b16 %v1047, %v1041
      %v1606 = vpack.c.b16 %v1048, %v1042
      %v1607 = vpack.c.b16 %v1049, %v1043
      %v1608 = vpack.c.b16 %v1050, %v1044
      %v1609 = vpack.c.b16 %v1051, %v1045
      %v1610 = vpack.c.b16 %v1058, %v1052
      %v1611 = vpack.c.b16 %v1059, %v1053
      %v1612 = vpack.c.b16 %v1060, %v1054
      %v1613 = vpack.c.b16 %v1061, %v1055
      %v1614 = vpack.c.b16 %v1062, %v1056
      %v1615 = vpack.c.b16 %v1063, %v1057
      %v1616 = vpack.c.b16 %v1070, %v1064
      %v1617 = vpack.c.b16 %v1071, %v1065
      %v1618 = vpack.c.b16 %v1072, %v1066
      %v1619 = vpack.c.b16 %v1073, %v1067
      %v1620 = vpack.c.b16 %v1074, %v1068
      %v1621 = vpack.c.b16 %v1075, %v1069
      %v1622 = vpack.c.b16 %v1082, %v1076
      %v1623 = vpack.c.b16 %v1083, %v1077
      %v1624 = vpack.c.b16 %v1084, %v1078
      %v1625 = vpack.c.b16 %v1085, %v1079
      %v1626 = vpack.c.b16 %v1086, %v1080
      %v1627 = vpack.c.b16 %v1087, %v1081
      %v1628 = vpack.c.b16 %v1094, %v1088
      %v1629 = vpack.c.b16 %v1095, %v1089
      %v1630 = vpack.c.b16 %v1096, %v1090
      %v1631 = vpack.c.b16 %v1097, %v1091
      %v1632 = vpack.c.b16 %v1098, %v1092
      %v1633 = vpack.c.b16 %v1099, %v1093
      %v1634 = vpack.c.b16 %v1106, %v1100
      %v1635 = vpack.c.b16 %v1107, %v1101
      %v1636 = vpack.c.b16 %v1108, %v1102
      %v1637 = vpack.c.b16 %v1109, %v1103
      %v1638 = vpack.c.b16 %v1110, %v1104
      %v1639 = vpack.c.b16 %v1111, %v1105
      %v1640 = vpack.c.b16 %v1118, %v1112
      %v1641 = vpack.c.b16 %v1119, %v1113
      %v1642 = vpack.c.b16 %v1120, %v1114
      %v1643 = vpack.c.b16 %v1121, %v1115
      %v1644 = vpack.c.b16 %v1122, %v1116
      %v1645 = vpack.c.b16 %v1123, %v1117
      %v1646 = vpack.c.b16 %v1130, %v1124
      %v1647 = vpack.c.b16 %v1131, %v1125
      %v1648 = vpack.c.b16 %v1132, %v1126
      %v1649 = vpack.c.b16 %v1133, %v1127
      %v1650 = vpack.c.b16 %v1134, %v1128
      %v1651 = vpack.c.b16 %v1135, %v1129
      %v1652 = vpack.c.b16 %v1142, %v1136
      %v1653 = vpack.c.b16 %v1143, %v1137
      %v1654 = vpack.c.b16 %v1144, %v1138
      %v1655 = vpack.c.b16 %v1145, %v1139
      %v1656 = vpack.c.b16 %v1146, %v1140
      %v1657 = vpack.c.b16 %v1147, %v1141
      %v1658 = vpack.c.b16 %v1154, %v1148
      %v1659 = vpack.c.b16 %v1155, %v1149
      %v1660 = vpack.c.b16 %v1156, %v1150
      %v1661 = vpack.c.b16 %v1157, %v1151
      %v1662 = vpack.c.b16 %v1158, %v1152
      %v1663 = vpack.c.b16 %v1159, %v1153
      %v1664 = vpack.c.b16 %v1166, %v1160
      %v1665 = vpack.c.b16 %v1167, %v1161
      %v1666 = vpack.c.b16 %v1168, %v1162
      %v1667 = vpack.c.b16 %v1169, %v1163
      %v1668 = vpack.c.b16 %v1170, %v1164
      %v1669 = vpack.c.b16 %v1171, %v1165
      %v1670 = vpack.c.b16 %v1178, %v1172
      %v1671 = vpack.c.b16 %v1179, %v1173
      %v1672 = vpack.c.b16 %v1180, %v1174
      %v1673 = vpack.c.b16 %v1181, %v1175
      %v1674 = vpack.c.b16 %v1182, %v1176
      %v1675 = vpack.c.b16 %v1183, %v1177
      %v1676 = vpack.c.b16 %v1190, %v1184
      %v1677 = vpack.c.b16 %v1191, %v1185
      %v1678 = vpack.c.b16 %v1192, %v1186
      %v1679 = vpack.c.b16 %v1193, %v1187
      %v1680 = vpack.c.b16 %v1194, %v1188
      %v1681 = vpack.c.b16 %v1195, %v1189
      %v1682 = vpack.c.b16 %v1202, %v1196
      %v1683 = vpack.c.b16 %v1203, %v1197
      %v1684 = vpack.c.b16 %v1204, %v1198
      %v1685 = vpack.c.b16 %v1205, %v1199
      %v1686 = vpack.c.b16 %v1206, %v1200
      %v1687 = vpack.c.b16 %v1207, %v1201
      %v1688 = vpack.c.b16 %v1214, %v1208
      %v1689 = vpack.c.b16 %v1215, %v1209
      %v1690 = vpack.c.b16 %v1216, %v1210
      %v1691 = vpack.c.b16 %v1217, %v1211
      %v1692 = vpack.c.b16 %v1218, %v1212
      %v1693 = vpack.c.b16 %v1219, %v1213
      %v1694 = vpack.c.b16 %v1226, %v1220
      %v1695 = vpack.c.b16 %v1227, %v1221
      %v1696 = vpack.c.b16 %v1228, %v1222
      %v1697 = vpack.c.b16 %v1229, %v1223
      %v1698 = vpack.c.b16 %v1230, %v1224
      %v1699 = vpack.c.b16 %v1231, %v1225
      %v1700 = vpack.c.b16 %v1238, %v1232
      %v1701 = vpack.c.b16 %v1239, %v1233
      %v1702 = vpack.c.b16 %v1240, %v1234
      %v1703 = vpack.c.b16 %v1241, %v1235
      %v1704 = vpack.c.b16 %v1242, %v1236
      %v1705 = vpack.c.b16 %v1243, %v1237
      %v1706 = vpack.c.b16 %v1250, %v1244
      %v1707 = vpack.c.b16 %v1251, %v1245
      %v1708 = vpack.c.b16 %v1252, %v1246
      %v1709 = vpack.c.b16 %v1253, %v1247
      %v1710 = vpack.c.b16 %v1254, %v1248
      %v1711 = vpack.c.b16 %v1255, %v1249
      %v1712 = vpack.c.b16 %v1262, %v1256
      %v1713 = vpack.c.b16 %v1263, %v1257
      %v1714 = vpack.c.b16 %v1264, %v1258
      %v1715 = vpack.c.b16 %v1265, %v1259
      %v1716 = vpack.c.b16 %v1266, %v1260
      %v1717 = vpack.c.b16 %v1267, %v1261
      %v1718 = vpack.c.b16 %v1274, %v1268
      %v1719 = vpack.c.b16 %v1275, %v1269
      %v1720 = vpack.c.b16 %v1276, %v1270
      %v1721 = vpack.c.b16 %v1277, %v1271
      %v1722 = vpack.c.b16 %v1278, %v1272
      %v1723 = vpack.c.b16 %v1279, %v1273
      %v1724 = vpack.c.b16 %v1286, %v1280
      %v1725 = vpack.c.b16 %v1287, %v1281
      %v1726 = vpack.c.b16 %v1288, %v1282
      %v1727 = vpack.c.b16 %v1289, %v1283
      %v1728 = vpack.c.b16 %v1290, %v1284
      %v1729 = vpack.c.b16 %v1291, %v1285
      %v1730 = vpack.c.b16 %v1298, %v1292
      %v1731 = vpack.c.b16 %v1299, %v1293
      %v1732 = vpack.c.b16 %v1300, %v1294
      %v1733 = vpack.c.b16 %v1301, %v1295
      %v1734 = vpack.c.b16 %v1302, %v1296
      %v1735 = vpack.c.b16 %v1303, %v1297
      %v1736 = vpack.c.b16 %v1310, %v1304
      %v1737 = vpack.c.b16 %v1311, %v1305
      %v1738 = vpack.c.b16 %v1312, %v1306
      %v1739 = vpack.c.b16 %v1313, %v1307
      %v1740 = vpack.c.b16 %v1314, %v1308
      %v1741 = vpack.c.b16 %v1315, %v1309
      %v1742 = vpack.c.b16 %v1322, %v1316
      %v1743 = vpack.c.b16 %v1323, %v1317
      %v1744 = vpack.c.b16 %v1324, %v1318
      %v1745 = vpack.c.b16 %v1325, %v1319
      %v1746 = vpack.c.b16 %v1326, %v1320
      %v1747 = vpack.c.b16 %v1327, %v1321
      %v1748 = vpack.c.b16 %v1334, %v1328
      %v1749 = vpack.c.b16 %v1335, %v1329
      %v1750 = vpack.c.b16 %v1336, %v1330
      %v1751 = vpack.c.b16 %v1337, %v1331
      %v1752 = vpack.c.b16 %v1338, %v1332
      %v1753 = vpack.c.b16 %v1339, %v1333
      %v1754 = vpack.c.b16 %v1346, %v1340
      %v1755 = vpack.c.b16 %v1347, %v1341
      %v1756 = vpack.c.b16 %v1348, %v1342
      %v1757 = vpack.c.b16 %v1349, %v1343
      %v1758 = vpack.c.b16 %v1350, %v1344
      %v1759 = vpack.c.b16 %v1351, %v1345
      %v1760 = vpack.c.b16 %v1358, %v1352
      %v1761 = vpack.c.b16 %v1359, %v1353
      %v1762 = vpack.c.b16 %v1360, %v1354
      %v1763 = vpack.c.b16 %v1361, %v1355
      %v1764 = vpack.c.b16 %v1362, %v1356
      %v1765 = vpack.c.b16 %v1363, %v1357
      %v1766 = vpack.c.b16 %v1370, %v1364
      %v1767 = vpack.c.b16 %v1371, %v1365
      %v1768 = vpack.c.b16 %v1372, %v1366
      %v1769 = vpack.c.b16 %v1373, %v1367
      %v1770 = vpack.c.b16 %v1374, %v1368
      %v1771 = vpack.c.b16 %v1375, %v1369
      %v1772 = vpack.c.b16 %v1382, %v1376
      %v1773 = vpack.c.b16 %v1383, %v1377
      %v1774 = vpack.c.b16 %v1384, %v1378
      %v1775 = vpack.c.b16 %v1385, %v1379
      %v1776 = vpack.c.b16 %v1386, %v1380
      %v1777 = vpack.c.b16 %v1387, %v1381
      %v1778 = vpack.c.b16 %v1394, %v1388
      %v1779 = vpack.c.b16 %v1395, %v1389
      %v1780 = vpack.c.b16 %v1396, %v1390
      %v1781 = vpack.c.b16 %v1397, %v1391
      %v1782 = vpack.c.b16 %v1398, %v1392
      %v1783 = vpack.c.b16 %v1399, %v1393
      %v1784 = vpack.c.b16 %v1406, %v1400
      %v1785 = vpack.c.b16 %v1407, %v1401
      %v1786 = vpack.c.b16 %v1408, %v1402
      %v1787 = vpack.c.b16 %v1409, %v1403
      %v1788 = vpack.c.b16 %v1410, %v1404
      %v1789 = vpack.c.b16 %v1411, %v1405
      %v1790 = vpack.c.b16 %v1418, %v1412
      %v1791 = vpack.c.b16 %v1419, %v1413
      %v1792 = vpack.c.b16 %v1420, %v1414
      %v1793 = vpack.c.b16 %v1421, %v1415
      %v1794 = vpack.c.b16 %v1422, %v1416
      %v1795 = vpack.c.b16 %v1423, %v1417
      %v1796 = vpack.c.b16 %v1430, %v1424
      %v1797 = vpack.c.b16 %v1431, %v1425
      %v1798 = vpack.c.b16 %v1432, %v1426
      %v1799 = vpack.c.b16 %v1433, %v1427
      %v1800 = vpack.c.b16 %v1434, %v1428
      %v1801 = vpack.c.b16 %v1435, %v1429
      %v1802 = vpack.c.b16 %v1442, %v1436
      %v1803 = vpack.c.b16 %v1443, %v1437
      %v1804 = vpack.c.b16 %v1444, %v1438
      %v1805 = vpack.c.b16 %v1445, %v1439
      %v1806 = vpack.c.b16 %v1446, %v1440
      %v1807 = vpack.c.b16 %v1447, %v1441
      %v1808 = vpack.c.b16 %v1454, %v1448
      %v1809 = vpack.c.b16 %v1455, %v1449
      %v1810 = vpack.c.b16 %v1456, %v1450
      %v1811 = vpack.c.b16 %v1457, %v1451
      %v1812 = vpack.c.b16 %v1458, %v1452
      %v1813 = vpack.c.b16 %v1459, %v1453
      %v1814 = vpack.c.b16 %v1466, %v1460
      %v1815 = vpack.c.b16 %v1467, %v1461
      %v1816 = vpack.c.b16 %v1468, %v1462
      %v1817 = vpack.c.b16 %v1469, %v1463
      %v1818 = vpack.c.b16 %v1470, %v1464
      %v1819 = vpack.c.b16 %v1471, %v1465
      %v1820 = vpack.c.b16 %v1478, %v1472
      %v1821 = vpack.c.b16 %v1479, %v1473
      %v1822 = vpack.c.b16 %v1480, %v1474
      %v1823 = vpack.c.b16 %v1481, %v1475
      %v1824 = vpack.c.b16 %v1482, %v1476
      %v1825 = vpack.c.b16 %v1483, %v1477
      %v1826 = vpack.c.b16 %v1490, %v1484
      %v1827 = vpack.c.b16 %v1491, %v1485
      %v1828 = vpack.c.b16 %v1492, %v1486
      %v1829 = vpack.c.b16 %v1493, %v1487
      %v1830 = vpack.c.b16 %v1494, %v1488
      %v1831 = vpack.c.b16 %v1495, %v1489
      %v1832 = vpack.c.b16 %v1502, %v1496
      %v1833 = vpack.c.b16 %v1503, %v1497
      %v1834 = vpack.c.b16 %v1504, %v1498
      %v1835 = vpack.c.b16 %v1505, %v1499
      %v1836 = vpack.c.b16 %v1506, %v1500
      %v1837 = vpack.c.b16 %v1507, %v1501
      %v1838 = vpack.c.b16 %v1514, %v1508
      %v1839 = vpack.c.b16 %v1515, %v1509
      %v1840 = vpack.c.b16 %v1516, %v1510
      %v1841 = vpack.c.b16 %v1517, %v1511
      %v1842 = vpack.c.b16 %v1518, %v1512
      %v1843 = vpack.c.b16 %v1519, %v1513
      %v1844 = vpack.c.b16 %v1526, %v1520
      %v1845 = vpack.c.b16 %v1527, %v1521
      %v1846 = vpack.c.b16 %v1528, %v1522
      %v1847 = vpack.c.b16 %v1529, %v1523
      %v1848 = vpack.c.b16 %v1530, %v1524
      %v1849 = vpack.c.b16 %v1531, %v1525
      %v1850 = vpack.c.b16 %v1538, %v1532
      %v1851 = vpack.c.b16 %v1539, %v1533
      %v1852 = vpack.c.b16 %v1540, %v1534
      %v1853 = vpack.c.b16 %v1541, %v1535
      %v1854 = vpack.c.b16 %v1542, %v1536
      %v1855 = vpack.c.b16 %v1543, %v1537
      %v1856 = vpack.c.b16 %v1550, %v1544
      %v1857 = vpack.c.b16 %v1551, %v1545
      %v1858 = vpack.c.b16 %v1552, %v1546
      %v1859 = vpack.c.b16 %v1553, %v1547
      %v1860 = vpack.c.b16 %v1554, %v1548
      %v1861 = vpack.c.b16 %v1555, %v1549
      %v1862 = vpack.c.b16 %v1562, %v1556
      %v1863 = vpack.c.b16 %v1563, %v1557
      %v1864 = vpack.c.b16 %v1564, %v1558
      %v1865 = vpack.c.b16 %v1565, %v1559
      %v1866 = vpack.c.b16 %v1566, %v1560
      %v1867 = vpack.c.b16 %v1567, %v1561
      %v1868 = vpack.c.b16 %v1574, %v1568
      %v1869 = vpack.c.b16 %v1575, %v1569
      %v1870 = vpack.c.b16 %v1576, %v1570
      %v1871 = vpack.c.b16 %v1577, %v1571
      %v1872 = vpack.c.b16 %v1578, %v1572
      %v1873 = vpack.c.b16 %v1579, %v1573
      %v1874 = vpack.c.b16 %v1586, %v1580
      %v1875 = vpack.c.b16 %v1587, %v1581
      %v1876 = vpack.c.b16 %v1588, %v1582
      %v1877 = vpack.c.b16 %v1589, %v1583
      %v1878 = vpack.c.b16 %v1590, %v1584
      %v1879 = vpack.c.b16 %v1591, %v1585
      %2168 = vmatprep.subr.bf16.mxu0 %v1593
      %2169 = vmatpush1.bf16.msra.mxu0 %v1592
      %2170 = vmatprep.subr.bf16.mxu0 %v1599
      %2171 = vmatpush1.bf16.msra.mxu0 %v1598
      %2172 = vmatprep.subr.bf16.mxu0 %v1605
      %2173 = vmatpush1.bf16.msra.mxu0 %v1604
      %2174 = vmatprep.subr.bf16.mxu0 %v1611
      %2175 = vmatpush1.bf16.msra.mxu0 %v1610
      %2176 = vmatprep.subr.bf16.mxu0 %v1617
      %2177 = vmatpush1.bf16.msra.mxu0 %v1616
      %2178 = vmatprep.subr.bf16.mxu0 %v1623
      %2179 = vmatpush1.bf16.msra.mxu0 %v1622
      %2180 = vmatprep.subr.bf16.mxu0 %v1629
      %2181 = vmatpush1.bf16.msra.mxu0 %v1628
      %2182 = vmatprep.subr.bf16.mxu0 %v1635
      %2183 = vmatpush1.bf16.msra.mxu0 %v1634
      %2184 = vmatprep.subr.bf16.mxu0 %v1641
      %2185 = vmatpush1.bf16.msra.mxu0 %v1640
      %2186 = vmatprep.subr.bf16.mxu0 %v1647
      %2187 = vmatpush1.bf16.msra.mxu0 %v1646
      %2188 = vmatprep.subr.bf16.mxu0 %v1653
      %2189 = vmatpush1.bf16.msra.mxu0 %v1652
      %2190 = vmatprep.subr.bf16.mxu0 %v1659
      %2191 = vmatpush1.bf16.msra.mxu0 %v1658
      %2192 = vmatprep.subr.bf16.mxu0 %v1665
      %2193 = vmatpush1.bf16.msra.mxu0 %v1664
      %2194 = vmatprep.subr.bf16.mxu0 %v1671
      %2195 = vmatpush1.bf16.msra.mxu0 %v1670
      %2196 = vmatprep.subr.bf16.mxu0 %v1677
      %2197 = vmatpush1.bf16.msra.mxu0 %v1676
      %2198 = vmatprep.subr.bf16.mxu0 %v1683
      %2199 = vmatpush1.bf16.msra.mxu0 %v1682
      %2200 = vmatprep.mubr.bf16.mxu0 %v717
      %2201 = vmatmul.mubr.bf16.gmra.mrb[0].mxu0 %v716
      %v2202 = vpop.f32.mrb[0].mxu0
      %v2203 = vadd.f32 %v671, %v2202
      %v2204 = vpop.f32.mrb[0].mxu0
      %v2205 = vadd.f32 %v675, %v2204
      %v2206 = vpop.f32.mrb[0].mxu0
      %v2207 = vadd.f32 %v671, %v2206
      %v2208 = vpop.f32.mrb[0].mxu0
      %v2209 = vadd.f32 %v675, %v2208
      %2210 = vdwg.mxu0
      %2211 = vmatprep.subr.bf16.mxu0 %v1689
      %2212 = vmatpush1.bf16.msra.mxu0 %v1688
      %2213 = vmatprep.subr.bf16.mxu0 %v1695
      %2214 = vmatpush1.bf16.msra.mxu0 %v1694
      %2215 = vmatprep.subr.bf16.mxu0 %v1701
      %2216 = vmatpush1.bf16.msra.mxu0 %v1700
      %2217 = vmatprep.subr.bf16.mxu0 %v1707
      %2218 = vmatpush1.bf16.msra.mxu0 %v1706
      %2219 = vmatprep.subr.bf16.mxu0 %v1713
      %2220 = vmatpush1.bf16.msra.mxu0 %v1712
      %2221 = vmatprep.subr.bf16.mxu0 %v1719
      %2222 = vmatpush1.bf16.msra.mxu0 %v1718
      %2223 = vmatprep.subr.bf16.mxu0 %v1725
      %2224 = vmatpush1.bf16.msra.mxu0 %v1724
      %2225 = vmatprep.subr.bf16.mxu0 %v1731
      %2226 = vmatpush1.bf16.msra.mxu0 %v1730
      %2227 = vmatprep.subr.bf16.mxu0 %v1737
      %2228 = vmatpush1.bf16.msra.mxu0 %v1736
      %2229 = vmatprep.subr.bf16.mxu0 %v1743
      %2230 = vmatpush1.bf16.msra.mxu0 %v1742
      %2231 = vmatprep.subr.bf16.mxu0 %v1749
      %2232 = vmatpush1.bf16.msra.mxu0 %v1748
      %2233 = vmatprep.subr.bf16.mxu0 %v1755
      %2234 = vmatpush1.bf16.msra.mxu0 %v1754
      %2235 = vmatprep.subr.bf16.mxu0 %v1761
      %2236 = vmatpush1.bf16.msra.mxu0 %v1760
      %2237 = vmatprep.subr.bf16.mxu0 %v1767
      %2238 = vmatpush1.bf16.msra.mxu0 %v1766
      %2239 = vmatprep.subr.bf16.mxu0 %v1773
      %2240 = vmatpush1.bf16.msra.mxu0 %v1772
      %2241 = vmatprep.subr.bf16.mxu0 %v1779
      %2242 = vmatpush1.bf16.msra.mxu0 %v1778
      %2243 = vmatprep.mubr.bf16.mxu0 %v719
      %2244 = vmatmul.mubr.bf16.gmra.mrb[0].mxu0 %v718
      %v2245 = vpop.f32.mrb[0].mxu0
      %v2246 = vadd.f32 %v2203, %v2245
      %v2247 = vpop.f32.mrb[0].mxu0
      %v2248 = vadd.f32 %v2205, %v2247
      %v2249 = vpop.f32.mrb[0].mxu0
      %v2250 = vadd.f32 %v2207, %v2249
      %v2251 = vpop.f32.mrb[0].mxu0
      %v2252 = vadd.f32 %v2209, %v2251
      %2253 = vdwg.mxu0
      %2254 = vmatprep.subr.bf16.mxu0 %v1785
      %2255 = vmatpush1.bf16.msra.mxu0 %v1784
      %2256 = vmatprep.subr.bf16.mxu0 %v1791
      %2257 = vmatpush1.bf16.msra.mxu0 %v1790
      %2258 = vmatprep.subr.bf16.mxu0 %v1797
      %2259 = vmatpush1.bf16.msra.mxu0 %v1796
      %2260 = vmatprep.subr.bf16.mxu0 %v1803
      %2261 = vmatpush1.bf16.msra.mxu0 %v1802
      %2262 = vmatprep.subr.bf16.mxu0 %v1809
      %2263 = vmatpush1.bf16.msra.mxu0 %v1808
      %2264 = vmatprep.subr.bf16.mxu0 %v1815
      %2265 = vmatpush1.bf16.msra.mxu0 %v1814
      %2266 = vmatprep.subr.bf16.mxu0 %v1821
      %2267 = vmatpush1.bf16.msra.mxu0 %v1820
      %2268 = vmatprep.subr.bf16.mxu0 %v1827
      %2269 = vmatpush1.bf16.msra.mxu0 %v1826
      %2270 = vmatprep.subr.bf16.mxu0 %v1833
      %2271 = vmatpush1.bf16.msra.mxu0 %v1832
      %2272 = vmatprep.subr.bf16.mxu0 %v1839
      %2273 = vmatpush1.bf16.msra.mxu0 %v1838
      %2274 = vmatprep.subr.bf16.mxu0 %v1845
      %2275 = vmatpush1.bf16.msra.mxu0 %v1844
      %2276 = vmatprep.subr.bf16.mxu0 %v1851
      %2277 = vmatpush1.bf16.msra.mxu0 %v1850
      %2278 = vmatprep.subr.bf16.mxu0 %v1857
      %2279 = vmatpush1.bf16.msra.mxu0 %v1856
      %2280 = vmatprep.subr.bf16.mxu0 %v1863
      %2281 = vmatpush1.bf16.msra.mxu0 %v1862
      %2282 = vmatprep.subr.bf16.mxu0 %v1869
      %2283 = vmatpush1.bf16.msra.mxu0 %v1868
      %2284 = vmatprep.subr.bf16.mxu0 %v1875
      %2285 = vmatpush1.bf16.msra.mxu0 %v1874
      %2286 = vmatprep.mubr.bf16.mxu0 %v721
      %2287 = vmatmul.mubr.bf16.gmra.mrb[0].mxu0 %v720
      %v2288 = vpop.f32.mrb[0].mxu0
      %v2289 = vadd.f32 %v2246, %v2288
      %v2290 = vpop.f32.mrb[0].mxu0
      %v2291 = vadd.f32 %v2248, %v2290
      %v2292 = vpop.f32.mrb[0].mxu0
      %v2293 = vadd.f32 %v2250, %v2292
      %v2294 = vpop.f32.mrb[0].mxu0
      %v2295 = vadd.f32 %v2252, %v2294
      %2296 = vdwg.mxu0
      %2297 = vmatprep.subr.bf16.mxu0 %v1595
      %2298 = vmatpush1.bf16.msra.mxu0 %v1594
      %2299 = vmatprep.subr.bf16.mxu0 %v1601
      %2300 = vmatpush1.bf16.msra.mxu0 %v1600
      %2301 = vmatprep.subr.bf16.mxu0 %v1607
      %2302 = vmatpush1.bf16.msra.mxu0 %v1606
      %2303 = vmatprep.subr.bf16.mxu0 %v1613
      %2304 = vmatpush1.bf16.msra.mxu0 %v1612
      %2305 = vmatprep.subr.bf16.mxu0 %v1619
      %2306 = vmatpush1.bf16.msra.mxu0 %v1618
      %2307 = vmatprep.subr.bf16.mxu0 %v1625
      %2308 = vmatpush1.bf16.msra.mxu0 %v1624
      %2309 = vmatprep.subr.bf16.mxu0 %v1631
      %2310 = vmatpush1.bf16.msra.mxu0 %v1630
      %2311 = vmatprep.subr.bf16.mxu0 %v1637
      %2312 = vmatpush1.bf16.msra.mxu0 %v1636
      %2313 = vmatprep.subr.bf16.mxu0 %v1643
      %2314 = vmatpush1.bf16.msra.mxu0 %v1642
      %2315 = vmatprep.subr.bf16.mxu0 %v1649
      %2316 = vmatpush1.bf16.msra.mxu0 %v1648
      %2317 = vmatprep.subr.bf16.mxu0 %v1655
      %2318 = vmatpush1.bf16.msra.mxu0 %v1654
      %2319 = vmatprep.subr.bf16.mxu0 %v1661
      %2320 = vmatpush1.bf16.msra.mxu0 %v1660
      %2321 = vmatprep.subr.bf16.mxu0 %v1667
      %2322 = vmatpush1.bf16.msra.mxu0 %v1666
      %2323 = vmatprep.subr.bf16.mxu0 %v1673
      %2324 = vmatpush1.bf16.msra.mxu0 %v1672
      %2325 = vmatprep.subr.bf16.mxu0 %v1679
      %2326 = vmatpush1.bf16.msra.mxu0 %v1678
      %2327 = vmatprep.subr.bf16.mxu0 %v1685
      %2328 = vmatpush1.bf16.msra.mxu0 %v1684
      %2329 = vmatprep.mubr.bf16.mxu0 %v717
      %2330 = vmatmul.mubr.bf16.gmra.mrb[0].mxu0 %v716
      %v2331 = vpop.f32.mrb[0].mxu0
      %v2332 = vadd.f32 %v679, %v2331
      %v2333 = vpop.f32.mrb[0].mxu0
      %v2334 = vadd.f32 %v683, %v2333
      %v2335 = vpop.f32.mrb[0].mxu0
      %v2336 = vadd.f32 %v679, %v2335
      %v2337 = vpop.f32.mrb[0].mxu0
      %v2338 = vadd.f32 %v683, %v2337
      %2339 = vdwg.mxu0
      %2340 = vmatprep.subr.bf16.mxu0 %v1691
      %2341 = vmatpush1.bf16.msra.mxu0 %v1690
      %2342 = vmatprep.subr.bf16.mxu0 %v1697
      %2343 = vmatpush1.bf16.msra.mxu0 %v1696
      %2344 = vmatprep.subr.bf16.mxu0 %v1703
      %2345 = vmatpush1.bf16.msra.mxu0 %v1702
      %2346 = vmatprep.subr.bf16.mxu0 %v1709
      %2347 = vmatpush1.bf16.msra.mxu0 %v1708
      %2348 = vmatprep.subr.bf16.mxu0 %v1715
      %2349 = vmatpush1.bf16.msra.mxu0 %v1714
      %2350 = vmatprep.subr.bf16.mxu0 %v1721
      %2351 = vmatpush1.bf16.msra.mxu0 %v1720
      %2352 = vmatprep.subr.bf16.mxu0 %v1727
      %2353 = vmatpush1.bf16.msra.mxu0 %v1726
      %2354 = vmatprep.subr.bf16.mxu0 %v1733
      %2355 = vmatpush1.bf16.msra.mxu0 %v1732
      %2356 = vmatprep.subr.bf16.mxu0 %v1739
      %2357 = vmatpush1.bf16.msra.mxu0 %v1738
      %2358 = vmatprep.subr.bf16.mxu0 %v1745
      %2359 = vmatpush1.bf16.msra.mxu0 %v1744
      %2360 = vmatprep.subr.bf16.mxu0 %v1751
      %2361 = vmatpush1.bf16.msra.mxu0 %v1750
      %2362 = vmatprep.subr.bf16.mxu0 %v1757
      %2363 = vmatpush1.bf16.msra.mxu0 %v1756
      %2364 = vmatprep.subr.bf16.mxu0 %v1763
      %2365 = vmatpush1.bf16.msra.mxu0 %v1762
      %2366 = vmatprep.subr.bf16.mxu0 %v1769
      %2367 = vmatpush1.bf16.msra.mxu0 %v1768
      %2368 = vmatprep.subr.bf16.mxu0 %v1775
      %2369 = vmatpush1.bf16.msra.mxu0 %v1774
      %2370 = vmatprep.subr.bf16.mxu0 %v1781
      %2371 = vmatpush1.bf16.msra.mxu0 %v1780
      %2372 = vmatprep.mubr.bf16.mxu0 %v719
      %2373 = vmatmul.mubr.bf16.gmra.mrb[0].mxu0 %v718
      %v2374 = vpop.f32.mrb[0].mxu0
      %v2375 = vadd.f32 %v2332, %v2374
      %v2376 = vpop.f32.mrb[0].mxu0
      %v2377 = vadd.f32 %v2334, %v2376
      %v2378 = vpop.f32.mrb[0].mxu0
      %v2379 = vadd.f32 %v2336, %v2378
      %v2380 = vpop.f32.mrb[0].mxu0
      %v2381 = vadd.f32 %v2338, %v2380
      %2382 = vdwg.mxu0
      %2383 = vmatprep.subr.bf16.mxu0 %v1787
      %2384 = vmatpush1.bf16.msra.mxu0 %v1786
      %2385 = vmatprep.subr.bf16.mxu0 %v1793
      %2386 = vmatpush1.bf16.msra.mxu0 %v1792
      %2387 = vmatprep.subr.bf16.mxu0 %v1799
      %2388 = vmatpush1.bf16.msra.mxu0 %v1798
      %2389 = vmatprep.subr.bf16.mxu0 %v1805
      %2390 = vmatpush1.bf16.msra.mxu0 %v1804
      %2391 = vmatprep.subr.bf16.mxu0 %v1811
      %2392 = vmatpush1.bf16.msra.mxu0 %v1810
      %2393 = vmatprep.subr.bf16.mxu0 %v1817
      %2394 = vmatpush1.bf16.msra.mxu0 %v1816
      %2395 = vmatprep.subr.bf16.mxu0 %v1823
      %2396 = vmatpush1.bf16.msra.mxu0 %v1822
      %2397 = vmatprep.subr.bf16.mxu0 %v1829
      %2398 = vmatpush1.bf16.msra.mxu0 %v1828
      %2399 = vmatprep.subr.bf16.mxu0 %v1835
      %2400 = vmatpush1.bf16.msra.mxu0 %v1834
      %2401 = vmatprep.subr.bf16.mxu0 %v1841
      %2402 = vmatpush1.bf16.msra.mxu0 %v1840
      %2403 = vmatprep.subr.bf16.mxu0 %v1847
      %2404 = vmatpush1.bf16.msra.mxu0 %v1846
      %2405 = vmatprep.subr.bf16.mxu0 %v1853
      %2406 = vmatpush1.bf16.msra.mxu0 %v1852
      %2407 = vmatprep.subr.bf16.mxu0 %v1859
      %2408 = vmatpush1.bf16.msra.mxu0 %v1858
      %2409 = vmatprep.subr.bf16.mxu0 %v1865
      %2410 = vmatpush1.bf16.msra.mxu0 %v1864
      %2411 = vmatprep.subr.bf16.mxu0 %v1871
      %2412 = vmatpush1.bf16.msra.mxu0 %v1870
      %2413 = vmatprep.subr.bf16.mxu0 %v1877
      %2414 = vmatpush1.bf16.msra.mxu0 %v1876
      %2415 = vmatprep.mubr.bf16.mxu0 %v721
      %2416 = vmatmul.mubr.bf16.gmra.mrb[0].mxu0 %v720
      %v2417 = vpop.f32.mrb[0].mxu0
      %v2418 = vadd.f32 %v2375, %v2417
      %v2419 = vpop.f32.mrb[0].mxu0
      %v2420 = vadd.f32 %v2377, %v2419
      %v2421 = vpop.f32.mrb[0].mxu0
      %v2422 = vadd.f32 %v2379, %v2421
      %v2423 = vpop.f32.mrb[0].mxu0
      %v2424 = vadd.f32 %v2381, %v2423
      %2425 = vdwg.mxu0
      %2426 = vmatprep.subr.bf16.mxu0 %v1597
      %2427 = vmatpush1.bf16.msra.mxu0 %v1596
      %2428 = vmatprep.subr.bf16.mxu0 %v1603
      %2429 = vmatpush1.bf16.msra.mxu0 %v1602
      %2430 = vmatprep.subr.bf16.mxu0 %v1609
      %2431 = vmatpush1.bf16.msra.mxu0 %v1608
      %2432 = vmatprep.subr.bf16.mxu0 %v1615
      %2433 = vmatpush1.bf16.msra.mxu0 %v1614
      %2434 = vmatprep.subr.bf16.mxu0 %v1621
      %2435 = vmatpush1.bf16.msra.mxu0 %v1620
      %2436 = vmatprep.subr.bf16.mxu0 %v1627
      %2437 = vmatpush1.bf16.msra.mxu0 %v1626
      %2438 = vmatprep.subr.bf16.mxu0 %v1633
      %2439 = vmatpush1.bf16.msra.mxu0 %v1632
      %2440 = vmatprep.subr.bf16.mxu0 %v1639
      %2441 = vmatpush1.bf16.msra.mxu0 %v1638
      %2442 = vmatprep.subr.bf16.mxu0 %v1645
      %2443 = vmatpush1.bf16.msra.mxu0 %v1644
      %2444 = vmatprep.subr.bf16.mxu0 %v1651
      %2445 = vmatpush1.bf16.msra.mxu0 %v1650
      %2446 = vmatprep.subr.bf16.mxu0 %v1657
      %2447 = vmatpush1.bf16.msra.mxu0 %v1656
      %2448 = vmatprep.subr.bf16.mxu0 %v1663
      %2449 = vmatpush1.bf16.msra.mxu0 %v1662
      %2450 = vmatprep.subr.bf16.mxu0 %v1669
      %2451 = vmatpush1.bf16.msra.mxu0 %v1668
      %2452 = vmatprep.subr.bf16.mxu0 %v1675
      %2453 = vmatpush1.bf16.msra.mxu0 %v1674
      %2454 = vmatprep.subr.bf16.mxu0 %v1681
      %2455 = vmatpush1.bf16.msra.mxu0 %v1680
      %2456 = vmatprep.subr.bf16.mxu0 %v1687
      %2457 = vmatpush1.bf16.msra.mxu0 %v1686
      %2458 = vmatprep.mubr.bf16.mxu0 %v717
      %2459 = vmatmul.mubr.bf16.gmra.mrb[0].mxu0 %v716
      %v2460 = vpop.f32.mrb[0].mxu0
      %v2461 = vadd.f32 %v687, %v2460
      %v2462 = vpop.f32.mrb[0].mxu0
      %v2463 = vadd.f32 %v691, %v2462
      %v2464 = vpop.f32.mrb[0].mxu0
      %v2465 = vadd.f32 %v687, %v2464
      %v2466 = vpop.f32.mrb[0].mxu0
      %v2467 = vadd.f32 %v691, %v2466
      %2468 = vdwg.mxu0
      %2469 = vmatprep.subr.bf16.mxu0 %v1693
      %2470 = vmatpush1.bf16.msra.mxu0 %v1692
      %2471 = vmatprep.subr.bf16.mxu0 %v1699
      %2472 = vmatpush1.bf16.msra.mxu0 %v1698
      %2473 = vmatprep.subr.bf16.mxu0 %v1705
      %2474 = vmatpush1.bf16.msra.mxu0 %v1704
      %2475 = vmatprep.subr.bf16.mxu0 %v1711
      %2476 = vmatpush1.bf16.msra.mxu0 %v1710
      %2477 = vmatprep.subr.bf16.mxu0 %v1717
      %2478 = vmatpush1.bf16.msra.mxu0 %v1716
      %2479 = vmatprep.subr.bf16.mxu0 %v1723
      %2480 = vmatpush1.bf16.msra.mxu0 %v1722
      %2481 = vmatprep.subr.bf16.mxu0 %v1729
      %2482 = vmatpush1.bf16.msra.mxu0 %v1728
      %2483 = vmatprep.subr.bf16.mxu0 %v1735
      %2484 = vmatpush1.bf16.msra.mxu0 %v1734
      %2485 = vmatprep.subr.bf16.mxu0 %v1741
      %2486 = vmatpush1.bf16.msra.mxu0 %v1740
      %2487 = vmatprep.subr.bf16.mxu0 %v1747
      %2488 = vmatpush1.bf16.msra.mxu0 %v1746
      %2489 = vmatprep.subr.bf16.mxu0 %v1753
      %2490 = vmatpush1.bf16.msra.mxu0 %v1752
      %2491 = vmatprep.subr.bf16.mxu0 %v1759
      %2492 = vmatpush1.bf16.msra.mxu0 %v1758
      %2493 = vmatprep.subr.bf16.mxu0 %v1765
      %2494 = vmatpush1.bf16.msra.mxu0 %v1764
      %2495 = vmatprep.subr.bf16.mxu0 %v1771
      %2496 = vmatpush1.bf16.msra.mxu0 %v1770
      %2497 = vmatprep.subr.bf16.mxu0 %v1777
      %2498 = vmatpush1.bf16.msra.mxu0 %v1776
      %2499 = vmatprep.subr.bf16.mxu0 %v1783
      %2500 = vmatpush1.bf16.msra.mxu0 %v1782
      %2501 = vmatprep.mubr.bf16.mxu0 %v719
      %2502 = vmatmul.mubr.bf16.gmra.mrb[0].mxu0 %v718
      %v2503 = vpop.f32.mrb[0].mxu0
      %v2504 = vadd.f32 %v2461, %v2503
      %v2505 = vpop.f32.mrb[0].mxu0
      %v2506 = vadd.f32 %v2463, %v2505
      %v2507 = vpop.f32.mrb[0].mxu0
      %v2508 = vadd.f32 %v2465, %v2507
      %v2509 = vpop.f32.mrb[0].mxu0
      %v2510 = vadd.f32 %v2467, %v2509
      %2511 = vdwg.mxu0
      %2512 = vmatprep.subr.bf16.mxu0 %v1789
      %2513 = vmatpush1.bf16.msra.mxu0 %v1788
      %2514 = vmatprep.subr.bf16.mxu0 %v1795
      %2515 = vmatpush1.bf16.msra.mxu0 %v1794
      %2516 = vmatprep.subr.bf16.mxu0 %v1801
      %2517 = vmatpush1.bf16.msra.mxu0 %v1800
      %2518 = vmatprep.subr.bf16.mxu0 %v1807
      %2519 = vmatpush1.bf16.msra.mxu0 %v1806
      %2520 = vmatprep.subr.bf16.mxu0 %v1813
      %2521 = vmatpush1.bf16.msra.mxu0 %v1812
      %2522 = vmatprep.subr.bf16.mxu0 %v1819
      %2523 = vmatpush1.bf16.msra.mxu0 %v1818
      %2524 = vmatprep.subr.bf16.mxu0 %v1825
      %2525 = vmatpush1.bf16.msra.mxu0 %v1824
      %2526 = vmatprep.subr.bf16.mxu0 %v1831
      %2527 = vmatpush1.bf16.msra.mxu0 %v1830
      %2528 = vmatprep.subr.bf16.mxu0 %v1837
      %2529 = vmatpush1.bf16.msra.mxu0 %v1836
      %2530 = vmatprep.subr.bf16.mxu0 %v1843
      %2531 = vmatpush1.bf16.msra.mxu0 %v1842
      %2532 = vmatprep.subr.bf16.mxu0 %v1849
      %2533 = vmatpush1.bf16.msra.mxu0 %v1848
      %2534 = vmatprep.subr.bf16.mxu0 %v1855
      %2535 = vmatpush1.bf16.msra.mxu0 %v1854
      %2536 = vmatprep.subr.bf16.mxu0 %v1861
      %2537 = vmatpush1.bf16.msra.mxu0 %v1860
      %2538 = vmatprep.subr.bf16.mxu0 %v1867
      %2539 = vmatpush1.bf16.msra.mxu0 %v1866
      %2540 = vmatprep.subr.bf16.mxu0 %v1873
      %2541 = vmatpush1.bf16.msra.mxu0 %v1872
      %2542 = vmatprep.subr.bf16.mxu0 %v1879
      %2543 = vmatpush1.bf16.msra.mxu0 %v1878
      %2544 = vmatprep.mubr.bf16.mxu0 %v721
      %2545 = vmatmul.mubr.bf16.gmra.mrb[0].mxu0 %v720
      %v2546 = vpop.f32.mrb[0].mxu0
      %v2547 = vadd.f32 %v2504, %v2546
      %v2548 = vpop.f32.mrb[0].mxu0
      %v2549 = vadd.f32 %v2506, %v2548
      %v2550 = vpop.f32.mrb[0].mxu0
      %v2551 = vadd.f32 %v2508, %v2550
      %v2552 = vpop.f32.mrb[0].mxu0
      %v2553 = vadd.f32 %v2510, %v2552
      %2554 = vdwg.mxu0
      %v2555 = vld [vmem:[%s2] sm:$0xff]
      %v2556 = vld [vmem:[%s2 + $0x8] sm:$0xff]
      %v2557 = vld [vmem:[%s2 + $0x10] sm:$0xff]
      %v2558 = vld [vmem:[%s2 + $0x18] sm:$0xff]
      %v2559 = vld [vmem:[%s2 + $0x20] sm:$0xff]
      %v2560 = vld [vmem:[%s2 + $0x28] sm:$0xff]
      %v2561 = vld [vmem:[%s2 + $0x30] sm:$0xff]
      %v2562 = vld [vmem:[%s2 + $0x38] sm:$0xff]
      %v2563 = vld [vmem:[%s2 + $0x40] sm:$0xff]
      %v2564 = vld [vmem:[%s2 + $0x48] sm:$0xff]
      %v2565 = vld [vmem:[%s2 + $0x50] sm:$0xff]
      %v2566 = vld [vmem:[%s2 + $0x58] sm:$0xff]
      %v2567 = vld [vmem:[%s2 + $0x60] sm:$0xff]
      %v2568 = vld [vmem:[%s2 + $0x68] sm:$0xff]
      %v2569 = vld [vmem:[%s2 + $0x70] sm:$0xff]
      %v2570 = vld [vmem:[%s2 + $0x78] sm:$0xff]
      %v2571 = vld [vmem:[%s2 + $0x80] sm:$0xff]
      %v2572 = vld [vmem:[%s2 + $0x88] sm:$0xff]
      %v2573 = vld [vmem:[%s2 + $0x90] sm:$0xff]
      %v2574 = vld [vmem:[%s2 + $0x98] sm:$0xff]
      %v2575 = vld [vmem:[%s2 + $0xa0] sm:$0xff]
      %v2576 = vld [vmem:[%s2 + $0xa8] sm:$0xff]
      %v2577 = vld [vmem:[%s2 + $0xb0] sm:$0xff]
      %v2578 = vld [vmem:[%s2 + $0xb8] sm:$0xff]
      %v2579 = vld [vmem:[%s2 + $0xc0] sm:$0xff]
      %v2580 = vld [vmem:[%s2 + $0xc8] sm:$0xff]
      %v2581 = vld [vmem:[%s2 + $0xd0] sm:$0xff]
      %v2582 = vld [vmem:[%s2 + $0xd8] sm:$0xff]
      %v2583 = vld [vmem:[%s2 + $0xe0] sm:$0xff]
      %v2584 = vld [vmem:[%s2 + $0xe8] sm:$0xff]
      %v2585 = vld [vmem:[%s2 + $0xf0] sm:$0xff]
      %v2586 = vld [vmem:[%s2 + $0xf8] sm:$0xff]
      %v2587 = vld [vmem:[%s2 + $0x100] sm:$0xff]
      %v2588 = vld [vmem:[%s2 + $0x108] sm:$0xff]
      %v2589 = vld [vmem:[%s2 + $0x110] sm:$0xff]
      %v2590 = vld [vmem:[%s2 + $0x118] sm:$0xff]
      %v2591 = vld [vmem:[%s2 + $0x120] sm:$0xff]
      %v2592 = vld [vmem:[%s2 + $0x128] sm:$0xff]
      %v2593 = vld [vmem:[%s2 + $0x130] sm:$0xff]
      %v2594 = vld [vmem:[%s2 + $0x138] sm:$0xff]
      %v2595 = vld [vmem:[%s2 + $0x140] sm:$0xff]
      %v2596 = vld [vmem:[%s2 + $0x148] sm:$0xff]
      %v2597 = vld [vmem:[%s2 + $0x150] sm:$0xff]
      %v2598 = vld [vmem:[%s2 + $0x158] sm:$0xff]
      %v2599 = vld [vmem:[%s2 + $0x160] sm:$0xff]
      %v2600 = vld [vmem:[%s2 + $0x168] sm:$0xff]
      %v2601 = vld [vmem:[%s2 + $0x170] sm:$0xff]
      %v2602 = vld [vmem:[%s2 + $0x178] sm:$0xff]
      %v2603 = vld [vmem:[%s2 + $0x180] sm:$0xff]
      %v2604 = vld [vmem:[%s2 + $0x188] sm:$0xff]
      %v2605 = vld [vmem:[%s2 + $0x190] sm:$0xff]
      %v2606 = vld [vmem:[%s2 + $0x198] sm:$0xff]
      %v2607 = vld [vmem:[%s2 + $0x1a0] sm:$0xff]
      %v2608 = vld [vmem:[%s2 + $0x1a8] sm:$0xff]
      %v2609 = vld [vmem:[%s2 + $0x1b0] sm:$0xff]
      %v2610 = vld [vmem:[%s2 + $0x1b8] sm:$0xff]
      %v2611 = vld [vmem:[%s2 + $0x1c0] sm:$0xff]
      %v2612 = vld [vmem:[%s2 + $0x1c8] sm:$0xff]
      %v2613 = vld [vmem:[%s2 + $0x1d0] sm:$0xff]
      %v2614 = vld [vmem:[%s2 + $0x1d8] sm:$0xff]
      %v2615 = vld [vmem:[%s2 + $0x1e0] sm:$0xff]
      %v2616 = vld [vmem:[%s2 + $0x1e8] sm:$0xff]
      %v2617 = vld [vmem:[%s2 + $0x1f0] sm:$0xff]
      %v2618 = vld [vmem:[%s2 + $0x1f8] sm:$0xff]
      %v2619 = vld [vmem:[%s2 + $0x200] sm:$0xff]
      %v2620 = vld [vmem:[%s2 + $0x208] sm:$0xff]
      %v2621 = vld [vmem:[%s2 + $0x210] sm:$0xff]
      %v2622 = vld [vmem:[%s2 + $0x218] sm:$0xff]
      %v2623 = vld [vmem:[%s2 + $0x220] sm:$0xff]
      %v2624 = vld [vmem:[%s2 + $0x228] sm:$0xff]
      %v2625 = vld [vmem:[%s2 + $0x230] sm:$0xff]
      %v2626 = vld [vmem:[%s2 + $0x238] sm:$0xff]
      %v2627 = vld [vmem:[%s2 + $0x240] sm:$0xff]
      %v2628 = vld [vmem:[%s2 + $0x248] sm:$0xff]
      %v2629 = vld [vmem:[%s2 + $0x250] sm:$0xff]
      %v2630 = vld [vmem:[%s2 + $0x258] sm:$0xff]
      %v2631 = vld [vmem:[%s2 + $0x260] sm:$0xff]
      %v2632 = vld [vmem:[%s2 + $0x268] sm:$0xff]
      %v2633 = vld [vmem:[%s2 + $0x270] sm:$0xff]
      %v2634 = vld [vmem:[%s2 + $0x278] sm:$0xff]
      %v2635 = vld [vmem:[%s2 + $0x280] sm:$0xff]
      %v2636 = vld [vmem:[%s2 + $0x288] sm:$0xff]
      %v2637 = vld [vmem:[%s2 + $0x290] sm:$0xff]
      %v2638 = vld [vmem:[%s2 + $0x298] sm:$0xff]
      %v2639 = vld [vmem:[%s2 + $0x2a0] sm:$0xff]
      %v2640 = vld [vmem:[%s2 + $0x2a8] sm:$0xff]
      %v2641 = vld [vmem:[%s2 + $0x2b0] sm:$0xff]
      %v2642 = vld [vmem:[%s2 + $0x2b8] sm:$0xff]
      %v2643 = vld [vmem:[%s2 + $0x2c0] sm:$0xff]
      %v2644 = vld [vmem:[%s2 + $0x2c8] sm:$0xff]
      %v2645 = vld [vmem:[%s2 + $0x2d0] sm:$0xff]
      %v2646 = vld [vmem:[%s2 + $0x2d8] sm:$0xff]
      %v2647 = vld [vmem:[%s2 + $0x2e0] sm:$0xff]
      %v2648 = vld [vmem:[%s2 + $0x2e8] sm:$0xff]
      %v2649 = vld [vmem:[%s2 + $0x2f0] sm:$0xff]
      %v2650 = vld [vmem:[%s2 + $0x2f8] sm:$0xff]
      %v2651 = vld [vmem:[%s2 + $0x300] sm:$0xff]
      %v2652 = vld [vmem:[%s2 + $0x308] sm:$0xff]
      %v2653 = vld [vmem:[%s2 + $0x310] sm:$0xff]
      %v2654 = vld [vmem:[%s2 + $0x318] sm:$0xff]
      %v2655 = vld [vmem:[%s2 + $0x320] sm:$0xff]
      %v2656 = vld [vmem:[%s2 + $0x328] sm:$0xff]
      %v2657 = vld [vmem:[%s2 + $0x330] sm:$0xff]
      %v2658 = vld [vmem:[%s2 + $0x338] sm:$0xff]
      %v2659 = vld [vmem:[%s2 + $0x340] sm:$0xff]
      %v2660 = vld [vmem:[%s2 + $0x348] sm:$0xff]
      %v2661 = vld [vmem:[%s2 + $0x350] sm:$0xff]
      %v2662 = vld [vmem:[%s2 + $0x358] sm:$0xff]
      %v2663 = vld [vmem:[%s2 + $0x360] sm:$0xff]
      %v2664 = vld [vmem:[%s2 + $0x368] sm:$0xff]
      %v2665 = vld [vmem:[%s2 + $0x370] sm:$0xff]
      %v2666 = vld [vmem:[%s2 + $0x378] sm:$0xff]
      %v2667 = vld [vmem:[%s2 + $0x380] sm:$0xff]
      %v2668 = vld [vmem:[%s2 + $0x388] sm:$0xff]
      %v2669 = vld [vmem:[%s2 + $0x390] sm:$0xff]
      %v2670 = vld [vmem:[%s2 + $0x398] sm:$0xff]
      %v2671 = vld [vmem:[%s2 + $0x3a0] sm:$0xff]
      %v2672 = vld [vmem:[%s2 + $0x3a8] sm:$0xff]
      %v2673 = vld [vmem:[%s2 + $0x3b0] sm:$0xff]
      %v2674 = vld [vmem:[%s2 + $0x3b8] sm:$0xff]
      %v2675 = vld [vmem:[%s2 + $0x3c0] sm:$0xff]
      %v2676 = vld [vmem:[%s2 + $0x3c8] sm:$0xff]
      %v2677 = vld [vmem:[%s2 + $0x3d0] sm:$0xff]
      %v2678 = vld [vmem:[%s2 + $0x3d8] sm:$0xff]
      %v2679 = vld [vmem:[%s2 + $0x3e0] sm:$0xff]
      %v2680 = vld [vmem:[%s2 + $0x3e8] sm:$0xff]
      %v2681 = vld [vmem:[%s2 + $0x3f0] sm:$0xff]
      %v2682 = vld [vmem:[%s2 + $0x3f8] sm:$0xff]
      %v2683 = vld [vmem:[%s2 + $0x400] sm:$0xff]
      %v2684 = vld [vmem:[%s2 + $0x408] sm:$0xff]
      %v2685 = vld [vmem:[%s2 + $0x410] sm:$0xff]
      %v2686 = vld [vmem:[%s2 + $0x418] sm:$0xff]
      %v2687 = vld [vmem:[%s2 + $0x420] sm:$0xff]
      %v2688 = vld [vmem:[%s2 + $0x428] sm:$0xff]
      %v2689 = vld [vmem:[%s2 + $0x430] sm:$0xff]
      %v2690 = vld [vmem:[%s2 + $0x438] sm:$0xff]
      %v2691 = vld [vmem:[%s2 + $0x440] sm:$0xff]
      %v2692 = vld [vmem:[%s2 + $0x448] sm:$0xff]
      %v2693 = vld [vmem:[%s2 + $0x450] sm:$0xff]
      %v2694 = vld [vmem:[%s2 + $0x458] sm:$0xff]
      %v2695 = vld [vmem:[%s2 + $0x460] sm:$0xff]
      %v2696 = vld [vmem:[%s2 + $0x468] sm:$0xff]
      %v2697 = vld [vmem:[%s2 + $0x470] sm:$0xff]
      %v2698 = vld [vmem:[%s2 + $0x478] sm:$0xff]
      %v2699 = vld [vmem:[%s2 + $0x480] sm:$0xff]
      %v2700 = vld [vmem:[%s2 + $0x488] sm:$0xff]
      %v2701 = vld [vmem:[%s2 + $0x490] sm:$0xff]
      %v2702 = vld [vmem:[%s2 + $0x498] sm:$0xff]
      %v2703 = vld [vmem:[%s2 + $0x4a0] sm:$0xff]
      %v2704 = vld [vmem:[%s2 + $0x4a8] sm:$0xff]
      %v2705 = vld [vmem:[%s2 + $0x4b0] sm:$0xff]
      %v2706 = vld [vmem:[%s2 + $0x4b8] sm:$0xff]
      %v2707 = vld [vmem:[%s2 + $0x4c0] sm:$0xff]
      %v2708 = vld [vmem:[%s2 + $0x4c8] sm:$0xff]
      %v2709 = vld [vmem:[%s2 + $0x4d0] sm:$0xff]
      %v2710 = vld [vmem:[%s2 + $0x4d8] sm:$0xff]
      %v2711 = vld [vmem:[%s2 + $0x4e0] sm:$0xff]
      %v2712 = vld [vmem:[%s2 + $0x4e8] sm:$0xff]
      %v2713 = vld [vmem:[%s2 + $0x4f0] sm:$0xff]
      %v2714 = vld [vmem:[%s2 + $0x4f8] sm:$0xff]
      %v2715 = vld [vmem:[%s2 + $0x500] sm:$0xff]
      %v2716 = vld [vmem:[%s2 + $0x508] sm:$0xff]
      %v2717 = vld [vmem:[%s2 + $0x510] sm:$0xff]
      %v2718 = vld [vmem:[%s2 + $0x518] sm:$0xff]
      %v2719 = vld [vmem:[%s2 + $0x520] sm:$0xff]
      %v2720 = vld [vmem:[%s2 + $0x528] sm:$0xff]
      %v2721 = vld [vmem:[%s2 + $0x530] sm:$0xff]
      %v2722 = vld [vmem:[%s2 + $0x538] sm:$0xff]
      %v2723 = vld [vmem:[%s2 + $0x540] sm:$0xff]
      %v2724 = vld [vmem:[%s2 + $0x548] sm:$0xff]
      %v2725 = vld [vmem:[%s2 + $0x550] sm:$0xff]
      %v2726 = vld [vmem:[%s2 + $0x558] sm:$0xff]
      %v2727 = vld [vmem:[%s2 + $0x560] sm:$0xff]
      %v2728 = vld [vmem:[%s2 + $0x568] sm:$0xff]
      %v2729 = vld [vmem:[%s2 + $0x570] sm:$0xff]
      %v2730 = vld [vmem:[%s2 + $0x578] sm:$0xff]
      %v2731 = vld [vmem:[%s2 + $0x580] sm:$0xff]
      %v2732 = vld [vmem:[%s2 + $0x588] sm:$0xff]
      %v2733 = vld [vmem:[%s2 + $0x590] sm:$0xff]
      %v2734 = vld [vmem:[%s2 + $0x598] sm:$0xff]
      %v2735 = vld [vmem:[%s2 + $0x5a0] sm:$0xff]
      %v2736 = vld [vmem:[%s2 + $0x5a8] sm:$0xff]
      %v2737 = vld [vmem:[%s2 + $0x5b0] sm:$0xff]
      %v2738 = vld [vmem:[%s2 + $0x5b8] sm:$0xff]
      %v2739 = vld [vmem:[%s2 + $0x5c0] sm:$0xff]
      %v2740 = vld [vmem:[%s2 + $0x5c8] sm:$0xff]
      %v2741 = vld [vmem:[%s2 + $0x5d0] sm:$0xff]
      %v2742 = vld [vmem:[%s2 + $0x5d8] sm:$0xff]
      %v2743 = vld [vmem:[%s2 + $0x5e0] sm:$0xff]
      %v2744 = vld [vmem:[%s2 + $0x5e8] sm:$0xff]
      %v2745 = vld [vmem:[%s2 + $0x5f0] sm:$0xff]
      %v2746 = vld [vmem:[%s2 + $0x5f8] sm:$0xff]
      %v2747 = vld [vmem:[%s2 + $0x600] sm:$0xff]
      %v2748 = vld [vmem:[%s2 + $0x608] sm:$0xff]
      %v2749 = vld [vmem:[%s2 + $0x610] sm:$0xff]
      %v2750 = vld [vmem:[%s2 + $0x618] sm:$0xff]
      %v2751 = vld [vmem:[%s2 + $0x620] sm:$0xff]
      %v2752 = vld [vmem:[%s2 + $0x628] sm:$0xff]
      %v2753 = vld [vmem:[%s2 + $0x630] sm:$0xff]
      %v2754 = vld [vmem:[%s2 + $0x638] sm:$0xff]
      %v2755 = vld [vmem:[%s2 + $0x640] sm:$0xff]
      %v2756 = vld [vmem:[%s2 + $0x648] sm:$0xff]
      %v2757 = vld [vmem:[%s2 + $0x650] sm:$0xff]
      %v2758 = vld [vmem:[%s2 + $0x658] sm:$0xff]
      %v2759 = vld [vmem:[%s2 + $0x660] sm:$0xff]
      %v2760 = vld [vmem:[%s2 + $0x668] sm:$0xff]
      %v2761 = vld [vmem:[%s2 + $0x670] sm:$0xff]
      %v2762 = vld [vmem:[%s2 + $0x678] sm:$0xff]
      %v2763 = vld [vmem:[%s2 + $0x680] sm:$0xff]
      %v2764 = vld [vmem:[%s2 + $0x688] sm:$0xff]
      %v2765 = vld [vmem:[%s2 + $0x690] sm:$0xff]
      %v2766 = vld [vmem:[%s2 + $0x698] sm:$0xff]
      %v2767 = vld [vmem:[%s2 + $0x6a0] sm:$0xff]
      %v2768 = vld [vmem:[%s2 + $0x6a8] sm:$0xff]
      %v2769 = vld [vmem:[%s2 + $0x6b0] sm:$0xff]
      %v2770 = vld [vmem:[%s2 + $0x6b8] sm:$0xff]
      %v2771 = vld [vmem:[%s2 + $0x6c0] sm:$0xff]
      %v2772 = vld [vmem:[%s2 + $0x6c8] sm:$0xff]
      %v2773 = vld [vmem:[%s2 + $0x6d0] sm:$0xff]
      %v2774 = vld [vmem:[%s2 + $0x6d8] sm:$0xff]
      %v2775 = vld [vmem:[%s2 + $0x6e0] sm:$0xff]
      %v2776 = vld [vmem:[%s2 + $0x6e8] sm:$0xff]
      %v2777 = vld [vmem:[%s2 + $0x6f0] sm:$0xff]
      %v2778 = vld [vmem:[%s2 + $0x6f8] sm:$0xff]
      %v2779 = vld [vmem:[%s2 + $0x700] sm:$0xff]
      %v2780 = vld [vmem:[%s2 + $0x708] sm:$0xff]
      %v2781 = vld [vmem:[%s2 + $0x710] sm:$0xff]
      %v2782 = vld [vmem:[%s2 + $0x718] sm:$0xff]
      %v2783 = vld [vmem:[%s2 + $0x720] sm:$0xff]
      %v2784 = vld [vmem:[%s2 + $0x728] sm:$0xff]
      %v2785 = vld [vmem:[%s2 + $0x730] sm:$0xff]
      %v2786 = vld [vmem:[%s2 + $0x738] sm:$0xff]
      %v2787 = vld [vmem:[%s2 + $0x740] sm:$0xff]
      %v2788 = vld [vmem:[%s2 + $0x748] sm:$0xff]
      %v2789 = vld [vmem:[%s2 + $0x750] sm:$0xff]
      %v2790 = vld [vmem:[%s2 + $0x758] sm:$0xff]
      %v2791 = vld [vmem:[%s2 + $0x760] sm:$0xff]
      %v2792 = vld [vmem:[%s2 + $0x768] sm:$0xff]
      %v2793 = vld [vmem:[%s2 + $0x770] sm:$0xff]
      %v2794 = vld [vmem:[%s2 + $0x778] sm:$0xff]
      %v2795 = vld [vmem:[%s2 + $0x780] sm:$0xff]
      %v2796 = vld [vmem:[%s2 + $0x788] sm:$0xff]
      %v2797 = vld [vmem:[%s2 + $0x790] sm:$0xff]
      %v2798 = vld [vmem:[%s2 + $0x798] sm:$0xff]
      %v2799 = vld [vmem:[%s2 + $0x7a0] sm:$0xff]
      %v2800 = vld [vmem:[%s2 + $0x7a8] sm:$0xff]
      %v2801 = vld [vmem:[%s2 + $0x7b0] sm:$0xff]
      %v2802 = vld [vmem:[%s2 + $0x7b8] sm:$0xff]
      %v2803 = vld [vmem:[%s2 + $0x7c0] sm:$0xff]
      %v2804 = vld [vmem:[%s2 + $0x7c8] sm:$0xff]
      %v2805 = vld [vmem:[%s2 + $0x7d0] sm:$0xff]
      %v2806 = vld [vmem:[%s2 + $0x7d8] sm:$0xff]
      %v2807 = vld [vmem:[%s2 + $0x7e0] sm:$0xff]
      %v2808 = vld [vmem:[%s2 + $0x7e8] sm:$0xff]
      %v2809 = vld [vmem:[%s2 + $0x7f0] sm:$0xff]
      %v2810 = vld [vmem:[%s2 + $0x7f8] sm:$0xff]
      %v2811 = vld [vmem:[%s2 + $0x800] sm:$0xff]
      %v2812 = vld [vmem:[%s2 + $0x808] sm:$0xff]
      %v2813 = vld [vmem:[%s2 + $0x810] sm:$0xff]
      %v2814 = vld [vmem:[%s2 + $0x818] sm:$0xff]
      %v2815 = vld [vmem:[%s2 + $0x820] sm:$0xff]
      %v2816 = vld [vmem:[%s2 + $0x828] sm:$0xff]
      %v2817 = vld [vmem:[%s2 + $0x830] sm:$0xff]
      %v2818 = vld [vmem:[%s2 + $0x838] sm:$0xff]
      %v2819 = vld [vmem:[%s2 + $0x840] sm:$0xff]
      %v2820 = vld [vmem:[%s2 + $0x848] sm:$0xff]
      %v2821 = vld [vmem:[%s2 + $0x850] sm:$0xff]
      %v2822 = vld [vmem:[%s2 + $0x858] sm:$0xff]
      %v2823 = vld [vmem:[%s2 + $0x860] sm:$0xff]
      %v2824 = vld [vmem:[%s2 + $0x868] sm:$0xff]
      %v2825 = vld [vmem:[%s2 + $0x870] sm:$0xff]
      %v2826 = vld [vmem:[%s2 + $0x878] sm:$0xff]
      %v2827 = vld [vmem:[%s2 + $0x880] sm:$0xff]
      %v2828 = vld [vmem:[%s2 + $0x888] sm:$0xff]
      %v2829 = vld [vmem:[%s2 + $0x890] sm:$0xff]
      %v2830 = vld [vmem:[%s2 + $0x898] sm:$0xff]
      %v2831 = vld [vmem:[%s2 + $0x8a0] sm:$0xff]
      %v2832 = vld [vmem:[%s2 + $0x8a8] sm:$0xff]
      %v2833 = vld [vmem:[%s2 + $0x8b0] sm:$0xff]
      %v2834 = vld [vmem:[%s2 + $0x8b8] sm:$0xff]
      %v2835 = vld [vmem:[%s2 + $0x8c0] sm:$0xff]
      %v2836 = vld [vmem:[%s2 + $0x8c8] sm:$0xff]
      %v2837 = vld [vmem:[%s2 + $0x8d0] sm:$0xff]
      %v2838 = vld [vmem:[%s2 + $0x8d8] sm:$0xff]
      %v2839 = vld [vmem:[%s2 + $0x8e0] sm:$0xff]
      %v2840 = vld [vmem:[%s2 + $0x8e8] sm:$0xff]
      %v2841 = vld [vmem:[%s2 + $0x8f0] sm:$0xff]
      %v2842 = vld [vmem:[%s2 + $0x8f8] sm:$0xff]
      %v2843 = vld [vmem:[%s5] sm:$0x3f]
      %v2845 = vlaneseq
      %v2846 = vshrl.u32 %v2845, 7
      %v2847 = vsub.s32 0, %v2846
      %v2848 = vrot.slane %v2843, %v2847
      %v2849 = vlaneseq
      %v2850 = vshrl.u32 %v2849, 7
      %v2851 = vsub.s32 1, %v2850
      %v2852 = vrot.slane %v2843, %v2851
      %v2853 = vlaneseq
      %v2854 = vshrl.u32 %v2853, 7
      %v2855 = vsub.s32 2, %v2854
      %v2856 = vrot.slane %v2843, %v2855
      %v2857 = vlaneseq
      %v2858 = vshrl.u32 %v2857, 7
      %v2859 = vsub.s32 3, %v2858
      %v2860 = vrot.slane %v2843, %v2859
      %v2861 = vlaneseq
      %v2862 = vshrl.u32 %v2861, 7
      %v2863 = vsub.s32 4, %v2862
      %v2864 = vrot.slane %v2843, %v2863
      %v2865 = vlaneseq
      %v2866 = vshrl.u32 %v2865, 7
      %v2867 = vsub.s32 5, %v2866
      %v2868 = vrot.slane %v2843, %v2867
      %v3163 = vunpack.c.l.b16 %v2555
      %v3164 = vunpack.c.h.b16 %v2555
      %v3165 = vunpack.c.l.b16 %v2556
      %v3166 = vunpack.c.h.b16 %v2556
      %v3167 = vunpack.c.l.b16 %v2557
      %v3168 = vunpack.c.h.b16 %v2557
      %v3169 = vunpack.c.l.b16 %v2558
      %v3170 = vunpack.c.h.b16 %v2558
      %v3171 = vunpack.c.l.b16 %v2559
      %v3172 = vunpack.c.h.b16 %v2559
      %v3173 = vunpack.c.l.b16 %v2560
      %v3174 = vunpack.c.h.b16 %v2560
      %v3175 = vunpack.c.l.b16 %v2561
      %v3176 = vunpack.c.h.b16 %v2561
      %v3177 = vunpack.c.l.b16 %v2562
      %v3178 = vunpack.c.h.b16 %v2562
      %v3179 = vunpack.c.l.b16 %v2563
      %v3180 = vunpack.c.h.b16 %v2563
      %v3181 = vunpack.c.l.b16 %v2564
      %v3182 = vunpack.c.h.b16 %v2564
      %v3183 = vunpack.c.l.b16 %v2565
      %v3184 = vunpack.c.h.b16 %v2565
      %v3185 = vunpack.c.l.b16 %v2566
      %v3186 = vunpack.c.h.b16 %v2566
      %v3187 = vunpack.c.l.b16 %v2567
      %v3188 = vunpack.c.h.b16 %v2567
      %v3189 = vunpack.c.l.b16 %v2568
      %v3190 = vunpack.c.h.b16 %v2568
      %v3191 = vunpack.c.l.b16 %v2569
      %v3192 = vunpack.c.h.b16 %v2569
      %v3193 = vunpack.c.l.b16 %v2570
      %v3194 = vunpack.c.h.b16 %v2570
      %v3195 = vunpack.c.l.b16 %v2571
      %v3196 = vunpack.c.h.b16 %v2571
      %v3197 = vunpack.c.l.b16 %v2572
      %v3198 = vunpack.c.h.b16 %v2572
      %v3199 = vunpack.c.l.b16 %v2573
      %v3200 = vunpack.c.h.b16 %v2573
      %v3201 = vunpack.c.l.b16 %v2574
      %v3202 = vunpack.c.h.b16 %v2574
      %v3203 = vunpack.c.l.b16 %v2575
      %v3204 = vunpack.c.h.b16 %v2575
      %v3205 = vunpack.c.l.b16 %v2576
      %v3206 = vunpack.c.h.b16 %v2576
      %v3207 = vunpack.c.l.b16 %v2577
      %v3208 = vunpack.c.h.b16 %v2577
      %v3209 = vunpack.c.l.b16 %v2578
      %v3210 = vunpack.c.h.b16 %v2578
      %v3211 = vunpack.c.l.b16 %v2579
      %v3212 = vunpack.c.h.b16 %v2579
      %v3213 = vunpack.c.l.b16 %v2580
      %v3214 = vunpack.c.h.b16 %v2580
      %v3215 = vunpack.c.l.b16 %v2581
      %v3216 = vunpack.c.h.b16 %v2581
      %v3217 = vunpack.c.l.b16 %v2582
      %v3218 = vunpack.c.h.b16 %v2582
      %v3219 = vunpack.c.l.b16 %v2583
      %v3220 = vunpack.c.h.b16 %v2583
      %v3221 = vunpack.c.l.b16 %v2584
      %v3222 = vunpack.c.h.b16 %v2584
      %v3223 = vunpack.c.l.b16 %v2585
      %v3224 = vunpack.c.h.b16 %v2585
      %v3225 = vunpack.c.l.b16 %v2586
      %v3226 = vunpack.c.h.b16 %v2586
      %v3227 = vunpack.c.l.b16 %v2587
      %v3228 = vunpack.c.h.b16 %v2587
      %v3229 = vunpack.c.l.b16 %v2588
      %v3230 = vunpack.c.h.b16 %v2588
      %v3231 = vunpack.c.l.b16 %v2589
      %v3232 = vunpack.c.h.b16 %v2589
      %v3233 = vunpack.c.l.b16 %v2590
      %v3234 = vunpack.c.h.b16 %v2590
      %v3235 = vunpack.c.l.b16 %v2591
      %v3236 = vunpack.c.h.b16 %v2591
      %v3237 = vunpack.c.l.b16 %v2592
      %v3238 = vunpack.c.h.b16 %v2592
      %v3239 = vunpack.c.l.b16 %v2593
      %v3240 = vunpack.c.h.b16 %v2593
      %v3241 = vunpack.c.l.b16 %v2594
      %v3242 = vunpack.c.h.b16 %v2594
      %v3243 = vunpack.c.l.b16 %v2595
      %v3244 = vunpack.c.h.b16 %v2595
      %v3245 = vunpack.c.l.b16 %v2596
      %v3246 = vunpack.c.h.b16 %v2596
      %v3247 = vunpack.c.l.b16 %v2597
      %v3248 = vunpack.c.h.b16 %v2597
      %v3249 = vunpack.c.l.b16 %v2598
      %v3250 = vunpack.c.h.b16 %v2598
      %v3251 = vunpack.c.l.b16 %v2599
      %v3252 = vunpack.c.h.b16 %v2599
      %v3253 = vunpack.c.l.b16 %v2600
      %v3254 = vunpack.c.h.b16 %v2600
      %v3255 = vunpack.c.l.b16 %v2601
      %v3256 = vunpack.c.h.b16 %v2601
      %v3257 = vunpack.c.l.b16 %v2602
      %v3258 = vunpack.c.h.b16 %v2602
      %v3259 = vunpack.c.l.b16 %v2603
      %v3260 = vunpack.c.h.b16 %v2603
      %v3261 = vunpack.c.l.b16 %v2604
      %v3262 = vunpack.c.h.b16 %v2604
      %v3263 = vunpack.c.l.b16 %v2605
      %v3264 = vunpack.c.h.b16 %v2605
      %v3265 = vunpack.c.l.b16 %v2606
      %v3266 = vunpack.c.h.b16 %v2606
      %v3267 = vunpack.c.l.b16 %v2607
      %v3268 = vunpack.c.h.b16 %v2607
      %v3269 = vunpack.c.l.b16 %v2608
      %v3270 = vunpack.c.h.b16 %v2608
      %v3271 = vunpack.c.l.b16 %v2609
      %v3272 = vunpack.c.h.b16 %v2609
      %v3273 = vunpack.c.l.b16 %v2610
      %v3274 = vunpack.c.h.b16 %v2610
      %v3275 = vunpack.c.l.b16 %v2611
      %v3276 = vunpack.c.h.b16 %v2611
      %v3277 = vunpack.c.l.b16 %v2612
      %v3278 = vunpack.c.h.b16 %v2612
      %v3279 = vunpack.c.l.b16 %v2613
      %v3280 = vunpack.c.h.b16 %v2613
      %v3281 = vunpack.c.l.b16 %v2614
      %v3282 = vunpack.c.h.b16 %v2614
      %v3283 = vunpack.c.l.b16 %v2615
      %v3284 = vunpack.c.h.b16 %v2615
      %v3285 = vunpack.c.l.b16 %v2616
      %v3286 = vunpack.c.h.b16 %v2616
      %v3287 = vunpack.c.l.b16 %v2617
      %v3288 = vunpack.c.h.b16 %v2617
      %v3289 = vunpack.c.l.b16 %v2618
      %v3290 = vunpack.c.h.b16 %v2618
      %v3291 = vunpack.c.l.b16 %v2619
      %v3292 = vunpack.c.h.b16 %v2619
      %v3293 = vunpack.c.l.b16 %v2620
      %v3294 = vunpack.c.h.b16 %v2620
      %v3295 = vunpack.c.l.b16 %v2621
      %v3296 = vunpack.c.h.b16 %v2621
      %v3297 = vunpack.c.l.b16 %v2622
      %v3298 = vunpack.c.h.b16 %v2622
      %v3299 = vunpack.c.l.b16 %v2623
      %v3300 = vunpack.c.h.b16 %v2623
      %v3301 = vunpack.c.l.b16 %v2624
      %v3302 = vunpack.c.h.b16 %v2624
      %v3303 = vunpack.c.l.b16 %v2625
      %v3304 = vunpack.c.h.b16 %v2625
      %v3305 = vunpack.c.l.b16 %v2626
      %v3306 = vunpack.c.h.b16 %v2626
      %v3307 = vunpack.c.l.b16 %v2627
      %v3308 = vunpack.c.h.b16 %v2627
      %v3309 = vunpack.c.l.b16 %v2628
      %v3310 = vunpack.c.h.b16 %v2628
      %v3311 = vunpack.c.l.b16 %v2629
      %v3312 = vunpack.c.h.b16 %v2629
      %v3313 = vunpack.c.l.b16 %v2630
      %v3314 = vunpack.c.h.b16 %v2630
      %v3315 = vunpack.c.l.b16 %v2631
      %v3316 = vunpack.c.h.b16 %v2631
      %v3317 = vunpack.c.l.b16 %v2632
      %v3318 = vunpack.c.h.b16 %v2632
      %v3319 = vunpack.c.l.b16 %v2633
      %v3320 = vunpack.c.h.b16 %v2633
      %v3321 = vunpack.c.l.b16 %v2634
      %v3322 = vunpack.c.h.b16 %v2634
      %v3323 = vunpack.c.l.b16 %v2635
      %v3324 = vunpack.c.h.b16 %v2635
      %v3325 = vunpack.c.l.b16 %v2636
      %v3326 = vunpack.c.h.b16 %v2636
      %v3327 = vunpack.c.l.b16 %v2637
      %v3328 = vunpack.c.h.b16 %v2637
      %v3329 = vunpack.c.l.b16 %v2638
      %v3330 = vunpack.c.h.b16 %v2638
      %v3331 = vunpack.c.l.b16 %v2639
      %v3332 = vunpack.c.h.b16 %v2639
      %v3333 = vunpack.c.l.b16 %v2640
      %v3334 = vunpack.c.h.b16 %v2640
      %v3335 = vunpack.c.l.b16 %v2641
      %v3336 = vunpack.c.h.b16 %v2641
      %v3337 = vunpack.c.l.b16 %v2642
      %v3338 = vunpack.c.h.b16 %v2642
      %v3339 = vunpack.c.l.b16 %v2643
      %v3340 = vunpack.c.h.b16 %v2643
      %v3341 = vunpack.c.l.b16 %v2644
      %v3342 = vunpack.c.h.b16 %v2644
      %v3343 = vunpack.c.l.b16 %v2645
      %v3344 = vunpack.c.h.b16 %v2645
      %v3345 = vunpack.c.l.b16 %v2646
      %v3346 = vunpack.c.h.b16 %v2646
      %v3347 = vunpack.c.l.b16 %v2647
      %v3348 = vunpack.c.h.b16 %v2647
      %v3349 = vunpack.c.l.b16 %v2648
      %v3350 = vunpack.c.h.b16 %v2648
      %v3351 = vunpack.c.l.b16 %v2649
      %v3352 = vunpack.c.h.b16 %v2649
      %v3353 = vunpack.c.l.b16 %v2650
      %v3354 = vunpack.c.h.b16 %v2650
      %v3355 = vunpack.c.l.b16 %v2651
      %v3356 = vunpack.c.h.b16 %v2651
      %v3357 = vunpack.c.l.b16 %v2652
      %v3358 = vunpack.c.h.b16 %v2652
      %v3359 = vunpack.c.l.b16 %v2653
      %v3360 = vunpack.c.h.b16 %v2653
      %v3361 = vunpack.c.l.b16 %v2654
      %v3362 = vunpack.c.h.b16 %v2654
      %v3363 = vunpack.c.l.b16 %v2655
      %v3364 = vunpack.c.h.b16 %v2655
      %v3365 = vunpack.c.l.b16 %v2656
      %v3366 = vunpack.c.h.b16 %v2656
      %v3367 = vunpack.c.l.b16 %v2657
      %v3368 = vunpack.c.h.b16 %v2657
      %v3369 = vunpack.c.l.b16 %v2658
      %v3370 = vunpack.c.h.b16 %v2658
      %v3371 = vunpack.c.l.b16 %v2659
      %v3372 = vunpack.c.h.b16 %v2659
      %v3373 = vunpack.c.l.b16 %v2660
      %v3374 = vunpack.c.h.b16 %v2660
      %v3375 = vunpack.c.l.b16 %v2661
      %v3376 = vunpack.c.h.b16 %v2661
      %v3377 = vunpack.c.l.b16 %v2662
      %v3378 = vunpack.c.h.b16 %v2662
      %v3379 = vunpack.c.l.b16 %v2663
      %v3380 = vunpack.c.h.b16 %v2663
      %v3381 = vunpack.c.l.b16 %v2664
      %v3382 = vunpack.c.h.b16 %v2664
      %v3383 = vunpack.c.l.b16 %v2665
      %v3384 = vunpack.c.h.b16 %v2665
      %v3385 = vunpack.c.l.b16 %v2666
      %v3386 = vunpack.c.h.b16 %v2666
      %v3387 = vunpack.c.l.b16 %v2667
      %v3388 = vunpack.c.h.b16 %v2667
      %v3389 = vunpack.c.l.b16 %v2668
      %v3390 = vunpack.c.h.b16 %v2668
      %v3391 = vunpack.c.l.b16 %v2669
      %v3392 = vunpack.c.h.b16 %v2669
      %v3393 = vunpack.c.l.b16 %v2670
      %v3394 = vunpack.c.h.b16 %v2670
      %v3395 = vunpack.c.l.b16 %v2671
      %v3396 = vunpack.c.h.b16 %v2671
      %v3397 = vunpack.c.l.b16 %v2672
      %v3398 = vunpack.c.h.b16 %v2672
      %v3399 = vunpack.c.l.b16 %v2673
      %v3400 = vunpack.c.h.b16 %v2673
      %v3401 = vunpack.c.l.b16 %v2674
      %v3402 = vunpack.c.h.b16 %v2674
      %v3403 = vunpack.c.l.b16 %v2675
      %v3404 = vunpack.c.h.b16 %v2675
      %v3405 = vunpack.c.l.b16 %v2676
      %v3406 = vunpack.c.h.b16 %v2676
      %v3407 = vunpack.c.l.b16 %v2677
      %v3408 = vunpack.c.h.b16 %v2677
      %v3409 = vunpack.c.l.b16 %v2678
      %v3410 = vunpack.c.h.b16 %v2678
      %v3411 = vunpack.c.l.b16 %v2679
      %v3412 = vunpack.c.h.b16 %v2679
      %v3413 = vunpack.c.l.b16 %v2680
      %v3414 = vunpack.c.h.b16 %v2680
      %v3415 = vunpack.c.l.b16 %v2681
      %v3416 = vunpack.c.h.b16 %v2681
      %v3417 = vunpack.c.l.b16 %v2682
      %v3418 = vunpack.c.h.b16 %v2682
      %v3419 = vunpack.c.l.b16 %v2683
      %v3420 = vunpack.c.h.b16 %v2683
      %v3421 = vunpack.c.l.b16 %v2684
      %v3422 = vunpack.c.h.b16 %v2684
      %v3423 = vunpack.c.l.b16 %v2685
      %v3424 = vunpack.c.h.b16 %v2685
      %v3425 = vunpack.c.l.b16 %v2686
      %v3426 = vunpack.c.h.b16 %v2686
      %v3427 = vunpack.c.l.b16 %v2687
      %v3428 = vunpack.c.h.b16 %v2687
      %v3429 = vunpack.c.l.b16 %v2688
      %v3430 = vunpack.c.h.b16 %v2688
      %v3431 = vunpack.c.l.b16 %v2689
      %v3432 = vunpack.c.h.b16 %v2689
      %v3433 = vunpack.c.l.b16 %v2690
      %v3434 = vunpack.c.h.b16 %v2690
      %v3435 = vunpack.c.l.b16 %v2691
      %v3436 = vunpack.c.h.b16 %v2691
      %v3437 = vunpack.c.l.b16 %v2692
      %v3438 = vunpack.c.h.b16 %v2692
      %v3439 = vunpack.c.l.b16 %v2693
      %v3440 = vunpack.c.h.b16 %v2693
      %v3441 = vunpack.c.l.b16 %v2694
      %v3442 = vunpack.c.h.b16 %v2694
      %v3443 = vunpack.c.l.b16 %v2695
      %v3444 = vunpack.c.h.b16 %v2695
      %v3445 = vunpack.c.l.b16 %v2696
      %v3446 = vunpack.c.h.b16 %v2696
      %v3447 = vunpack.c.l.b16 %v2697
      %v3448 = vunpack.c.h.b16 %v2697
      %v3449 = vunpack.c.l.b16 %v2698
      %v3450 = vunpack.c.h.b16 %v2698
      %v3451 = vunpack.c.l.b16 %v2699
      %v3452 = vunpack.c.h.b16 %v2699
      %v3453 = vunpack.c.l.b16 %v2700
      %v3454 = vunpack.c.h.b16 %v2700
      %v3455 = vunpack.c.l.b16 %v2701
      %v3456 = vunpack.c.h.b16 %v2701
      %v3457 = vunpack.c.l.b16 %v2702
      %v3458 = vunpack.c.h.b16 %v2702
      %v3459 = vunpack.c.l.b16 %v2703
      %v3460 = vunpack.c.h.b16 %v2703
      %v3461 = vunpack.c.l.b16 %v2704
      %v3462 = vunpack.c.h.b16 %v2704
      %v3463 = vunpack.c.l.b16 %v2705
      %v3464 = vunpack.c.h.b16 %v2705
      %v3465 = vunpack.c.l.b16 %v2706
      %v3466 = vunpack.c.h.b16 %v2706
      %v3467 = vunpack.c.l.b16 %v2707
      %v3468 = vunpack.c.h.b16 %v2707
      %v3469 = vunpack.c.l.b16 %v2708
      %v3470 = vunpack.c.h.b16 %v2708
      %v3471 = vunpack.c.l.b16 %v2709
      %v3472 = vunpack.c.h.b16 %v2709
      %v3473 = vunpack.c.l.b16 %v2710
      %v3474 = vunpack.c.h.b16 %v2710
      %v3475 = vunpack.c.l.b16 %v2711
      %v3476 = vunpack.c.h.b16 %v2711
      %v3477 = vunpack.c.l.b16 %v2712
      %v3478 = vunpack.c.h.b16 %v2712
      %v3479 = vunpack.c.l.b16 %v2713
      %v3480 = vunpack.c.h.b16 %v2713
      %v3481 = vunpack.c.l.b16 %v2714
      %v3482 = vunpack.c.h.b16 %v2714
      %v3483 = vunpack.c.l.b16 %v2715
      %v3484 = vunpack.c.h.b16 %v2715
      %v3485 = vunpack.c.l.b16 %v2716
      %v3486 = vunpack.c.h.b16 %v2716
      %v3487 = vunpack.c.l.b16 %v2717
      %v3488 = vunpack.c.h.b16 %v2717
      %v3489 = vunpack.c.l.b16 %v2718
      %v3490 = vunpack.c.h.b16 %v2718
      %v3491 = vunpack.c.l.b16 %v2719
      %v3492 = vunpack.c.h.b16 %v2719
      %v3493 = vunpack.c.l.b16 %v2720
      %v3494 = vunpack.c.h.b16 %v2720
      %v3495 = vunpack.c.l.b16 %v2721
      %v3496 = vunpack.c.h.b16 %v2721
      %v3497 = vunpack.c.l.b16 %v2722
      %v3498 = vunpack.c.h.b16 %v2722
      %v3499 = vunpack.c.l.b16 %v2723
      %v3500 = vunpack.c.h.b16 %v2723
      %v3501 = vunpack.c.l.b16 %v2724
      %v3502 = vunpack.c.h.b16 %v2724
      %v3503 = vunpack.c.l.b16 %v2725
      %v3504 = vunpack.c.h.b16 %v2725
      %v3505 = vunpack.c.l.b16 %v2726
      %v3506 = vunpack.c.h.b16 %v2726
      %v3507 = vunpack.c.l.b16 %v2727
      %v3508 = vunpack.c.h.b16 %v2727
      %v3509 = vunpack.c.l.b16 %v2728
      %v3510 = vunpack.c.h.b16 %v2728
      %v3511 = vunpack.c.l.b16 %v2729
      %v3512 = vunpack.c.h.b16 %v2729
      %v3513 = vunpack.c.l.b16 %v2730
      %v3514 = vunpack.c.h.b16 %v2730
      %v3515 = vunpack.c.l.b16 %v2731
      %v3516 = vunpack.c.h.b16 %v2731
      %v3517 = vunpack.c.l.b16 %v2732
      %v3518 = vunpack.c.h.b16 %v2732
      %v3519 = vunpack.c.l.b16 %v2733
      %v3520 = vunpack.c.h.b16 %v2733
      %v3521 = vunpack.c.l.b16 %v2734
      %v3522 = vunpack.c.h.b16 %v2734
      %v3523 = vunpack.c.l.b16 %v2735
      %v3524 = vunpack.c.h.b16 %v2735
      %v3525 = vunpack.c.l.b16 %v2736
      %v3526 = vunpack.c.h.b16 %v2736
      %v3527 = vunpack.c.l.b16 %v2737
      %v3528 = vunpack.c.h.b16 %v2737
      %v3529 = vunpack.c.l.b16 %v2738
      %v3530 = vunpack.c.h.b16 %v2738
      %v3531 = vunpack.c.l.b16 %v2739
      %v3532 = vunpack.c.h.b16 %v2739
      %v3533 = vunpack.c.l.b16 %v2740
      %v3534 = vunpack.c.h.b16 %v2740
      %v3535 = vunpack.c.l.b16 %v2741
      %v3536 = vunpack.c.h.b16 %v2741
      %v3537 = vunpack.c.l.b16 %v2742
      %v3538 = vunpack.c.h.b16 %v2742
      %v3539 = vunpack.c.l.b16 %v2743
      %v3540 = vunpack.c.h.b16 %v2743
      %v3541 = vunpack.c.l.b16 %v2744
      %v3542 = vunpack.c.h.b16 %v2744
      %v3543 = vunpack.c.l.b16 %v2745
      %v3544 = vunpack.c.h.b16 %v2745
      %v3545 = vunpack.c.l.b16 %v2746
      %v3546 = vunpack.c.h.b16 %v2746
      %v3547 = vunpack.c.l.b16 %v2747
      %v3548 = vunpack.c.h.b16 %v2747
      %v3549 = vunpack.c.l.b16 %v2748
      %v3550 = vunpack.c.h.b16 %v2748
      %v3551 = vunpack.c.l.b16 %v2749
      %v3552 = vunpack.c.h.b16 %v2749
      %v3553 = vunpack.c.l.b16 %v2750
      %v3554 = vunpack.c.h.b16 %v2750
      %v3555 = vunpack.c.l.b16 %v2751
      %v3556 = vunpack.c.h.b16 %v2751
      %v3557 = vunpack.c.l.b16 %v2752
      %v3558 = vunpack.c.h.b16 %v2752
      %v3559 = vunpack.c.l.b16 %v2753
      %v3560 = vunpack.c.h.b16 %v2753
      %v3561 = vunpack.c.l.b16 %v2754
      %v3562 = vunpack.c.h.b16 %v2754
      %v3563 = vunpack.c.l.b16 %v2755
      %v3564 = vunpack.c.h.b16 %v2755
      %v3565 = vunpack.c.l.b16 %v2756
      %v3566 = vunpack.c.h.b16 %v2756
      %v3567 = vunpack.c.l.b16 %v2757
      %v3568 = vunpack.c.h.b16 %v2757
      %v3569 = vunpack.c.l.b16 %v2758
      %v3570 = vunpack.c.h.b16 %v2758
      %v3571 = vunpack.c.l.b16 %v2759
      %v3572 = vunpack.c.h.b16 %v2759
      %v3573 = vunpack.c.l.b16 %v2760
      %v3574 = vunpack.c.h.b16 %v2760
      %v3575 = vunpack.c.l.b16 %v2761
      %v3576 = vunpack.c.h.b16 %v2761
      %v3577 = vunpack.c.l.b16 %v2762
      %v3578 = vunpack.c.h.b16 %v2762
      %v3579 = vunpack.c.l.b16 %v2763
      %v3580 = vunpack.c.h.b16 %v2763
      %v3581 = vunpack.c.l.b16 %v2764
      %v3582 = vunpack.c.h.b16 %v2764
      %v3583 = vunpack.c.l.b16 %v2765
      %v3584 = vunpack.c.h.b16 %v2765
      %v3585 = vunpack.c.l.b16 %v2766
      %v3586 = vunpack.c.h.b16 %v2766
      %v3587 = vunpack.c.l.b16 %v2767
      %v3588 = vunpack.c.h.b16 %v2767
      %v3589 = vunpack.c.l.b16 %v2768
      %v3590 = vunpack.c.h.b16 %v2768
      %v3591 = vunpack.c.l.b16 %v2769
      %v3592 = vunpack.c.h.b16 %v2769
      %v3593 = vunpack.c.l.b16 %v2770
      %v3594 = vunpack.c.h.b16 %v2770
      %v3595 = vunpack.c.l.b16 %v2771
      %v3596 = vunpack.c.h.b16 %v2771
      %v3597 = vunpack.c.l.b16 %v2772
      %v3598 = vunpack.c.h.b16 %v2772
      %v3599 = vunpack.c.l.b16 %v2773
      %v3600 = vunpack.c.h.b16 %v2773
      %v3601 = vunpack.c.l.b16 %v2774
      %v3602 = vunpack.c.h.b16 %v2774
      %v3603 = vunpack.c.l.b16 %v2775
      %v3604 = vunpack.c.h.b16 %v2775
      %v3605 = vunpack.c.l.b16 %v2776
      %v3606 = vunpack.c.h.b16 %v2776
      %v3607 = vunpack.c.l.b16 %v2777
      %v3608 = vunpack.c.h.b16 %v2777
      %v3609 = vunpack.c.l.b16 %v2778
      %v3610 = vunpack.c.h.b16 %v2778
      %v3611 = vunpack.c.l.b16 %v2779
      %v3612 = vunpack.c.h.b16 %v2779
      %v3613 = vunpack.c.l.b16 %v2780
      %v3614 = vunpack.c.h.b16 %v2780
      %v3615 = vunpack.c.l.b16 %v2781
      %v3616 = vunpack.c.h.b16 %v2781
      %v3617 = vunpack.c.l.b16 %v2782
      %v3618 = vunpack.c.h.b16 %v2782
      %v3619 = vunpack.c.l.b16 %v2783
      %v3620 = vunpack.c.h.b16 %v2783
      %v3621 = vunpack.c.l.b16 %v2784
      %v3622 = vunpack.c.h.b16 %v2784
      %v3623 = vunpack.c.l.b16 %v2785
      %v3624 = vunpack.c.h.b16 %v2785
      %v3625 = vunpack.c.l.b16 %v2786
      %v3626 = vunpack.c.h.b16 %v2786
      %v3627 = vunpack.c.l.b16 %v2787
      %v3628 = vunpack.c.h.b16 %v2787
      %v3629 = vunpack.c.l.b16 %v2788
      %v3630 = vunpack.c.h.b16 %v2788
      %v3631 = vunpack.c.l.b16 %v2789
      %v3632 = vunpack.c.h.b16 %v2789
      %v3633 = vunpack.c.l.b16 %v2790
      %v3634 = vunpack.c.h.b16 %v2790
      %v3635 = vunpack.c.l.b16 %v2791
      %v3636 = vunpack.c.h.b16 %v2791
      %v3637 = vunpack.c.l.b16 %v2792
      %v3638 = vunpack.c.h.b16 %v2792
      %v3639 = vunpack.c.l.b16 %v2793
      %v3640 = vunpack.c.h.b16 %v2793
      %v3641 = vunpack.c.l.b16 %v2794
      %v3642 = vunpack.c.h.b16 %v2794
      %v3643 = vunpack.c.l.b16 %v2795
      %v3644 = vunpack.c.h.b16 %v2795
      %v3645 = vunpack.c.l.b16 %v2796
      %v3646 = vunpack.c.h.b16 %v2796
      %v3647 = vunpack.c.l.b16 %v2797
      %v3648 = vunpack.c.h.b16 %v2797
      %v3649 = vunpack.c.l.b16 %v2798
      %v3650 = vunpack.c.h.b16 %v2798
      %v3651 = vunpack.c.l.b16 %v2799
      %v3652 = vunpack.c.h.b16 %v2799
      %v3653 = vunpack.c.l.b16 %v2800
      %v3654 = vunpack.c.h.b16 %v2800
      %v3655 = vunpack.c.l.b16 %v2801
      %v3656 = vunpack.c.h.b16 %v2801
      %v3657 = vunpack.c.l.b16 %v2802
      %v3658 = vunpack.c.h.b16 %v2802
      %v3659 = vunpack.c.l.b16 %v2803
      %v3660 = vunpack.c.h.b16 %v2803
      %v3661 = vunpack.c.l.b16 %v2804
      %v3662 = vunpack.c.h.b16 %v2804
      %v3663 = vunpack.c.l.b16 %v2805
      %v3664 = vunpack.c.h.b16 %v2805
      %v3665 = vunpack.c.l.b16 %v2806
      %v3666 = vunpack.c.h.b16 %v2806
      %v3667 = vunpack.c.l.b16 %v2807
      %v3668 = vunpack.c.h.b16 %v2807
      %v3669 = vunpack.c.l.b16 %v2808
      %v3670 = vunpack.c.h.b16 %v2808
      %v3671 = vunpack.c.l.b16 %v2809
      %v3672 = vunpack.c.h.b16 %v2809
      %v3673 = vunpack.c.l.b16 %v2810
      %v3674 = vunpack.c.h.b16 %v2810
      %v3675 = vunpack.c.l.b16 %v2811
      %v3676 = vunpack.c.h.b16 %v2811
      %v3677 = vunpack.c.l.b16 %v2812
      %v3678 = vunpack.c.h.b16 %v2812
      %v3679 = vunpack.c.l.b16 %v2813
      %v3680 = vunpack.c.h.b16 %v2813
      %v3681 = vunpack.c.l.b16 %v2814
      %v3682 = vunpack.c.h.b16 %v2814
      %v3683 = vunpack.c.l.b16 %v2815
      %v3684 = vunpack.c.h.b16 %v2815
      %v3685 = vunpack.c.l.b16 %v2816
      %v3686 = vunpack.c.h.b16 %v2816
      %v3687 = vunpack.c.l.b16 %v2817
      %v3688 = vunpack.c.h.b16 %v2817
      %v3689 = vunpack.c.l.b16 %v2818
      %v3690 = vunpack.c.h.b16 %v2818
      %v3691 = vunpack.c.l.b16 %v2819
      %v3692 = vunpack.c.h.b16 %v2819
      %v3693 = vunpack.c.l.b16 %v2820
      %v3694 = vunpack.c.h.b16 %v2820
      %v3695 = vunpack.c.l.b16 %v2821
      %v3696 = vunpack.c.h.b16 %v2821
      %v3697 = vunpack.c.l.b16 %v2822
      %v3698 = vunpack.c.h.b16 %v2822
      %v3699 = vunpack.c.l.b16 %v2823
      %v3700 = vunpack.c.h.b16 %v2823
      %v3701 = vunpack.c.l.b16 %v2824
      %v3702 = vunpack.c.h.b16 %v2824
      %v3703 = vunpack.c.l.b16 %v2825
      %v3704 = vunpack.c.h.b16 %v2825
      %v3705 = vunpack.c.l.b16 %v2826
      %v3706 = vunpack.c.h.b16 %v2826
      %v3707 = vunpack.c.l.b16 %v2827
      %v3708 = vunpack.c.h.b16 %v2827
      %v3709 = vunpack.c.l.b16 %v2828
      %v3710 = vunpack.c.h.b16 %v2828
      %v3711 = vunpack.c.l.b16 %v2829
      %v3712 = vunpack.c.h.b16 %v2829
      %v3713 = vunpack.c.l.b16 %v2830
      %v3714 = vunpack.c.h.b16 %v2830
      %v3715 = vunpack.c.l.b16 %v2831
      %v3716 = vunpack.c.h.b16 %v2831
      %v3717 = vunpack.c.l.b16 %v2832
      %v3718 = vunpack.c.h.b16 %v2832
      %v3719 = vunpack.c.l.b16 %v2833
      %v3720 = vunpack.c.h.b16 %v2833
      %v3721 = vunpack.c.l.b16 %v2834
      %v3722 = vunpack.c.h.b16 %v2834
      %v3723 = vunpack.c.l.b16 %v2835
      %v3724 = vunpack.c.h.b16 %v2835
      %v3725 = vunpack.c.l.b16 %v2836
      %v3726 = vunpack.c.h.b16 %v2836
      %v3727 = vunpack.c.l.b16 %v2837
      %v3728 = vunpack.c.h.b16 %v2837
      %v3729 = vunpack.c.l.b16 %v2838
      %v3730 = vunpack.c.h.b16 %v2838
      %v3731 = vunpack.c.l.b16 %v2839
      %v3732 = vunpack.c.h.b16 %v2839
      %v3733 = vunpack.c.l.b16 %v2840
      %v3734 = vunpack.c.h.b16 %v2840
      %v3735 = vunpack.c.l.b16 %v2841
      %v3736 = vunpack.c.h.b16 %v2841
      %v3737 = vunpack.c.l.b16 %v2842
      %v3738 = vunpack.c.h.b16 %v2842
      %v3739 = vpack.c.b16 %v3169, %v3163
      %v3740 = vpack.c.b16 %v3170, %v3164
      %v3741 = vpack.c.b16 %v3171, %v3165
      %v3742 = vpack.c.b16 %v3172, %v3166
      %v3743 = vpack.c.b16 %v3173, %v3167
      %v3744 = vpack.c.b16 %v3174, %v3168
      %v3745 = vpack.c.b16 %v3181, %v3175
      %v3746 = vpack.c.b16 %v3182, %v3176
      %v3747 = vpack.c.b16 %v3183, %v3177
      %v3748 = vpack.c.b16 %v3184, %v3178
      %v3749 = vpack.c.b16 %v3185, %v3179
      %v3750 = vpack.c.b16 %v3186, %v3180
      %v3751 = vpack.c.b16 %v3193, %v3187
      %v3752 = vpack.c.b16 %v3194, %v3188
      %v3753 = vpack.c.b16 %v3195, %v3189
      %v3754 = vpack.c.b16 %v3196, %v3190
      %v3755 = vpack.c.b16 %v3197, %v3191
      %v3756 = vpack.c.b16 %v3198, %v3192
      %v3757 = vpack.c.b16 %v3205, %v3199
      %v3758 = vpack.c.b16 %v3206, %v3200
      %v3759 = vpack.c.b16 %v3207, %v3201
      %v3760 = vpack.c.b16 %v3208, %v3202
      %v3761 = vpack.c.b16 %v3209, %v3203
      %v3762 = vpack.c.b16 %v3210, %v3204
      %v3763 = vpack.c.b16 %v3217, %v3211
      %v3764 = vpack.c.b16 %v3218, %v3212
      %v3765 = vpack.c.b16 %v3219, %v3213
      %v3766 = vpack.c.b16 %v3220, %v3214
      %v3767 = vpack.c.b16 %v3221, %v3215
      %v3768 = vpack.c.b16 %v3222, %v3216
      %v3769 = vpack.c.b16 %v3229, %v3223
      %v3770 = vpack.c.b16 %v3230, %v3224
      %v3771 = vpack.c.b16 %v3231, %v3225
      %v3772 = vpack.c.b16 %v3232, %v3226
      %v3773 = vpack.c.b16 %v3233, %v3227
      %v3774 = vpack.c.b16 %v3234, %v3228
      %v3775 = vpack.c.b16 %v3241, %v3235
      %v3776 = vpack.c.b16 %v3242, %v3236
      %v3777 = vpack.c.b16 %v3243, %v3237
      %v3778 = vpack.c.b16 %v3244, %v3238
      %v3779 = vpack.c.b16 %v3245, %v3239
      %v3780 = vpack.c.b16 %v3246, %v3240
      %v3781 = vpack.c.b16 %v3253, %v3247
      %v3782 = vpack.c.b16 %v3254, %v3248
      %v3783 = vpack.c.b16 %v3255, %v3249
      %v3784 = vpack.c.b16 %v3256, %v3250
      %v3785 = vpack.c.b16 %v3257, %v3251
      %v3786 = vpack.c.b16 %v3258, %v3252
      %v3787 = vpack.c.b16 %v3265, %v3259
      %v3788 = vpack.c.b16 %v3266, %v3260
      %v3789 = vpack.c.b16 %v3267, %v3261
      %v3790 = vpack.c.b16 %v3268, %v3262
      %v3791 = vpack.c.b16 %v3269, %v3263
      %v3792 = vpack.c.b16 %v3270, %v3264
      %v3793 = vpack.c.b16 %v3277, %v3271
      %v3794 = vpack.c.b16 %v3278, %v3272
      %v3795 = vpack.c.b16 %v3279, %v3273
      %v3796 = vpack.c.b16 %v3280, %v3274
      %v3797 = vpack.c.b16 %v3281, %v3275
      %v3798 = vpack.c.b16 %v3282, %v3276
      %v3799 = vpack.c.b16 %v3289, %v3283
      %v3800 = vpack.c.b16 %v3290, %v3284
      %v3801 = vpack.c.b16 %v3291, %v3285
      %v3802 = vpack.c.b16 %v3292, %v3286
      %v3803 = vpack.c.b16 %v3293, %v3287
      %v3804 = vpack.c.b16 %v3294, %v3288
      %v3805 = vpack.c.b16 %v3301, %v3295
      %v3806 = vpack.c.b16 %v3302, %v3296
      %v3807 = vpack.c.b16 %v3303, %v3297
      %v3808 = vpack.c.b16 %v3304, %v3298
      %v3809 = vpack.c.b16 %v3305, %v3299
      %v3810 = vpack.c.b16 %v3306, %v3300
      %v3811 = vpack.c.b16 %v3313, %v3307
      %v3812 = vpack.c.b16 %v3314, %v3308
      %v3813 = vpack.c.b16 %v3315, %v3309
      %v3814 = vpack.c.b16 %v3316, %v3310
      %v3815 = vpack.c.b16 %v3317, %v3311
      %v3816 = vpack.c.b16 %v3318, %v3312
      %v3817 = vpack.c.b16 %v3325, %v3319
      %v3818 = vpack.c.b16 %v3326, %v3320
      %v3819 = vpack.c.b16 %v3327, %v3321
      %v3820 = vpack.c.b16 %v3328, %v3322
      %v3821 = vpack.c.b16 %v3329, %v3323
      %v3822 = vpack.c.b16 %v3330, %v3324
      %v3823 = vpack.c.b16 %v3337, %v3331
      %v3824 = vpack.c.b16 %v3338, %v3332
      %v3825 = vpack.c.b16 %v3339, %v3333
      %v3826 = vpack.c.b16 %v3340, %v3334
      %v3827 = vpack.c.b16 %v3341, %v3335
      %v3828 = vpack.c.b16 %v3342, %v3336
      %v3829 = vpack.c.b16 %v3349, %v3343
      %v3830 = vpack.c.b16 %v3350, %v3344
      %v3831 = vpack.c.b16 %v3351, %v3345
      %v3832 = vpack.c.b16 %v3352, %v3346
      %v3833 = vpack.c.b16 %v3353, %v3347
      %v3834 = vpack.c.b16 %v3354, %v3348
      %v3835 = vpack.c.b16 %v3361, %v3355
      %v3836 = vpack.c.b16 %v3362, %v3356
      %v3837 = vpack.c.b16 %v3363, %v3357
      %v3838 = vpack.c.b16 %v3364, %v3358
      %v3839 = vpack.c.b16 %v3365, %v3359
      %v3840 = vpack.c.b16 %v3366, %v3360
      %v3841 = vpack.c.b16 %v3373, %v3367
      %v3842 = vpack.c.b16 %v3374, %v3368
      %v3843 = vpack.c.b16 %v3375, %v3369
      %v3844 = vpack.c.b16 %v3376, %v3370
      %v3845 = vpack.c.b16 %v3377, %v3371
      %v3846 = vpack.c.b16 %v3378, %v3372
      %v3847 = vpack.c.b16 %v3385, %v3379
      %v3848 = vpack.c.b16 %v3386, %v3380
      %v3849 = vpack.c.b16 %v3387, %v3381
      %v3850 = vpack.c.b16 %v3388, %v3382
      %v3851 = vpack.c.b16 %v3389, %v3383
      %v3852 = vpack.c.b16 %v3390, %v3384
      %v3853 = vpack.c.b16 %v3397, %v3391
      %v3854 = vpack.c.b16 %v3398, %v3392
      %v3855 = vpack.c.b16 %v3399, %v3393
      %v3856 = vpack.c.b16 %v3400, %v3394
      %v3857 = vpack.c.b16 %v3401, %v3395
      %v3858 = vpack.c.b16 %v3402, %v3396
      %v3859 = vpack.c.b16 %v3409, %v3403
      %v3860 = vpack.c.b16 %v3410, %v3404
      %v3861 = vpack.c.b16 %v3411, %v3405
      %v3862 = vpack.c.b16 %v3412, %v3406
      %v3863 = vpack.c.b16 %v3413, %v3407
      %v3864 = vpack.c.b16 %v3414, %v3408
      %v3865 = vpack.c.b16 %v3421, %v3415
      %v3866 = vpack.c.b16 %v3422, %v3416
      %v3867 = vpack.c.b16 %v3423, %v3417
      %v3868 = vpack.c.b16 %v3424, %v3418
      %v3869 = vpack.c.b16 %v3425, %v3419
      %v3870 = vpack.c.b16 %v3426, %v3420
      %v3871 = vpack.c.b16 %v3433, %v3427
      %v3872 = vpack.c.b16 %v3434, %v3428
      %v3873 = vpack.c.b16 %v3435, %v3429
      %v3874 = vpack.c.b16 %v3436, %v3430
      %v3875 = vpack.c.b16 %v3437, %v3431
      %v3876 = vpack.c.b16 %v3438, %v3432
      %v3877 = vpack.c.b16 %v3445, %v3439
      %v3878 = vpack.c.b16 %v3446, %v3440
      %v3879 = vpack.c.b16 %v3447, %v3441
      %v3880 = vpack.c.b16 %v3448, %v3442
      %v3881 = vpack.c.b16 %v3449, %v3443
      %v3882 = vpack.c.b16 %v3450, %v3444
      %v3883 = vpack.c.b16 %v3457, %v3451
      %v3884 = vpack.c.b16 %v3458, %v3452
      %v3885 = vpack.c.b16 %v3459, %v3453
      %v3886 = vpack.c.b16 %v3460, %v3454
      %v3887 = vpack.c.b16 %v3461, %v3455
      %v3888 = vpack.c.b16 %v3462, %v3456
      %v3889 = vpack.c.b16 %v3469, %v3463
      %v3890 = vpack.c.b16 %v3470, %v3464
      %v3891 = vpack.c.b16 %v3471, %v3465
      %v3892 = vpack.c.b16 %v3472, %v3466
      %v3893 = vpack.c.b16 %v3473, %v3467
      %v3894 = vpack.c.b16 %v3474, %v3468
      %v3895 = vpack.c.b16 %v3481, %v3475
      %v3896 = vpack.c.b16 %v3482, %v3476
      %v3897 = vpack.c.b16 %v3483, %v3477
      %v3898 = vpack.c.b16 %v3484, %v3478
      %v3899 = vpack.c.b16 %v3485, %v3479
      %v3900 = vpack.c.b16 %v3486, %v3480
      %v3901 = vpack.c.b16 %v3493, %v3487
      %v3902 = vpack.c.b16 %v3494, %v3488
      %v3903 = vpack.c.b16 %v3495, %v3489
      %v3904 = vpack.c.b16 %v3496, %v3490
      %v3905 = vpack.c.b16 %v3497, %v3491
      %v3906 = vpack.c.b16 %v3498, %v3492
      %v3907 = vpack.c.b16 %v3505, %v3499
      %v3908 = vpack.c.b16 %v3506, %v3500
      %v3909 = vpack.c.b16 %v3507, %v3501
      %v3910 = vpack.c.b16 %v3508, %v3502
      %v3911 = vpack.c.b16 %v3509, %v3503
      %v3912 = vpack.c.b16 %v3510, %v3504
      %v3913 = vpack.c.b16 %v3517, %v3511
      %v3914 = vpack.c.b16 %v3518, %v3512
      %v3915 = vpack.c.b16 %v3519, %v3513
      %v3916 = vpack.c.b16 %v3520, %v3514
      %v3917 = vpack.c.b16 %v3521, %v3515
      %v3918 = vpack.c.b16 %v3522, %v3516
      %v3919 = vpack.c.b16 %v3529, %v3523
      %v3920 = vpack.c.b16 %v3530, %v3524
      %v3921 = vpack.c.b16 %v3531, %v3525
      %v3922 = vpack.c.b16 %v3532, %v3526
      %v3923 = vpack.c.b16 %v3533, %v3527
      %v3924 = vpack.c.b16 %v3534, %v3528
      %v3925 = vpack.c.b16 %v3541, %v3535
      %v3926 = vpack.c.b16 %v3542, %v3536
      %v3927 = vpack.c.b16 %v3543, %v3537
      %v3928 = vpack.c.b16 %v3544, %v3538
      %v3929 = vpack.c.b16 %v3545, %v3539
      %v3930 = vpack.c.b16 %v3546, %v3540
      %v3931 = vpack.c.b16 %v3553, %v3547
      %v3932 = vpack.c.b16 %v3554, %v3548
      %v3933 = vpack.c.b16 %v3555, %v3549
      %v3934 = vpack.c.b16 %v3556, %v3550
      %v3935 = vpack.c.b16 %v3557, %v3551
      %v3936 = vpack.c.b16 %v3558, %v3552
      %v3937 = vpack.c.b16 %v3565, %v3559
      %v3938 = vpack.c.b16 %v3566, %v3560
      %v3939 = vpack.c.b16 %v3567, %v3561
      %v3940 = vpack.c.b16 %v3568, %v3562
      %v3941 = vpack.c.b16 %v3569, %v3563
      %v3942 = vpack.c.b16 %v3570, %v3564
      %v3943 = vpack.c.b16 %v3577, %v3571
      %v3944 = vpack.c.b16 %v3578, %v3572
      %v3945 = vpack.c.b16 %v3579, %v3573
      %v3946 = vpack.c.b16 %v3580, %v3574
      %v3947 = vpack.c.b16 %v3581, %v3575
      %v3948 = vpack.c.b16 %v3582, %v3576
      %v3949 = vpack.c.b16 %v3589, %v3583
      %v3950 = vpack.c.b16 %v3590, %v3584
      %v3951 = vpack.c.b16 %v3591, %v3585
      %v3952 = vpack.c.b16 %v3592, %v3586
      %v3953 = vpack.c.b16 %v3593, %v3587
      %v3954 = vpack.c.b16 %v3594, %v3588
      %v3955 = vpack.c.b16 %v3601, %v3595
      %v3956 = vpack.c.b16 %v3602, %v3596
      %v3957 = vpack.c.b16 %v3603, %v3597
      %v3958 = vpack.c.b16 %v3604, %v3598
      %v3959 = vpack.c.b16 %v3605, %v3599
      %v3960 = vpack.c.b16 %v3606, %v3600
      %v3961 = vpack.c.b16 %v3613, %v3607
      %v3962 = vpack.c.b16 %v3614, %v3608
      %v3963 = vpack.c.b16 %v3615, %v3609
      %v3964 = vpack.c.b16 %v3616, %v3610
      %v3965 = vpack.c.b16 %v3617, %v3611
      %v3966 = vpack.c.b16 %v3618, %v3612
      %v3967 = vpack.c.b16 %v3625, %v3619
      %v3968 = vpack.c.b16 %v3626, %v3620
      %v3969 = vpack.c.b16 %v3627, %v3621
      %v3970 = vpack.c.b16 %v3628, %v3622
      %v3971 = vpack.c.b16 %v3629, %v3623
      %v3972 = vpack.c.b16 %v3630, %v3624
      %v3973 = vpack.c.b16 %v3637, %v3631
      %v3974 = vpack.c.b16 %v3638, %v3632
      %v3975 = vpack.c.b16 %v3639, %v3633
      %v3976 = vpack.c.b16 %v3640, %v3634
      %v3977 = vpack.c.b16 %v3641, %v3635
      %v3978 = vpack.c.b16 %v3642, %v3636
      %v3979 = vpack.c.b16 %v3649, %v3643
      %v3980 = vpack.c.b16 %v3650, %v3644
      %v3981 = vpack.c.b16 %v3651, %v3645
      %v3982 = vpack.c.b16 %v3652, %v3646
      %v3983 = vpack.c.b16 %v3653, %v3647
      %v3984 = vpack.c.b16 %v3654, %v3648
      %v3985 = vpack.c.b16 %v3661, %v3655
      %v3986 = vpack.c.b16 %v3662, %v3656
      %v3987 = vpack.c.b16 %v3663, %v3657
      %v3988 = vpack.c.b16 %v3664, %v3658
      %v3989 = vpack.c.b16 %v3665, %v3659
      %v3990 = vpack.c.b16 %v3666, %v3660
      %v3991 = vpack.c.b16 %v3673, %v3667
      %v3992 = vpack.c.b16 %v3674, %v3668
      %v3993 = vpack.c.b16 %v3675, %v3669
      %v3994 = vpack.c.b16 %v3676, %v3670
      %v3995 = vpack.c.b16 %v3677, %v3671
      %v3996 = vpack.c.b16 %v3678, %v3672
      %v3997 = vpack.c.b16 %v3685, %v3679
      %v3998 = vpack.c.b16 %v3686, %v3680
      %v3999 = vpack.c.b16 %v3687, %v3681
      %v4000 = vpack.c.b16 %v3688, %v3682
      %v4001 = vpack.c.b16 %v3689, %v3683
      %v4002 = vpack.c.b16 %v3690, %v3684
      %v4003 = vpack.c.b16 %v3697, %v3691
      %v4004 = vpack.c.b16 %v3698, %v3692
      %v4005 = vpack.c.b16 %v3699, %v3693
      %v4006 = vpack.c.b16 %v3700, %v3694
      %v4007 = vpack.c.b16 %v3701, %v3695
      %v4008 = vpack.c.b16 %v3702, %v3696
      %v4009 = vpack.c.b16 %v3709, %v3703
      %v4010 = vpack.c.b16 %v3710, %v3704
      %v4011 = vpack.c.b16 %v3711, %v3705
      %v4012 = vpack.c.b16 %v3712, %v3706
      %v4013 = vpack.c.b16 %v3713, %v3707
      %v4014 = vpack.c.b16 %v3714, %v3708
      %v4015 = vpack.c.b16 %v3721, %v3715
      %v4016 = vpack.c.b16 %v3722, %v3716
      %v4017 = vpack.c.b16 %v3723, %v3717
      %v4018 = vpack.c.b16 %v3724, %v3718
      %v4019 = vpack.c.b16 %v3725, %v3719
      %v4020 = vpack.c.b16 %v3726, %v3720
      %v4021 = vpack.c.b16 %v3733, %v3727
      %v4022 = vpack.c.b16 %v3734, %v3728
      %v4023 = vpack.c.b16 %v3735, %v3729
      %v4024 = vpack.c.b16 %v3736, %v3730
      %v4025 = vpack.c.b16 %v3737, %v3731
      %v4026 = vpack.c.b16 %v3738, %v3732
      %4315 = vmatprep.subr.bf16.mxu0 %v3740
      %4316 = vmatpush1.bf16.msra.mxu0 %v3739
      %4317 = vmatprep.subr.bf16.mxu0 %v3746
      %4318 = vmatpush1.bf16.msra.mxu0 %v3745
      %4319 = vmatprep.subr.bf16.mxu0 %v3752
      %4320 = vmatpush1.bf16.msra.mxu0 %v3751
      %4321 = vmatprep.subr.bf16.mxu0 %v3758
      %4322 = vmatpush1.bf16.msra.mxu0 %v3757
      %4323 = vmatprep.subr.bf16.mxu0 %v3764
      %4324 = vmatpush1.bf16.msra.mxu0 %v3763
      %4325 = vmatprep.subr.bf16.mxu0 %v3770
      %4326 = vmatpush1.bf16.msra.mxu0 %v3769
      %4327 = vmatprep.subr.bf16.mxu0 %v3776
      %4328 = vmatpush1.bf16.msra.mxu0 %v3775
      %4329 = vmatprep.subr.bf16.mxu0 %v3782
      %4330 = vmatpush1.bf16.msra.mxu0 %v3781
      %4331 = vmatprep.subr.bf16.mxu0 %v3788
      %4332 = vmatpush1.bf16.msra.mxu0 %v3787
      %4333 = vmatprep.subr.bf16.mxu0 %v3794
      %4334 = vmatpush1.bf16.msra.mxu0 %v3793
      %4335 = vmatprep.subr.bf16.mxu0 %v3800
      %4336 = vmatpush1.bf16.msra.mxu0 %v3799
      %4337 = vmatprep.subr.bf16.mxu0 %v3806
      %4338 = vmatpush1.bf16.msra.mxu0 %v3805
      %4339 = vmatprep.subr.bf16.mxu0 %v3812
      %4340 = vmatpush1.bf16.msra.mxu0 %v3811
      %4341 = vmatprep.subr.bf16.mxu0 %v3818
      %4342 = vmatpush1.bf16.msra.mxu0 %v3817
      %4343 = vmatprep.subr.bf16.mxu0 %v3824
      %4344 = vmatpush1.bf16.msra.mxu0 %v3823
      %4345 = vmatprep.subr.bf16.mxu0 %v3830
      %4346 = vmatpush1.bf16.msra.mxu0 %v3829
      %4347 = vmatprep.mubr.bf16.mxu0 %v717
      %4348 = vmatmul.mubr.bf16.gmra.mrb[0].mxu0 %v716
      %v4349 = vpop.f32.mrb[0].mxu0
      %v4350 = vadd.f32 %v2848, %v4349
      %v4351 = vpop.f32.mrb[0].mxu0
      %v4352 = vadd.f32 %v2852, %v4351
      %v4353 = vpop.f32.mrb[0].mxu0
      %v4354 = vadd.f32 %v2848, %v4353
      %v4355 = vpop.f32.mrb[0].mxu0
      %v4356 = vadd.f32 %v2852, %v4355
      %4357 = vdwg.mxu0
      %4358 = vmatprep.subr.bf16.mxu0 %v3836
      %4359 = vmatpush1.bf16.msra.mxu0 %v3835
      %4360 = vmatprep.subr.bf16.mxu0 %v3842
      %4361 = vmatpush1.bf16.msra.mxu0 %v3841
      %4362 = vmatprep.subr.bf16.mxu0 %v3848
      %4363 = vmatpush1.bf16.msra.mxu0 %v3847
      %4364 = vmatprep.subr.bf16.mxu0 %v3854
      %4365 = vmatpush1.bf16.msra.mxu0 %v3853
      %4366 = vmatprep.subr.bf16.mxu0 %v3860
      %4367 = vmatpush1.bf16.msra.mxu0 %v3859
      %4368 = vmatprep.subr.bf16.mxu0 %v3866
      %4369 = vmatpush1.bf16.msra.mxu0 %v3865
      %4370 = vmatprep.subr.bf16.mxu0 %v3872
      %4371 = vmatpush1.bf16.msra.mxu0 %v3871
      %4372 = vmatprep.subr.bf16.mxu0 %v3878
      %4373 = vmatpush1.bf16.msra.mxu0 %v3877
      %4374 = vmatprep.subr.bf16.mxu0 %v3884
      %4375 = vmatpush1.bf16.msra.mxu0 %v3883
      %4376 = vmatprep.subr.bf16.mxu0 %v3890
      %4377 = vmatpush1.bf16.msra.mxu0 %v3889
      %4378 = vmatprep.subr.bf16.mxu0 %v3896
      %4379 = vmatpush1.bf16.msra.mxu0 %v3895
      %4380 = vmatprep.subr.bf16.mxu0 %v3902
      %4381 = vmatpush1.bf16.msra.mxu0 %v3901
      %4382 = vmatprep.subr.bf16.mxu0 %v3908
      %4383 = vmatpush1.bf16.msra.mxu0 %v3907
      %4384 = vmatprep.subr.bf16.mxu0 %v3914
      %4385 = vmatpush1.bf16.msra.mxu0 %v3913
      %4386 = vmatprep.subr.bf16.mxu0 %v3920
      %4387 = vmatpush1.bf16.msra.mxu0 %v3919
      %4388 = vmatprep.subr.bf16.mxu0 %v3926
      %4389 = vmatpush1.bf16.msra.mxu0 %v3925
      %4390 = vmatprep.mubr.bf16.mxu0 %v719
      %4391 = vmatmul.mubr.bf16.gmra.mrb[0].mxu0 %v718
      %v4392 = vpop.f32.mrb[0].mxu0
      %v4393 = vadd.f32 %v4350, %v4392
      %v4394 = vpop.f32.mrb[0].mxu0
      %v4395 = vadd.f32 %v4352, %v4394
      %v4396 = vpop.f32.mrb[0].mxu0
      %v4397 = vadd.f32 %v4354, %v4396
      %v4398 = vpop.f32.mrb[0].mxu0
      %v4399 = vadd.f32 %v4356, %v4398
      %4400 = vdwg.mxu0
      %4401 = vmatprep.subr.bf16.mxu0 %v3932
      %4402 = vmatpush1.bf16.msra.mxu0 %v3931
      %4403 = vmatprep.subr.bf16.mxu0 %v3938
      %4404 = vmatpush1.bf16.msra.mxu0 %v3937
      %4405 = vmatprep.subr.bf16.mxu0 %v3944
      %4406 = vmatpush1.bf16.msra.mxu0 %v3943
      %4407 = vmatprep.subr.bf16.mxu0 %v3950
      %4408 = vmatpush1.bf16.msra.mxu0 %v3949
      %4409 = vmatprep.subr.bf16.mxu0 %v3956
      %4410 = vmatpush1.bf16.msra.mxu0 %v3955
      %4411 = vmatprep.subr.bf16.mxu0 %v3962
      %4412 = vmatpush1.bf16.msra.mxu0 %v3961
      %4413 = vmatprep.subr.bf16.mxu0 %v3968
      %4414 = vmatpush1.bf16.msra.mxu0 %v3967
      %4415 = vmatprep.subr.bf16.mxu0 %v3974
      %4416 = vmatpush1.bf16.msra.mxu0 %v3973
      %4417 = vmatprep.subr.bf16.mxu0 %v3980
      %4418 = vmatpush1.bf16.msra.mxu0 %v3979
      %4419 = vmatprep.subr.bf16.mxu0 %v3986
      %4420 = vmatpush1.bf16.msra.mxu0 %v3985
      %4421 = vmatprep.subr.bf16.mxu0 %v3992
      %4422 = vmatpush1.bf16.msra.mxu0 %v3991
      %4423 = vmatprep.subr.bf16.mxu0 %v3998
      %4424 = vmatpush1.bf16.msra.mxu0 %v3997
      %4425 = vmatprep.subr.bf16.mxu0 %v4004
      %4426 = vmatpush1.bf16.msra.mxu0 %v4003
      %4427 = vmatprep.subr.bf16.mxu0 %v4010
      %4428 = vmatpush1.bf16.msra.mxu0 %v4009
      %4429 = vmatprep.subr.bf16.mxu0 %v4016
      %4430 = vmatpush1.bf16.msra.mxu0 %v4015
      %4431 = vmatprep.subr.bf16.mxu0 %v4022
      %4432 = vmatpush1.bf16.msra.mxu0 %v4021
      %4433 = vmatprep.mubr.bf16.mxu0 %v721
      %4434 = vmatmul.mubr.bf16.gmra.mrb[0].mxu0 %v720
      %v4435 = vpop.f32.mrb[0].mxu0
      %v4436 = vadd.f32 %v4393, %v4435
      %v4437 = vpop.f32.mrb[0].mxu0
      %v4438 = vadd.f32 %v4395, %v4437
      %v4439 = vpop.f32.mrb[0].mxu0
      %v4440 = vadd.f32 %v4397, %v4439
      %v4441 = vpop.f32.mrb[0].mxu0
      %v4442 = vadd.f32 %v4399, %v4441
      %4443 = vdwg.mxu0
      %4444 = vmatprep.subr.bf16.mxu0 %v3742
      %4445 = vmatpush1.bf16.msra.mxu0 %v3741
      %4446 = vmatprep.subr.bf16.mxu0 %v3748
      %4447 = vmatpush1.bf16.msra.mxu0 %v3747
      %4448 = vmatprep.subr.bf16.mxu0 %v3754
      %4449 = vmatpush1.bf16.msra.mxu0 %v3753
      %4450 = vmatprep.subr.bf16.mxu0 %v3760
      %4451 = vmatpush1.bf16.msra.mxu0 %v3759
      %4452 = vmatprep.subr.bf16.mxu0 %v3766
      %4453 = vmatpush1.bf16.msra.mxu0 %v3765
      %4454 = vmatprep.subr.bf16.mxu0 %v3772
      %4455 = vmatpush1.bf16.msra.mxu0 %v3771
      %4456 = vmatprep.subr.bf16.mxu0 %v3778
      %4457 = vmatpush1.bf16.msra.mxu0 %v3777
      %4458 = vmatprep.subr.bf16.mxu0 %v3784
      %4459 = vmatpush1.bf16.msra.mxu0 %v3783
      %4460 = vmatprep.subr.bf16.mxu0 %v3790
      %4461 = vmatpush1.bf16.msra.mxu0 %v3789
      %4462 = vmatprep.subr.bf16.mxu0 %v3796
      %4463 = vmatpush1.bf16.msra.mxu0 %v3795
      %4464 = vmatprep.subr.bf16.mxu0 %v3802
      %4465 = vmatpush1.bf16.msra.mxu0 %v3801
      %4466 = vmatprep.subr.bf16.mxu0 %v3808
      %4467 = vmatpush1.bf16.msra.mxu0 %v3807
      %4468 = vmatprep.subr.bf16.mxu0 %v3814
      %4469 = vmatpush1.bf16.msra.mxu0 %v3813
      %4470 = vmatprep.subr.bf16.mxu0 %v3820
      %4471 = vmatpush1.bf16.msra.mxu0 %v3819
      %4472 = vmatprep.subr.bf16.mxu0 %v3826
      %4473 = vmatpush1.bf16.msra.mxu0 %v3825
      %4474 = vmatprep.subr.bf16.mxu0 %v3832
      %4475 = vmatpush1.bf16.msra.mxu0 %v3831
      %4476 = vmatprep.mubr.bf16.mxu0 %v717
      %4477 = vmatmul.mubr.bf16.gmra.mrb[0].mxu0 %v716
      %v4478 = vpop.f32.mrb[0].mxu0
      %v4479 = vadd.f32 %v2856, %v4478
      %v4480 = vpop.f32.mrb[0].mxu0
      %v4481 = vadd.f32 %v2860, %v4480
      %v4482 = vpop.f32.mrb[0].mxu0
      %v4483 = vadd.f32 %v2856, %v4482
      %v4484 = vpop.f32.mrb[0].mxu0
      %v4485 = vadd.f32 %v2860, %v4484
      %4486 = vdwg.mxu0
      %4487 = vmatprep.subr.bf16.mxu0 %v3838
      %4488 = vmatpush1.bf16.msra.mxu0 %v3837
      %4489 = vmatprep.subr.bf16.mxu0 %v3844
      %4490 = vmatpush1.bf16.msra.mxu0 %v3843
      %4491 = vmatprep.subr.bf16.mxu0 %v3850
      %4492 = vmatpush1.bf16.msra.mxu0 %v3849
      %4493 = vmatprep.subr.bf16.mxu0 %v3856
      %4494 = vmatpush1.bf16.msra.mxu0 %v3855
      %4495 = vmatprep.subr.bf16.mxu0 %v3862
      %4496 = vmatpush1.bf16.msra.mxu0 %v3861
      %4497 = vmatprep.subr.bf16.mxu0 %v3868
      %4498 = vmatpush1.bf16.msra.mxu0 %v3867
      %4499 = vmatprep.subr.bf16.mxu0 %v3874
      %4500 = vmatpush1.bf16.msra.mxu0 %v3873
      %4501 = vmatprep.subr.bf16.mxu0 %v3880
      %4502 = vmatpush1.bf16.msra.mxu0 %v3879
      %4503 = vmatprep.subr.bf16.mxu0 %v3886
      %4504 = vmatpush1.bf16.msra.mxu0 %v3885
      %4505 = vmatprep.subr.bf16.mxu0 %v3892
      %4506 = vmatpush1.bf16.msra.mxu0 %v3891
      %4507 = vmatprep.subr.bf16.mxu0 %v3898
      %4508 = vmatpush1.bf16.msra.mxu0 %v3897
      %4509 = vmatprep.subr.bf16.mxu0 %v3904
      %4510 = vmatpush1.bf16.msra.mxu0 %v3903
      %4511 = vmatprep.subr.bf16.mxu0 %v3910
      %4512 = vmatpush1.bf16.msra.mxu0 %v3909
      %4513 = vmatprep.subr.bf16.mxu0 %v3916
      %4514 = vmatpush1.bf16.msra.mxu0 %v3915
      %4515 = vmatprep.subr.bf16.mxu0 %v3922
      %4516 = vmatpush1.bf16.msra.mxu0 %v3921
      %4517 = vmatprep.subr.bf16.mxu0 %v3928
      %4518 = vmatpush1.bf16.msra.mxu0 %v3927
      %4519 = vmatprep.mubr.bf16.mxu0 %v719
      %4520 = vmatmul.mubr.bf16.gmra.mrb[0].mxu0 %v718
      %v4521 = vpop.f32.mrb[0].mxu0
      %v4522 = vadd.f32 %v4479, %v4521
      %v4523 = vpop.f32.mrb[0].mxu0
      %v4524 = vadd.f32 %v4481, %v4523
      %v4525 = vpop.f32.mrb[0].mxu0
      %v4526 = vadd.f32 %v4483, %v4525
      %v4527 = vpop.f32.mrb[0].mxu0
      %v4528 = vadd.f32 %v4485, %v4527
      %4529 = vdwg.mxu0
      %4530 = vmatprep.subr.bf16.mxu0 %v3934
      %4531 = vmatpush1.bf16.msra.mxu0 %v3933
      %4532 = vmatprep.subr.bf16.mxu0 %v3940
      %4533 = vmatpush1.bf16.msra.mxu0 %v3939
      %4534 = vmatprep.subr.bf16.mxu0 %v3946
      %4535 = vmatpush1.bf16.msra.mxu0 %v3945
      %4536 = vmatprep.subr.bf16.mxu0 %v3952
      %4537 = vmatpush1.bf16.msra.mxu0 %v3951
      %4538 = vmatprep.subr.bf16.mxu0 %v3958
      %4539 = vmatpush1.bf16.msra.mxu0 %v3957
      %4540 = vmatprep.subr.bf16.mxu0 %v3964
      %4541 = vmatpush1.bf16.msra.mxu0 %v3963
      %4542 = vmatprep.subr.bf16.mxu0 %v3970
      %4543 = vmatpush1.bf16.msra.mxu0 %v3969
      %4544 = vmatprep.subr.bf16.mxu0 %v3976
      %4545 = vmatpush1.bf16.msra.mxu0 %v3975
      %4546 = vmatprep.subr.bf16.mxu0 %v3982
      %4547 = vmatpush1.bf16.msra.mxu0 %v3981
      %4548 = vmatprep.subr.bf16.mxu0 %v3988
      %4549 = vmatpush1.bf16.msra.mxu0 %v3987
      %4550 = vmatprep.subr.bf16.mxu0 %v3994
      %4551 = vmatpush1.bf16.msra.mxu0 %v3993
      %4552 = vmatprep.subr.bf16.mxu0 %v4000
      %4553 = vmatpush1.bf16.msra.mxu0 %v3999
      %4554 = vmatprep.subr.bf16.mxu0 %v4006
      %4555 = vmatpush1.bf16.msra.mxu0 %v4005
      %4556 = vmatprep.subr.bf16.mxu0 %v4012
      %4557 = vmatpush1.bf16.msra.mxu0 %v4011
      %4558 = vmatprep.subr.bf16.mxu0 %v4018
      %4559 = vmatpush1.bf16.msra.mxu0 %v4017
      %4560 = vmatprep.subr.bf16.mxu0 %v4024
      %4561 = vmatpush1.bf16.msra.mxu0 %v4023
      %4562 = vmatprep.mubr.bf16.mxu0 %v721
      %4563 = vmatmul.mubr.bf16.gmra.mrb[0].mxu0 %v720
      %v4564 = vpop.f32.mrb[0].mxu0
      %v4565 = vadd.f32 %v4522, %v4564
      %v4566 = vpop.f32.mrb[0].mxu0
      %v4567 = vadd.f32 %v4524, %v4566
      %v4568 = vpop.f32.mrb[0].mxu0
      %v4569 = vadd.f32 %v4526, %v4568
      %v4570 = vpop.f32.mrb[0].mxu0
      %v4571 = vadd.f32 %v4528, %v4570
      %4572 = vdwg.mxu0
      %4573 = vmatprep.subr.bf16.mxu0 %v3744
      %4574 = vmatpush1.bf16.msra.mxu0 %v3743
      %4575 = vmatprep.subr.bf16.mxu0 %v3750
      %4576 = vmatpush1.bf16.msra.mxu0 %v3749
      %4577 = vmatprep.subr.bf16.mxu0 %v3756
      %4578 = vmatpush1.bf16.msra.mxu0 %v3755
      %4579 = vmatprep.subr.bf16.mxu0 %v3762
      %4580 = vmatpush1.bf16.msra.mxu0 %v3761
      %4581 = vmatprep.subr.bf16.mxu0 %v3768
      %4582 = vmatpush1.bf16.msra.mxu0 %v3767
      %4583 = vmatprep.subr.bf16.mxu0 %v3774
      %4584 = vmatpush1.bf16.msra.mxu0 %v3773
      %4585 = vmatprep.subr.bf16.mxu0 %v3780
      %4586 = vmatpush1.bf16.msra.mxu0 %v3779
      %4587 = vmatprep.subr.bf16.mxu0 %v3786
      %4588 = vmatpush1.bf16.msra.mxu0 %v3785
      %4589 = vmatprep.subr.bf16.mxu0 %v3792
      %4590 = vmatpush1.bf16.msra.mxu0 %v3791
      %4591 = vmatprep.subr.bf16.mxu0 %v3798
      %4592 = vmatpush1.bf16.msra.mxu0 %v3797
      %4593 = vmatprep.subr.bf16.mxu0 %v3804
      %4594 = vmatpush1.bf16.msra.mxu0 %v3803
      %4595 = vmatprep.subr.bf16.mxu0 %v3810
      %4596 = vmatpush1.bf16.msra.mxu0 %v3809
      %4597 = vmatprep.subr.bf16.mxu0 %v3816
      %4598 = vmatpush1.bf16.msra.mxu0 %v3815
      %4599 = vmatprep.subr.bf16.mxu0 %v3822
      %4600 = vmatpush1.bf16.msra.mxu0 %v3821
      %4601 = vmatprep.subr.bf16.mxu0 %v3828
      %4602 = vmatpush1.bf16.msra.mxu0 %v3827
      %4603 = vmatprep.subr.bf16.mxu0 %v3834
      %4604 = vmatpush1.bf16.msra.mxu0 %v3833
      %4605 = vmatprep.mubr.bf16.mxu0 %v717
      %4606 = vmatmul.mubr.bf16.gmra.mrb[0].mxu0 %v716
      %v4607 = vpop.f32.mrb[0].mxu0
      %v4608 = vadd.f32 %v2864, %v4607
      %v4609 = vpop.f32.mrb[0].mxu0
      %v4610 = vadd.f32 %v2868, %v4609
      %v4611 = vpop.f32.mrb[0].mxu0
      %v4612 = vadd.f32 %v2864, %v4611
      %v4613 = vpop.f32.mrb[0].mxu0
      %v4614 = vadd.f32 %v2868, %v4613
      %4615 = vdwg.mxu0
      %4616 = vmatprep.subr.bf16.mxu0 %v3840
      %4617 = vmatpush1.bf16.msra.mxu0 %v3839
      %4618 = vmatprep.subr.bf16.mxu0 %v3846
      %4619 = vmatpush1.bf16.msra.mxu0 %v3845
      %4620 = vmatprep.subr.bf16.mxu0 %v3852
      %4621 = vmatpush1.bf16.msra.mxu0 %v3851
      %4622 = vmatprep.subr.bf16.mxu0 %v3858
      %4623 = vmatpush1.bf16.msra.mxu0 %v3857
      %4624 = vmatprep.subr.bf16.mxu0 %v3864
      %4625 = vmatpush1.bf16.msra.mxu0 %v3863
      %4626 = vmatprep.subr.bf16.mxu0 %v3870
      %4627 = vmatpush1.bf16.msra.mxu0 %v3869
      %4628 = vmatprep.subr.bf16.mxu0 %v3876
      %4629 = vmatpush1.bf16.msra.mxu0 %v3875
      %4630 = vmatprep.subr.bf16.mxu0 %v3882
      %4631 = vmatpush1.bf16.msra.mxu0 %v3881
      %4632 = vmatprep.subr.bf16.mxu0 %v3888
      %4633 = vmatpush1.bf16.msra.mxu0 %v3887
      %4634 = vmatprep.subr.bf16.mxu0 %v3894
      %4635 = vmatpush1.bf16.msra.mxu0 %v3893
      %4636 = vmatprep.subr.bf16.mxu0 %v3900
      %4637 = vmatpush1.bf16.msra.mxu0 %v3899
      %4638 = vmatprep.subr.bf16.mxu0 %v3906
      %4639 = vmatpush1.bf16.msra.mxu0 %v3905
      %4640 = vmatprep.subr.bf16.mxu0 %v3912
      %4641 = vmatpush1.bf16.msra.mxu0 %v3911
      %4642 = vmatprep.subr.bf16.mxu0 %v3918
      %4643 = vmatpush1.bf16.msra.mxu0 %v3917
      %4644 = vmatprep.subr.bf16.mxu0 %v3924
      %4645 = vmatpush1.bf16.msra.mxu0 %v3923
      %4646 = vmatprep.subr.bf16.mxu0 %v3930
      %4647 = vmatpush1.bf16.msra.mxu0 %v3929
      %4648 = vmatprep.mubr.bf16.mxu0 %v719
      %4649 = vmatmul.mubr.bf16.gmra.mrb[0].mxu0 %v718
      %v4650 = vpop.f32.mrb[0].mxu0
      %v4651 = vadd.f32 %v4608, %v4650
      %v4652 = vpop.f32.mrb[0].mxu0
      %v4653 = vadd.f32 %v4610, %v4652
      %v4654 = vpop.f32.mrb[0].mxu0
      %v4655 = vadd.f32 %v4612, %v4654
      %v4656 = vpop.f32.mrb[0].mxu0
      %v4657 = vadd.f32 %v4614, %v4656
      %4658 = vdwg.mxu0
      %4659 = vmatprep.subr.bf16.mxu0 %v3936
      %4660 = vmatpush1.bf16.msra.mxu0 %v3935
      %4661 = vmatprep.subr.bf16.mxu0 %v3942
      %4662 = vmatpush1.bf16.msra.mxu0 %v3941
      %4663 = vmatprep.subr.bf16.mxu0 %v3948
      %4664 = vmatpush1.bf16.msra.mxu0 %v3947
      %4665 = vmatprep.subr.bf16.mxu0 %v3954
      %4666 = vmatpush1.bf16.msra.mxu0 %v3953
      %4667 = vmatprep.subr.bf16.mxu0 %v3960
      %4668 = vmatpush1.bf16.msra.mxu0 %v3959
      %4669 = vmatprep.subr.bf16.mxu0 %v3966
      %4670 = vmatpush1.bf16.msra.mxu0 %v3965
      %4671 = vmatprep.subr.bf16.mxu0 %v3972
      %4672 = vmatpush1.bf16.msra.mxu0 %v3971
      %4673 = vmatprep.subr.bf16.mxu0 %v3978
      %4674 = vmatpush1.bf16.msra.mxu0 %v3977
      %4675 = vmatprep.subr.bf16.mxu0 %v3984
      %4676 = vmatpush1.bf16.msra.mxu0 %v3983
      %4677 = vmatprep.subr.bf16.mxu0 %v3990
      %4678 = vmatpush1.bf16.msra.mxu0 %v3989
      %4679 = vmatprep.subr.bf16.mxu0 %v3996
      %4680 = vmatpush1.bf16.msra.mxu0 %v3995
      %4681 = vmatprep.subr.bf16.mxu0 %v4002
      %4682 = vmatpush1.bf16.msra.mxu0 %v4001
      %4683 = vmatprep.subr.bf16.mxu0 %v4008
      %4684 = vmatpush1.bf16.msra.mxu0 %v4007
      %4685 = vmatprep.subr.bf16.mxu0 %v4014
      %4686 = vmatpush1.bf16.msra.mxu0 %v4013
      %4687 = vmatprep.subr.bf16.mxu0 %v4020
      %4688 = vmatpush1.bf16.msra.mxu0 %v4019
      %4689 = vmatprep.subr.bf16.mxu0 %v4026
      %4690 = vmatpush1.bf16.msra.mxu0 %v4025
      %4691 = vmatprep.mubr.bf16.mxu0 %v721
      %4692 = vmatmul.mubr.bf16.gmra.mrb[0].mxu0 %v720
      %v4693 = vpop.f32.mrb[0].mxu0
      %v4694 = vadd.f32 %v4651, %v4693
      %v4695 = vpop.f32.mrb[0].mxu0
      %v4696 = vadd.f32 %v4653, %v4695
      %v4697 = vpop.f32.mrb[0].mxu0
      %v4698 = vadd.f32 %v4655, %v4697
      %v4699 = vpop.f32.mrb[0].mxu0
      %v4700 = vadd.f32 %v4657, %v4699
      %4701 = vdwg.mxu0
      %v4702 = vld [vmem:[%s3] sm:$0xff]
      %v4703 = vld [vmem:[%s3 + $0x8] sm:$0xff]
      %v4704 = vld [vmem:[%s3 + $0x10] sm:$0xff]
      %v4705 = vld [vmem:[%s3 + $0x18] sm:$0xff]
      %v4706 = vld [vmem:[%s3 + $0x20] sm:$0xff]
      %v4707 = vld [vmem:[%s3 + $0x28] sm:$0xff]
      %v4708 = vld [vmem:[%s3 + $0x30] sm:$0xff]
      %v4709 = vld [vmem:[%s3 + $0x38] sm:$0xff]
      %v4710 = vld [vmem:[%s3 + $0x40] sm:$0xff]
      %v4711 = vld [vmem:[%s3 + $0x48] sm:$0xff]
      %v4712 = vld [vmem:[%s3 + $0x50] sm:$0xff]
      %v4713 = vld [vmem:[%s3 + $0x58] sm:$0xff]
      %v4714 = vld [vmem:[%s3 + $0x60] sm:$0xff]
      %v4715 = vld [vmem:[%s3 + $0x68] sm:$0xff]
      %v4716 = vld [vmem:[%s3 + $0x70] sm:$0xff]
      %v4717 = vld [vmem:[%s3 + $0x78] sm:$0xff]
      %v4718 = vld [vmem:[%s3 + $0x80] sm:$0xff]
      %v4719 = vld [vmem:[%s3 + $0x88] sm:$0xff]
      %v4720 = vld [vmem:[%s3 + $0x90] sm:$0xff]
      %v4721 = vld [vmem:[%s3 + $0x98] sm:$0xff]
      %v4722 = vld [vmem:[%s3 + $0xa0] sm:$0xff]
      %v4723 = vld [vmem:[%s3 + $0xa8] sm:$0xff]
      %v4724 = vld [vmem:[%s3 + $0xb0] sm:$0xff]
      %v4725 = vld [vmem:[%s3 + $0xb8] sm:$0xff]
      %v4726 = vld [vmem:[%s3 + $0xc0] sm:$0xff]
      %v4727 = vld [vmem:[%s3 + $0xc8] sm:$0xff]
      %v4728 = vld [vmem:[%s3 + $0xd0] sm:$0xff]
      %v4729 = vld [vmem:[%s3 + $0xd8] sm:$0xff]
      %v4730 = vld [vmem:[%s3 + $0xe0] sm:$0xff]
      %v4731 = vld [vmem:[%s3 + $0xe8] sm:$0xff]
      %v4732 = vld [vmem:[%s3 + $0xf0] sm:$0xff]
      %v4733 = vld [vmem:[%s3 + $0xf8] sm:$0xff]
      %v4734 = vld [vmem:[%s3 + $0x100] sm:$0xff]
      %v4735 = vld [vmem:[%s3 + $0x108] sm:$0xff]
      %v4736 = vld [vmem:[%s3 + $0x110] sm:$0xff]
      %v4737 = vld [vmem:[%s3 + $0x118] sm:$0xff]
      %v4738 = vld [vmem:[%s3 + $0x120] sm:$0xff]
      %v4739 = vld [vmem:[%s3 + $0x128] sm:$0xff]
      %v4740 = vld [vmem:[%s3 + $0x130] sm:$0xff]
      %v4741 = vld [vmem:[%s3 + $0x138] sm:$0xff]
      %v4742 = vld [vmem:[%s3 + $0x140] sm:$0xff]
      %v4743 = vld [vmem:[%s3 + $0x148] sm:$0xff]
      %v4744 = vld [vmem:[%s3 + $0x150] sm:$0xff]
      %v4745 = vld [vmem:[%s3 + $0x158] sm:$0xff]
      %v4746 = vld [vmem:[%s3 + $0x160] sm:$0xff]
      %v4747 = vld [vmem:[%s3 + $0x168] sm:$0xff]
      %v4748 = vld [vmem:[%s3 + $0x170] sm:$0xff]
      %v4749 = vld [vmem:[%s3 + $0x178] sm:$0xff]
      %v4750 = vld [vmem:[%s3 + $0x180] sm:$0xff]
      %v4751 = vld [vmem:[%s3 + $0x188] sm:$0xff]
      %v4752 = vld [vmem:[%s3 + $0x190] sm:$0xff]
      %v4753 = vld [vmem:[%s3 + $0x198] sm:$0xff]
      %v4754 = vld [vmem:[%s3 + $0x1a0] sm:$0xff]
      %v4755 = vld [vmem:[%s3 + $0x1a8] sm:$0xff]
      %v4756 = vld [vmem:[%s3 + $0x1b0] sm:$0xff]
      %v4757 = vld [vmem:[%s3 + $0x1b8] sm:$0xff]
      %v4758 = vld [vmem:[%s3 + $0x1c0] sm:$0xff]
      %v4759 = vld [vmem:[%s3 + $0x1c8] sm:$0xff]
      %v4760 = vld [vmem:[%s3 + $0x1d0] sm:$0xff]
      %v4761 = vld [vmem:[%s3 + $0x1d8] sm:$0xff]
      %v4762 = vld [vmem:[%s3 + $0x1e0] sm:$0xff]
      %v4763 = vld [vmem:[%s3 + $0x1e8] sm:$0xff]
      %v4764 = vld [vmem:[%s3 + $0x1f0] sm:$0xff]
      %v4765 = vld [vmem:[%s3 + $0x1f8] sm:$0xff]
      %v4766 = vld [vmem:[%s3 + $0x200] sm:$0xff]
      %v4767 = vld [vmem:[%s3 + $0x208] sm:$0xff]
      %v4768 = vld [vmem:[%s3 + $0x210] sm:$0xff]
      %v4769 = vld [vmem:[%s3 + $0x218] sm:$0xff]
      %v4770 = vld [vmem:[%s3 + $0x220] sm:$0xff]
      %v4771 = vld [vmem:[%s3 + $0x228] sm:$0xff]
      %v4772 = vld [vmem:[%s3 + $0x230] sm:$0xff]
      %v4773 = vld [vmem:[%s3 + $0x238] sm:$0xff]
      %v4774 = vld [vmem:[%s3 + $0x240] sm:$0xff]
      %v4775 = vld [vmem:[%s3 + $0x248] sm:$0xff]
      %v4776 = vld [vmem:[%s3 + $0x250] sm:$0xff]
      %v4777 = vld [vmem:[%s3 + $0x258] sm:$0xff]
      %v4778 = vld [vmem:[%s3 + $0x260] sm:$0xff]
      %v4779 = vld [vmem:[%s3 + $0x268] sm:$0xff]
      %v4780 = vld [vmem:[%s3 + $0x270] sm:$0xff]
      %v4781 = vld [vmem:[%s3 + $0x278] sm:$0xff]
      %v4782 = vld [vmem:[%s3 + $0x280] sm:$0xff]
      %v4783 = vld [vmem:[%s3 + $0x288] sm:$0xff]
      %v4784 = vld [vmem:[%s3 + $0x290] sm:$0xff]
      %v4785 = vld [vmem:[%s3 + $0x298] sm:$0xff]
      %v4786 = vld [vmem:[%s3 + $0x2a0] sm:$0xff]
      %v4787 = vld [vmem:[%s3 + $0x2a8] sm:$0xff]
      %v4788 = vld [vmem:[%s3 + $0x2b0] sm:$0xff]
      %v4789 = vld [vmem:[%s3 + $0x2b8] sm:$0xff]
      %v4790 = vld [vmem:[%s3 + $0x2c0] sm:$0xff]
      %v4791 = vld [vmem:[%s3 + $0x2c8] sm:$0xff]
      %v4792 = vld [vmem:[%s3 + $0x2d0] sm:$0xff]
      %v4793 = vld [vmem:[%s3 + $0x2d8] sm:$0xff]
      %v4794 = vld [vmem:[%s3 + $0x2e0] sm:$0xff]
      %v4795 = vld [vmem:[%s3 + $0x2e8] sm:$0xff]
      %v4796 = vld [vmem:[%s3 + $0x2f0] sm:$0xff]
      %v4797 = vld [vmem:[%s3 + $0x2f8] sm:$0xff]
      %v4798 = vld [vmem:[%s3 + $0x300] sm:$0xff]
      %v4799 = vld [vmem:[%s3 + $0x308] sm:$0xff]
      %v4800 = vld [vmem:[%s3 + $0x310] sm:$0xff]
      %v4801 = vld [vmem:[%s3 + $0x318] sm:$0xff]
      %v4802 = vld [vmem:[%s3 + $0x320] sm:$0xff]
      %v4803 = vld [vmem:[%s3 + $0x328] sm:$0xff]
      %v4804 = vld [vmem:[%s3 + $0x330] sm:$0xff]
      %v4805 = vld [vmem:[%s3 + $0x338] sm:$0xff]
      %v4806 = vld [vmem:[%s3 + $0x340] sm:$0xff]
      %v4807 = vld [vmem:[%s3 + $0x348] sm:$0xff]
      %v4808 = vld [vmem:[%s3 + $0x350] sm:$0xff]
      %v4809 = vld [vmem:[%s3 + $0x358] sm:$0xff]
      %v4810 = vld [vmem:[%s3 + $0x360] sm:$0xff]
      %v4811 = vld [vmem:[%s3 + $0x368] sm:$0xff]
      %v4812 = vld [vmem:[%s3 + $0x370] sm:$0xff]
      %v4813 = vld [vmem:[%s3 + $0x378] sm:$0xff]
      %v4814 = vld [vmem:[%s3 + $0x380] sm:$0xff]
      %v4815 = vld [vmem:[%s3 + $0x388] sm:$0xff]
      %v4816 = vld [vmem:[%s3 + $0x390] sm:$0xff]
      %v4817 = vld [vmem:[%s3 + $0x398] sm:$0xff]
      %v4818 = vld [vmem:[%s3 + $0x3a0] sm:$0xff]
      %v4819 = vld [vmem:[%s3 + $0x3a8] sm:$0xff]
      %v4820 = vld [vmem:[%s3 + $0x3b0] sm:$0xff]
      %v4821 = vld [vmem:[%s3 + $0x3b8] sm:$0xff]
      %v4822 = vld [vmem:[%s3 + $0x3c0] sm:$0xff]
      %v4823 = vld [vmem:[%s3 + $0x3c8] sm:$0xff]
      %v4824 = vld [vmem:[%s3 + $0x3d0] sm:$0xff]
      %v4825 = vld [vmem:[%s3 + $0x3d8] sm:$0xff]
      %v4826 = vld [vmem:[%s3 + $0x3e0] sm:$0xff]
      %v4827 = vld [vmem:[%s3 + $0x3e8] sm:$0xff]
      %v4828 = vld [vmem:[%s3 + $0x3f0] sm:$0xff]
      %v4829 = vld [vmem:[%s3 + $0x3f8] sm:$0xff]
      %v4830 = vld [vmem:[%s3 + $0x400] sm:$0xff]
      %v4831 = vld [vmem:[%s3 + $0x408] sm:$0xff]
      %v4832 = vld [vmem:[%s3 + $0x410] sm:$0xff]
      %v4833 = vld [vmem:[%s3 + $0x418] sm:$0xff]
      %v4834 = vld [vmem:[%s3 + $0x420] sm:$0xff]
      %v4835 = vld [vmem:[%s3 + $0x428] sm:$0xff]
      %v4836 = vld [vmem:[%s3 + $0x430] sm:$0xff]
      %v4837 = vld [vmem:[%s3 + $0x438] sm:$0xff]
      %v4838 = vld [vmem:[%s3 + $0x440] sm:$0xff]
      %v4839 = vld [vmem:[%s3 + $0x448] sm:$0xff]
      %v4840 = vld [vmem:[%s3 + $0x450] sm:$0xff]
      %v4841 = vld [vmem:[%s3 + $0x458] sm:$0xff]
      %v4842 = vld [vmem:[%s3 + $0x460] sm:$0xff]
      %v4843 = vld [vmem:[%s3 + $0x468] sm:$0xff]
      %v4844 = vld [vmem:[%s3 + $0x470] sm:$0xff]
      %v4845 = vld [vmem:[%s3 + $0x478] sm:$0xff]
      %v4846 = vld [vmem:[%s3 + $0x480] sm:$0xff]
      %v4847 = vld [vmem:[%s3 + $0x488] sm:$0xff]
      %v4848 = vld [vmem:[%s3 + $0x490] sm:$0xff]
      %v4849 = vld [vmem:[%s3 + $0x498] sm:$0xff]
      %v4850 = vld [vmem:[%s3 + $0x4a0] sm:$0xff]
      %v4851 = vld [vmem:[%s3 + $0x4a8] sm:$0xff]
      %v4852 = vld [vmem:[%s3 + $0x4b0] sm:$0xff]
      %v4853 = vld [vmem:[%s3 + $0x4b8] sm:$0xff]
      %v4854 = vld [vmem:[%s3 + $0x4c0] sm:$0xff]
      %v4855 = vld [vmem:[%s3 + $0x4c8] sm:$0xff]
      %v4856 = vld [vmem:[%s3 + $0x4d0] sm:$0xff]
      %v4857 = vld [vmem:[%s3 + $0x4d8] sm:$0xff]
      %v4858 = vld [vmem:[%s3 + $0x4e0] sm:$0xff]
      %v4859 = vld [vmem:[%s3 + $0x4e8] sm:$0xff]
      %v4860 = vld [vmem:[%s3 + $0x4f0] sm:$0xff]
      %v4861 = vld [vmem:[%s3 + $0x4f8] sm:$0xff]
      %v4862 = vld [vmem:[%s3 + $0x500] sm:$0xff]
      %v4863 = vld [vmem:[%s3 + $0x508] sm:$0xff]
      %v4864 = vld [vmem:[%s3 + $0x510] sm:$0xff]
      %v4865 = vld [vmem:[%s3 + $0x518] sm:$0xff]
      %v4866 = vld [vmem:[%s3 + $0x520] sm:$0xff]
      %v4867 = vld [vmem:[%s3 + $0x528] sm:$0xff]
      %v4868 = vld [vmem:[%s3 + $0x530] sm:$0xff]
      %v4869 = vld [vmem:[%s3 + $0x538] sm:$0xff]
      %v4870 = vld [vmem:[%s3 + $0x540] sm:$0xff]
      %v4871 = vld [vmem:[%s3 + $0x548] sm:$0xff]
      %v4872 = vld [vmem:[%s3 + $0x550] sm:$0xff]
      %v4873 = vld [vmem:[%s3 + $0x558] sm:$0xff]
      %v4874 = vld [vmem:[%s3 + $0x560] sm:$0xff]
      %v4875 = vld [vmem:[%s3 + $0x568] sm:$0xff]
      %v4876 = vld [vmem:[%s3 + $0x570] sm:$0xff]
      %v4877 = vld [vmem:[%s3 + $0x578] sm:$0xff]
      %v4878 = vld [vmem:[%s3 + $0x580] sm:$0xff]
      %v4879 = vld [vmem:[%s3 + $0x588] sm:$0xff]
      %v4880 = vld [vmem:[%s3 + $0x590] sm:$0xff]
      %v4881 = vld [vmem:[%s3 + $0x598] sm:$0xff]
      %v4882 = vld [vmem:[%s3 + $0x5a0] sm:$0xff]
      %v4883 = vld [vmem:[%s3 + $0x5a8] sm:$0xff]
      %v4884 = vld [vmem:[%s3 + $0x5b0] sm:$0xff]
      %v4885 = vld [vmem:[%s3 + $0x5b8] sm:$0xff]
      %v4886 = vld [vmem:[%s3 + $0x5c0] sm:$0xff]
      %v4887 = vld [vmem:[%s3 + $0x5c8] sm:$0xff]
      %v4888 = vld [vmem:[%s3 + $0x5d0] sm:$0xff]
      %v4889 = vld [vmem:[%s3 + $0x5d8] sm:$0xff]
      %v4890 = vld [vmem:[%s3 + $0x5e0] sm:$0xff]
      %v4891 = vld [vmem:[%s3 + $0x5e8] sm:$0xff]
      %v4892 = vld [vmem:[%s3 + $0x5f0] sm:$0xff]
      %v4893 = vld [vmem:[%s3 + $0x5f8] sm:$0xff]
      %v4894 = vld [vmem:[%s3 + $0x600] sm:$0xff]
      %v4895 = vld [vmem:[%s3 + $0x608] sm:$0xff]
      %v4896 = vld [vmem:[%s3 + $0x610] sm:$0xff]
      %v4897 = vld [vmem:[%s3 + $0x618] sm:$0xff]
      %v4898 = vld [vmem:[%s3 + $0x620] sm:$0xff]
      %v4899 = vld [vmem:[%s3 + $0x628] sm:$0xff]
      %v4900 = vld [vmem:[%s3 + $0x630] sm:$0xff]
      %v4901 = vld [vmem:[%s3 + $0x638] sm:$0xff]
      %v4902 = vld [vmem:[%s3 + $0x640] sm:$0xff]
      %v4903 = vld [vmem:[%s3 + $0x648] sm:$0xff]
      %v4904 = vld [vmem:[%s3 + $0x650] sm:$0xff]
      %v4905 = vld [vmem:[%s3 + $0x658] sm:$0xff]
      %v4906 = vld [vmem:[%s3 + $0x660] sm:$0xff]
      %v4907 = vld [vmem:[%s3 + $0x668] sm:$0xff]
      %v4908 = vld [vmem:[%s3 + $0x670] sm:$0xff]
      %v4909 = vld [vmem:[%s3 + $0x678] sm:$0xff]
      %v4910 = vld [vmem:[%s3 + $0x680] sm:$0xff]
      %v4911 = vld [vmem:[%s3 + $0x688] sm:$0xff]
      %v4912 = vld [vmem:[%s3 + $0x690] sm:$0xff]
      %v4913 = vld [vmem:[%s3 + $0x698] sm:$0xff]
      %v4914 = vld [vmem:[%s3 + $0x6a0] sm:$0xff]
      %v4915 = vld [vmem:[%s3 + $0x6a8] sm:$0xff]
      %v4916 = vld [vmem:[%s3 + $0x6b0] sm:$0xff]
      %v4917 = vld [vmem:[%s3 + $0x6b8] sm:$0xff]
      %v4918 = vld [vmem:[%s3 + $0x6c0] sm:$0xff]
      %v4919 = vld [vmem:[%s3 + $0x6c8] sm:$0xff]
      %v4920 = vld [vmem:[%s3 + $0x6d0] sm:$0xff]
      %v4921 = vld [vmem:[%s3 + $0x6d8] sm:$0xff]
      %v4922 = vld [vmem:[%s3 + $0x6e0] sm:$0xff]
      %v4923 = vld [vmem:[%s3 + $0x6e8] sm:$0xff]
      %v4924 = vld [vmem:[%s3 + $0x6f0] sm:$0xff]
      %v4925 = vld [vmem:[%s3 + $0x6f8] sm:$0xff]
      %v4926 = vld [vmem:[%s3 + $0x700] sm:$0xff]
      %v4927 = vld [vmem:[%s3 + $0x708] sm:$0xff]
      %v4928 = vld [vmem:[%s3 + $0x710] sm:$0xff]
      %v4929 = vld [vmem:[%s3 + $0x718] sm:$0xff]
      %v4930 = vld [vmem:[%s3 + $0x720] sm:$0xff]
      %v4931 = vld [vmem:[%s3 + $0x728] sm:$0xff]
      %v4932 = vld [vmem:[%s3 + $0x730] sm:$0xff]
      %v4933 = vld [vmem:[%s3 + $0x738] sm:$0xff]
      %v4934 = vld [vmem:[%s3 + $0x740] sm:$0xff]
      %v4935 = vld [vmem:[%s3 + $0x748] sm:$0xff]
      %v4936 = vld [vmem:[%s3 + $0x750] sm:$0xff]
      %v4937 = vld [vmem:[%s3 + $0x758] sm:$0xff]
      %v4938 = vld [vmem:[%s3 + $0x760] sm:$0xff]
      %v4939 = vld [vmem:[%s3 + $0x768] sm:$0xff]
      %v4940 = vld [vmem:[%s3 + $0x770] sm:$0xff]
      %v4941 = vld [vmem:[%s3 + $0x778] sm:$0xff]
      %v4942 = vld [vmem:[%s3 + $0x780] sm:$0xff]
      %v4943 = vld [vmem:[%s3 + $0x788] sm:$0xff]
      %v4944 = vld [vmem:[%s3 + $0x790] sm:$0xff]
      %v4945 = vld [vmem:[%s3 + $0x798] sm:$0xff]
      %v4946 = vld [vmem:[%s3 + $0x7a0] sm:$0xff]
      %v4947 = vld [vmem:[%s3 + $0x7a8] sm:$0xff]
      %v4948 = vld [vmem:[%s3 + $0x7b0] sm:$0xff]
      %v4949 = vld [vmem:[%s3 + $0x7b8] sm:$0xff]
      %v4950 = vld [vmem:[%s3 + $0x7c0] sm:$0xff]
      %v4951 = vld [vmem:[%s3 + $0x7c8] sm:$0xff]
      %v4952 = vld [vmem:[%s3 + $0x7d0] sm:$0xff]
      %v4953 = vld [vmem:[%s3 + $0x7d8] sm:$0xff]
      %v4954 = vld [vmem:[%s3 + $0x7e0] sm:$0xff]
      %v4955 = vld [vmem:[%s3 + $0x7e8] sm:$0xff]
      %v4956 = vld [vmem:[%s3 + $0x7f0] sm:$0xff]
      %v4957 = vld [vmem:[%s3 + $0x7f8] sm:$0xff]
      %v4958 = vld [vmem:[%s3 + $0x800] sm:$0xff]
      %v4959 = vld [vmem:[%s3 + $0x808] sm:$0xff]
      %v4960 = vld [vmem:[%s3 + $0x810] sm:$0xff]
      %v4961 = vld [vmem:[%s3 + $0x818] sm:$0xff]
      %v4962 = vld [vmem:[%s3 + $0x820] sm:$0xff]
      %v4963 = vld [vmem:[%s3 + $0x828] sm:$0xff]
      %v4964 = vld [vmem:[%s3 + $0x830] sm:$0xff]
      %v4965 = vld [vmem:[%s3 + $0x838] sm:$0xff]
      %v4966 = vld [vmem:[%s3 + $0x840] sm:$0xff]
      %v4967 = vld [vmem:[%s3 + $0x848] sm:$0xff]
      %v4968 = vld [vmem:[%s3 + $0x850] sm:$0xff]
      %v4969 = vld [vmem:[%s3 + $0x858] sm:$0xff]
      %v4970 = vld [vmem:[%s3 + $0x860] sm:$0xff]
      %v4971 = vld [vmem:[%s3 + $0x868] sm:$0xff]
      %v4972 = vld [vmem:[%s3 + $0x870] sm:$0xff]
      %v4973 = vld [vmem:[%s3 + $0x878] sm:$0xff]
      %v4974 = vld [vmem:[%s3 + $0x880] sm:$0xff]
      %v4975 = vld [vmem:[%s3 + $0x888] sm:$0xff]
      %v4976 = vld [vmem:[%s3 + $0x890] sm:$0xff]
      %v4977 = vld [vmem:[%s3 + $0x898] sm:$0xff]
      %v4978 = vld [vmem:[%s3 + $0x8a0] sm:$0xff]
      %v4979 = vld [vmem:[%s3 + $0x8a8] sm:$0xff]
      %v4980 = vld [vmem:[%s3 + $0x8b0] sm:$0xff]
      %v4981 = vld [vmem:[%s3 + $0x8b8] sm:$0xff]
      %v4982 = vld [vmem:[%s3 + $0x8c0] sm:$0xff]
      %v4983 = vld [vmem:[%s3 + $0x8c8] sm:$0xff]
      %v4984 = vld [vmem:[%s3 + $0x8d0] sm:$0xff]
      %v4985 = vld [vmem:[%s3 + $0x8d8] sm:$0xff]
      %v4986 = vld [vmem:[%s3 + $0x8e0] sm:$0xff]
      %v4987 = vld [vmem:[%s3 + $0x8e8] sm:$0xff]
      %v4988 = vld [vmem:[%s3 + $0x8f0] sm:$0xff]
      %v4989 = vld [vmem:[%s3 + $0x8f8] sm:$0xff]
      %v4990 = vld [vmem:[%s6] sm:$0x3f]
      %v4992 = vlaneseq
      %v4993 = vshrl.u32 %v4992, 7
      %v4994 = vsub.s32 0, %v4993
      %v4995 = vrot.slane %v4990, %v4994
      %v4996 = vlaneseq
      %v4997 = vshrl.u32 %v4996, 7
      %v4998 = vsub.s32 1, %v4997
      %v4999 = vrot.slane %v4990, %v4998
      %v5000 = vlaneseq
      %v5001 = vshrl.u32 %v5000, 7
      %v5002 = vsub.s32 2, %v5001
      %v5003 = vrot.slane %v4990, %v5002
      %v5004 = vlaneseq
      %v5005 = vshrl.u32 %v5004, 7
      %v5006 = vsub.s32 3, %v5005
      %v5007 = vrot.slane %v4990, %v5006
      %v5008 = vlaneseq
      %v5009 = vshrl.u32 %v5008, 7
      %v5010 = vsub.s32 4, %v5009
      %v5011 = vrot.slane %v4990, %v5010
      %v5012 = vlaneseq
      %v5013 = vshrl.u32 %v5012, 7
      %v5014 = vsub.s32 5, %v5013
      %v5015 = vrot.slane %v4990, %v5014
      %v5310 = vunpack.c.l.b16 %v4702
      %v5311 = vunpack.c.h.b16 %v4702
      %v5312 = vunpack.c.l.b16 %v4703
      %v5313 = vunpack.c.h.b16 %v4703
      %v5314 = vunpack.c.l.b16 %v4704
      %v5315 = vunpack.c.h.b16 %v4704
      %v5316 = vunpack.c.l.b16 %v4705
      %v5317 = vunpack.c.h.b16 %v4705
      %v5318 = vunpack.c.l.b16 %v4706
      %v5319 = vunpack.c.h.b16 %v4706
      %v5320 = vunpack.c.l.b16 %v4707
      %v5321 = vunpack.c.h.b16 %v4707
      %v5322 = vunpack.c.l.b16 %v4708
      %v5323 = vunpack.c.h.b16 %v4708
      %v5324 = vunpack.c.l.b16 %v4709
      %v5325 = vunpack.c.h.b16 %v4709
      %v5326 = vunpack.c.l.b16 %v4710
      %v5327 = vunpack.c.h.b16 %v4710
      %v5328 = vunpack.c.l.b16 %v4711
      %v5329 = vunpack.c.h.b16 %v4711
      %v5330 = vunpack.c.l.b16 %v4712
      %v5331 = vunpack.c.h.b16 %v4712
      %v5332 = vunpack.c.l.b16 %v4713
      %v5333 = vunpack.c.h.b16 %v4713
      %v5334 = vunpack.c.l.b16 %v4714
      %v5335 = vunpack.c.h.b16 %v4714
      %v5336 = vunpack.c.l.b16 %v4715
      %v5337 = vunpack.c.h.b16 %v4715
      %v5338 = vunpack.c.l.b16 %v4716
      %v5339 = vunpack.c.h.b16 %v4716
      %v5340 = vunpack.c.l.b16 %v4717
      %v5341 = vunpack.c.h.b16 %v4717
      %v5342 = vunpack.c.l.b16 %v4718
      %v5343 = vunpack.c.h.b16 %v4718
      %v5344 = vunpack.c.l.b16 %v4719
      %v5345 = vunpack.c.h.b16 %v4719
      %v5346 = vunpack.c.l.b16 %v4720
      %v5347 = vunpack.c.h.b16 %v4720
      %v5348 = vunpack.c.l.b16 %v4721
      %v5349 = vunpack.c.h.b16 %v4721
      %v5350 = vunpack.c.l.b16 %v4722
      %v5351 = vunpack.c.h.b16 %v4722
      %v5352 = vunpack.c.l.b16 %v4723
      %v5353 = vunpack.c.h.b16 %v4723
      %v5354 = vunpack.c.l.b16 %v4724
      %v5355 = vunpack.c.h.b16 %v4724
      %v5356 = vunpack.c.l.b16 %v4725
      %v5357 = vunpack.c.h.b16 %v4725
      %v5358 = vunpack.c.l.b16 %v4726
      %v5359 = vunpack.c.h.b16 %v4726
      %v5360 = vunpack.c.l.b16 %v4727
      %v5361 = vunpack.c.h.b16 %v4727
      %v5362 = vunpack.c.l.b16 %v4728
      %v5363 = vunpack.c.h.b16 %v4728
      %v5364 = vunpack.c.l.b16 %v4729
      %v5365 = vunpack.c.h.b16 %v4729
      %v5366 = vunpack.c.l.b16 %v4730
      %v5367 = vunpack.c.h.b16 %v4730
      %v5368 = vunpack.c.l.b16 %v4731
      %v5369 = vunpack.c.h.b16 %v4731
      %v5370 = vunpack.c.l.b16 %v4732
      %v5371 = vunpack.c.h.b16 %v4732
      %v5372 = vunpack.c.l.b16 %v4733
      %v5373 = vunpack.c.h.b16 %v4733
      %v5374 = vunpack.c.l.b16 %v4734
      %v5375 = vunpack.c.h.b16 %v4734
      %v5376 = vunpack.c.l.b16 %v4735
      %v5377 = vunpack.c.h.b16 %v4735
      %v5378 = vunpack.c.l.b16 %v4736
      %v5379 = vunpack.c.h.b16 %v4736
      %v5380 = vunpack.c.l.b16 %v4737
      %v5381 = vunpack.c.h.b16 %v4737
      %v5382 = vunpack.c.l.b16 %v4738
      %v5383 = vunpack.c.h.b16 %v4738
      %v5384 = vunpack.c.l.b16 %v4739
      %v5385 = vunpack.c.h.b16 %v4739
      %v5386 = vunpack.c.l.b16 %v4740
      %v5387 = vunpack.c.h.b16 %v4740
      %v5388 = vunpack.c.l.b16 %v4741
      %v5389 = vunpack.c.h.b16 %v4741
      %v5390 = vunpack.c.l.b16 %v4742
      %v5391 = vunpack.c.h.b16 %v4742
      %v5392 = vunpack.c.l.b16 %v4743
      %v5393 = vunpack.c.h.b16 %v4743
      %v5394 = vunpack.c.l.b16 %v4744
      %v5395 = vunpack.c.h.b16 %v4744
      %v5396 = vunpack.c.l.b16 %v4745
      %v5397 = vunpack.c.h.b16 %v4745
      %v5398 = vunpack.c.l.b16 %v4746
      %v5399 = vunpack.c.h.b16 %v4746
      %v5400 = vunpack.c.l.b16 %v4747
      %v5401 = vunpack.c.h.b16 %v4747
      %v5402 = vunpack.c.l.b16 %v4748
      %v5403 = vunpack.c.h.b16 %v4748
      %v5404 = vunpack.c.l.b16 %v4749
      %v5405 = vunpack.c.h.b16 %v4749
      %v5406 = vunpack.c.l.b16 %v4750
      %v5407 = vunpack.c.h.b16 %v4750
      %v5408 = vunpack.c.l.b16 %v4751
      %v5409 = vunpack.c.h.b16 %v4751
      %v5410 = vunpack.c.l.b16 %v4752
      %v5411 = vunpack.c.h.b16 %v4752
      %v5412 = vunpack.c.l.b16 %v4753
      %v5413 = vunpack.c.h.b16 %v4753
      %v5414 = vunpack.c.l.b16 %v4754
      %v5415 = vunpack.c.h.b16 %v4754
      %v5416 = vunpack.c.l.b16 %v4755
      %v5417 = vunpack.c.h.b16 %v4755
      %v5418 = vunpack.c.l.b16 %v4756
      %v5419 = vunpack.c.h.b16 %v4756
      %v5420 = vunpack.c.l.b16 %v4757
      %v5421 = vunpack.c.h.b16 %v4757
      %v5422 = vunpack.c.l.b16 %v4758
      %v5423 = vunpack.c.h.b16 %v4758
      %v5424 = vunpack.c.l.b16 %v4759
      %v5425 = vunpack.c.h.b16 %v4759
      %v5426 = vunpack.c.l.b16 %v4760
      %v5427 = vunpack.c.h.b16 %v4760
      %v5428 = vunpack.c.l.b16 %v4761
      %v5429 = vunpack.c.h.b16 %v4761
      %v5430 = vunpack.c.l.b16 %v4762
      %v5431 = vunpack.c.h.b16 %v4762
      %v5432 = vunpack.c.l.b16 %v4763
      %v5433 = vunpack.c.h.b16 %v4763
      %v5434 = vunpack.c.l.b16 %v4764
      %v5435 = vunpack.c.h.b16 %v4764
      %v5436 = vunpack.c.l.b16 %v4765
      %v5437 = vunpack.c.h.b16 %v4765
      %v5438 = vunpack.c.l.b16 %v4766
      %v5439 = vunpack.c.h.b16 %v4766
      %v5440 = vunpack.c.l.b16 %v4767
      %v5441 = vunpack.c.h.b16 %v4767
      %v5442 = vunpack.c.l.b16 %v4768
      %v5443 = vunpack.c.h.b16 %v4768
      %v5444 = vunpack.c.l.b16 %v4769
      %v5445 = vunpack.c.h.b16 %v4769
      %v5446 = vunpack.c.l.b16 %v4770
      %v5447 = vunpack.c.h.b16 %v4770
      %v5448 = vunpack.c.l.b16 %v4771
      %v5449 = vunpack.c.h.b16 %v4771
      %v5450 = vunpack.c.l.b16 %v4772
      %v5451 = vunpack.c.h.b16 %v4772
      %v5452 = vunpack.c.l.b16 %v4773
      %v5453 = vunpack.c.h.b16 %v4773
      %v5454 = vunpack.c.l.b16 %v4774
      %v5455 = vunpack.c.h.b16 %v4774
      %v5456 = vunpack.c.l.b16 %v4775
      %v5457 = vunpack.c.h.b16 %v4775
      %v5458 = vunpack.c.l.b16 %v4776
      %v5459 = vunpack.c.h.b16 %v4776
      %v5460 = vunpack.c.l.b16 %v4777
      %v5461 = vunpack.c.h.b16 %v4777
      %v5462 = vunpack.c.l.b16 %v4778
      %v5463 = vunpack.c.h.b16 %v4778
      %v5464 = vunpack.c.l.b16 %v4779
      %v5465 = vunpack.c.h.b16 %v4779
      %v5466 = vunpack.c.l.b16 %v4780
      %v5467 = vunpack.c.h.b16 %v4780
      %v5468 = vunpack.c.l.b16 %v4781
      %v5469 = vunpack.c.h.b16 %v4781
      %v5470 = vunpack.c.l.b16 %v4782
      %v5471 = vunpack.c.h.b16 %v4782
      %v5472 = vunpack.c.l.b16 %v4783
      %v5473 = vunpack.c.h.b16 %v4783
      %v5474 = vunpack.c.l.b16 %v4784
      %v5475 = vunpack.c.h.b16 %v4784
      %v5476 = vunpack.c.l.b16 %v4785
      %v5477 = vunpack.c.h.b16 %v4785
      %v5478 = vunpack.c.l.b16 %v4786
      %v5479 = vunpack.c.h.b16 %v4786
      %v5480 = vunpack.c.l.b16 %v4787
      %v5481 = vunpack.c.h.b16 %v4787
      %v5482 = vunpack.c.l.b16 %v4788
      %v5483 = vunpack.c.h.b16 %v4788
      %v5484 = vunpack.c.l.b16 %v4789
      %v5485 = vunpack.c.h.b16 %v4789
      %v5486 = vunpack.c.l.b16 %v4790
      %v5487 = vunpack.c.h.b16 %v4790
      %v5488 = vunpack.c.l.b16 %v4791
      %v5489 = vunpack.c.h.b16 %v4791
      %v5490 = vunpack.c.l.b16 %v4792
      %v5491 = vunpack.c.h.b16 %v4792
      %v5492 = vunpack.c.l.b16 %v4793
      %v5493 = vunpack.c.h.b16 %v4793
      %v5494 = vunpack.c.l.b16 %v4794
      %v5495 = vunpack.c.h.b16 %v4794
      %v5496 = vunpack.c.l.b16 %v4795
      %v5497 = vunpack.c.h.b16 %v4795
      %v5498 = vunpack.c.l.b16 %v4796
      %v5499 = vunpack.c.h.b16 %v4796
      %v5500 = vunpack.c.l.b16 %v4797
      %v5501 = vunpack.c.h.b16 %v4797
      %v5502 = vunpack.c.l.b16 %v4798
      %v5503 = vunpack.c.h.b16 %v4798
      %v5504 = vunpack.c.l.b16 %v4799
      %v5505 = vunpack.c.h.b16 %v4799
      %v5506 = vunpack.c.l.b16 %v4800
      %v5507 = vunpack.c.h.b16 %v4800
      %v5508 = vunpack.c.l.b16 %v4801
      %v5509 = vunpack.c.h.b16 %v4801
      %v5510 = vunpack.c.l.b16 %v4802
      %v5511 = vunpack.c.h.b16 %v4802
      %v5512 = vunpack.c.l.b16 %v4803
      %v5513 = vunpack.c.h.b16 %v4803
      %v5514 = vunpack.c.l.b16 %v4804
      %v5515 = vunpack.c.h.b16 %v4804
      %v5516 = vunpack.c.l.b16 %v4805
      %v5517 = vunpack.c.h.b16 %v4805
      %v5518 = vunpack.c.l.b16 %v4806
      %v5519 = vunpack.c.h.b16 %v4806
      %v5520 = vunpack.c.l.b16 %v4807
      %v5521 = vunpack.c.h.b16 %v4807
      %v5522 = vunpack.c.l.b16 %v4808
      %v5523 = vunpack.c.h.b16 %v4808
      %v5524 = vunpack.c.l.b16 %v4809
      %v5525 = vunpack.c.h.b16 %v4809
      %v5526 = vunpack.c.l.b16 %v4810
      %v5527 = vunpack.c.h.b16 %v4810
      %v5528 = vunpack.c.l.b16 %v4811
      %v5529 = vunpack.c.h.b16 %v4811
      %v5530 = vunpack.c.l.b16 %v4812
      %v5531 = vunpack.c.h.b16 %v4812
      %v5532 = vunpack.c.l.b16 %v4813
      %v5533 = vunpack.c.h.b16 %v4813
      %v5534 = vunpack.c.l.b16 %v4814
      %v5535 = vunpack.c.h.b16 %v4814
      %v5536 = vunpack.c.l.b16 %v4815
      %v5537 = vunpack.c.h.b16 %v4815
      %v5538 = vunpack.c.l.b16 %v4816
      %v5539 = vunpack.c.h.b16 %v4816
      %v5540 = vunpack.c.l.b16 %v4817
      %v5541 = vunpack.c.h.b16 %v4817
      %v5542 = vunpack.c.l.b16 %v4818
      %v5543 = vunpack.c.h.b16 %v4818
      %v5544 = vunpack.c.l.b16 %v4819
      %v5545 = vunpack.c.h.b16 %v4819
      %v5546 = vunpack.c.l.b16 %v4820
      %v5547 = vunpack.c.h.b16 %v4820
      %v5548 = vunpack.c.l.b16 %v4821
      %v5549 = vunpack.c.h.b16 %v4821
      %v5550 = vunpack.c.l.b16 %v4822
      %v5551 = vunpack.c.h.b16 %v4822
      %v5552 = vunpack.c.l.b16 %v4823
      %v5553 = vunpack.c.h.b16 %v4823
      %v5554 = vunpack.c.l.b16 %v4824
      %v5555 = vunpack.c.h.b16 %v4824
      %v5556 = vunpack.c.l.b16 %v4825
      %v5557 = vunpack.c.h.b16 %v4825
      %v5558 = vunpack.c.l.b16 %v4826
      %v5559 = vunpack.c.h.b16 %v4826
      %v5560 = vunpack.c.l.b16 %v4827
      %v5561 = vunpack.c.h.b16 %v4827
      %v5562 = vunpack.c.l.b16 %v4828
      %v5563 = vunpack.c.h.b16 %v4828
      %v5564 = vunpack.c.l.b16 %v4829
      %v5565 = vunpack.c.h.b16 %v4829
      %v5566 = vunpack.c.l.b16 %v4830
      %v5567 = vunpack.c.h.b16 %v4830
      %v5568 = vunpack.c.l.b16 %v4831
      %v5569 = vunpack.c.h.b16 %v4831
      %v5570 = vunpack.c.l.b16 %v4832
      %v5571 = vunpack.c.h.b16 %v4832
      %v5572 = vunpack.c.l.b16 %v4833
      %v5573 = vunpack.c.h.b16 %v4833
      %v5574 = vunpack.c.l.b16 %v4834
      %v5575 = vunpack.c.h.b16 %v4834
      %v5576 = vunpack.c.l.b16 %v4835
      %v5577 = vunpack.c.h.b16 %v4835
      %v5578 = vunpack.c.l.b16 %v4836
      %v5579 = vunpack.c.h.b16 %v4836
      %v5580 = vunpack.c.l.b16 %v4837
      %v5581 = vunpack.c.h.b16 %v4837
      %v5582 = vunpack.c.l.b16 %v4838
      %v5583 = vunpack.c.h.b16 %v4838
      %v5584 = vunpack.c.l.b16 %v4839
      %v5585 = vunpack.c.h.b16 %v4839
      %v5586 = vunpack.c.l.b16 %v4840
      %v5587 = vunpack.c.h.b16 %v4840
      %v5588 = vunpack.c.l.b16 %v4841
      %v5589 = vunpack.c.h.b16 %v4841
      %v5590 = vunpack.c.l.b16 %v4842
      %v5591 = vunpack.c.h.b16 %v4842
      %v5592 = vunpack.c.l.b16 %v4843
      %v5593 = vunpack.c.h.b16 %v4843
      %v5594 = vunpack.c.l.b16 %v4844
      %v5595 = vunpack.c.h.b16 %v4844
      %v5596 = vunpack.c.l.b16 %v4845
      %v5597 = vunpack.c.h.b16 %v4845
      %v5598 = vunpack.c.l.b16 %v4846
      %v5599 = vunpack.c.h.b16 %v4846
      %v5600 = vunpack.c.l.b16 %v4847
      %v5601 = vunpack.c.h.b16 %v4847
      %v5602 = vunpack.c.l.b16 %v4848
      %v5603 = vunpack.c.h.b16 %v4848
      %v5604 = vunpack.c.l.b16 %v4849
      %v5605 = vunpack.c.h.b16 %v4849
      %v5606 = vunpack.c.l.b16 %v4850
      %v5607 = vunpack.c.h.b16 %v4850
      %v5608 = vunpack.c.l.b16 %v4851
      %v5609 = vunpack.c.h.b16 %v4851
      %v5610 = vunpack.c.l.b16 %v4852
      %v5611 = vunpack.c.h.b16 %v4852
      %v5612 = vunpack.c.l.b16 %v4853
      %v5613 = vunpack.c.h.b16 %v4853
      %v5614 = vunpack.c.l.b16 %v4854
      %v5615 = vunpack.c.h.b16 %v4854
      %v5616 = vunpack.c.l.b16 %v4855
      %v5617 = vunpack.c.h.b16 %v4855
      %v5618 = vunpack.c.l.b16 %v4856
      %v5619 = vunpack.c.h.b16 %v4856
      %v5620 = vunpack.c.l.b16 %v4857
      %v5621 = vunpack.c.h.b16 %v4857
      %v5622 = vunpack.c.l.b16 %v4858
      %v5623 = vunpack.c.h.b16 %v4858
      %v5624 = vunpack.c.l.b16 %v4859
      %v5625 = vunpack.c.h.b16 %v4859
      %v5626 = vunpack.c.l.b16 %v4860
      %v5627 = vunpack.c.h.b16 %v4860
      %v5628 = vunpack.c.l.b16 %v4861
      %v5629 = vunpack.c.h.b16 %v4861
      %v5630 = vunpack.c.l.b16 %v4862
      %v5631 = vunpack.c.h.b16 %v4862
      %v5632 = vunpack.c.l.b16 %v4863
      %v5633 = vunpack.c.h.b16 %v4863
      %v5634 = vunpack.c.l.b16 %v4864
      %v5635 = vunpack.c.h.b16 %v4864
      %v5636 = vunpack.c.l.b16 %v4865
      %v5637 = vunpack.c.h.b16 %v4865
      %v5638 = vunpack.c.l.b16 %v4866
      %v5639 = vunpack.c.h.b16 %v4866
      %v5640 = vunpack.c.l.b16 %v4867
      %v5641 = vunpack.c.h.b16 %v4867
      %v5642 = vunpack.c.l.b16 %v4868
      %v5643 = vunpack.c.h.b16 %v4868
      %v5644 = vunpack.c.l.b16 %v4869
      %v5645 = vunpack.c.h.b16 %v4869
      %v5646 = vunpack.c.l.b16 %v4870
      %v5647 = vunpack.c.h.b16 %v4870
      %v5648 = vunpack.c.l.b16 %v4871
      %v5649 = vunpack.c.h.b16 %v4871
      %v5650 = vunpack.c.l.b16 %v4872
      %v5651 = vunpack.c.h.b16 %v4872
      %v5652 = vunpack.c.l.b16 %v4873
      %v5653 = vunpack.c.h.b16 %v4873
      %v5654 = vunpack.c.l.b16 %v4874
      %v5655 = vunpack.c.h.b16 %v4874
      %v5656 = vunpack.c.l.b16 %v4875
      %v5657 = vunpack.c.h.b16 %v4875
      %v5658 = vunpack.c.l.b16 %v4876
      %v5659 = vunpack.c.h.b16 %v4876
      %v5660 = vunpack.c.l.b16 %v4877
      %v5661 = vunpack.c.h.b16 %v4877
      %v5662 = vunpack.c.l.b16 %v4878
      %v5663 = vunpack.c.h.b16 %v4878
      %v5664 = vunpack.c.l.b16 %v4879
      %v5665 = vunpack.c.h.b16 %v4879
      %v5666 = vunpack.c.l.b16 %v4880
      %v5667 = vunpack.c.h.b16 %v4880
      %v5668 = vunpack.c.l.b16 %v4881
      %v5669 = vunpack.c.h.b16 %v4881
      %v5670 = vunpack.c.l.b16 %v4882
      %v5671 = vunpack.c.h.b16 %v4882
      %v5672 = vunpack.c.l.b16 %v4883
      %v5673 = vunpack.c.h.b16 %v4883
      %v5674 = vunpack.c.l.b16 %v4884
      %v5675 = vunpack.c.h.b16 %v4884
      %v5676 = vunpack.c.l.b16 %v4885
      %v5677 = vunpack.c.h.b16 %v4885
      %v5678 = vunpack.c.l.b16 %v4886
      %v5679 = vunpack.c.h.b16 %v4886
      %v5680 = vunpack.c.l.b16 %v4887
      %v5681 = vunpack.c.h.b16 %v4887
      %v5682 = vunpack.c.l.b16 %v4888
      %v5683 = vunpack.c.h.b16 %v4888
      %v5684 = vunpack.c.l.b16 %v4889
      %v5685 = vunpack.c.h.b16 %v4889
      %v5686 = vunpack.c.l.b16 %v4890
      %v5687 = vunpack.c.h.b16 %v4890
      %v5688 = vunpack.c.l.b16 %v4891
      %v5689 = vunpack.c.h.b16 %v4891
      %v5690 = vunpack.c.l.b16 %v4892
      %v5691 = vunpack.c.h.b16 %v4892
      %v5692 = vunpack.c.l.b16 %v4893
      %v5693 = vunpack.c.h.b16 %v4893
      %v5694 = vunpack.c.l.b16 %v4894
      %v5695 = vunpack.c.h.b16 %v4894
      %v5696 = vunpack.c.l.b16 %v4895
      %v5697 = vunpack.c.h.b16 %v4895
      %v5698 = vunpack.c.l.b16 %v4896
      %v5699 = vunpack.c.h.b16 %v4896
      %v5700 = vunpack.c.l.b16 %v4897
      %v5701 = vunpack.c.h.b16 %v4897
      %v5702 = vunpack.c.l.b16 %v4898
      %v5703 = vunpack.c.h.b16 %v4898
      %v5704 = vunpack.c.l.b16 %v4899
      %v5705 = vunpack.c.h.b16 %v4899
      %v5706 = vunpack.c.l.b16 %v4900
      %v5707 = vunpack.c.h.b16 %v4900
      %v5708 = vunpack.c.l.b16 %v4901
      %v5709 = vunpack.c.h.b16 %v4901
      %v5710 = vunpack.c.l.b16 %v4902
      %v5711 = vunpack.c.h.b16 %v4902
      %v5712 = vunpack.c.l.b16 %v4903
      %v5713 = vunpack.c.h.b16 %v4903
      %v5714 = vunpack.c.l.b16 %v4904
      %v5715 = vunpack.c.h.b16 %v4904
      %v5716 = vunpack.c.l.b16 %v4905
      %v5717 = vunpack.c.h.b16 %v4905
      %v5718 = vunpack.c.l.b16 %v4906
      %v5719 = vunpack.c.h.b16 %v4906
      %v5720 = vunpack.c.l.b16 %v4907
      %v5721 = vunpack.c.h.b16 %v4907
      %v5722 = vunpack.c.l.b16 %v4908
      %v5723 = vunpack.c.h.b16 %v4908
      %v5724 = vunpack.c.l.b16 %v4909
      %v5725 = vunpack.c.h.b16 %v4909
      %v5726 = vunpack.c.l.b16 %v4910
      %v5727 = vunpack.c.h.b16 %v4910
      %v5728 = vunpack.c.l.b16 %v4911
      %v5729 = vunpack.c.h.b16 %v4911
      %v5730 = vunpack.c.l.b16 %v4912
      %v5731 = vunpack.c.h.b16 %v4912
      %v5732 = vunpack.c.l.b16 %v4913
      %v5733 = vunpack.c.h.b16 %v4913
      %v5734 = vunpack.c.l.b16 %v4914
      %v5735 = vunpack.c.h.b16 %v4914
      %v5736 = vunpack.c.l.b16 %v4915
      %v5737 = vunpack.c.h.b16 %v4915
      %v5738 = vunpack.c.l.b16 %v4916
      %v5739 = vunpack.c.h.b16 %v4916
      %v5740 = vunpack.c.l.b16 %v4917
      %v5741 = vunpack.c.h.b16 %v4917
      %v5742 = vunpack.c.l.b16 %v4918
      %v5743 = vunpack.c.h.b16 %v4918
      %v5744 = vunpack.c.l.b16 %v4919
      %v5745 = vunpack.c.h.b16 %v4919
      %v5746 = vunpack.c.l.b16 %v4920
      %v5747 = vunpack.c.h.b16 %v4920
      %v5748 = vunpack.c.l.b16 %v4921
      %v5749 = vunpack.c.h.b16 %v4921
      %v5750 = vunpack.c.l.b16 %v4922
      %v5751 = vunpack.c.h.b16 %v4922
      %v5752 = vunpack.c.l.b16 %v4923
      %v5753 = vunpack.c.h.b16 %v4923
      %v5754 = vunpack.c.l.b16 %v4924
      %v5755 = vunpack.c.h.b16 %v4924
      %v5756 = vunpack.c.l.b16 %v4925
      %v5757 = vunpack.c.h.b16 %v4925
      %v5758 = vunpack.c.l.b16 %v4926
      %v5759 = vunpack.c.h.b16 %v4926
      %v5760 = vunpack.c.l.b16 %v4927
      %v5761 = vunpack.c.h.b16 %v4927
      %v5762 = vunpack.c.l.b16 %v4928
      %v5763 = vunpack.c.h.b16 %v4928
      %v5764 = vunpack.c.l.b16 %v4929
      %v5765 = vunpack.c.h.b16 %v4929
      %v5766 = vunpack.c.l.b16 %v4930
      %v5767 = vunpack.c.h.b16 %v4930
      %v5768 = vunpack.c.l.b16 %v4931
      %v5769 = vunpack.c.h.b16 %v4931
      %v5770 = vunpack.c.l.b16 %v4932
      %v5771 = vunpack.c.h.b16 %v4932
      %v5772 = vunpack.c.l.b16 %v4933
      %v5773 = vunpack.c.h.b16 %v4933
      %v5774 = vunpack.c.l.b16 %v4934
      %v5775 = vunpack.c.h.b16 %v4934
      %v5776 = vunpack.c.l.b16 %v4935
      %v5777 = vunpack.c.h.b16 %v4935
      %v5778 = vunpack.c.l.b16 %v4936
      %v5779 = vunpack.c.h.b16 %v4936
      %v5780 = vunpack.c.l.b16 %v4937
      %v5781 = vunpack.c.h.b16 %v4937
      %v5782 = vunpack.c.l.b16 %v4938
      %v5783 = vunpack.c.h.b16 %v4938
      %v5784 = vunpack.c.l.b16 %v4939
      %v5785 = vunpack.c.h.b16 %v4939
      %v5786 = vunpack.c.l.b16 %v4940
      %v5787 = vunpack.c.h.b16 %v4940
      %v5788 = vunpack.c.l.b16 %v4941
      %v5789 = vunpack.c.h.b16 %v4941
      %v5790 = vunpack.c.l.b16 %v4942
      %v5791 = vunpack.c.h.b16 %v4942
      %v5792 = vunpack.c.l.b16 %v4943
      %v5793 = vunpack.c.h.b16 %v4943
      %v5794 = vunpack.c.l.b16 %v4944
      %v5795 = vunpack.c.h.b16 %v4944
      %v5796 = vunpack.c.l.b16 %v4945
      %v5797 = vunpack.c.h.b16 %v4945
      %v5798 = vunpack.c.l.b16 %v4946
      %v5799 = vunpack.c.h.b16 %v4946
      %v5800 = vunpack.c.l.b16 %v4947
      %v5801 = vunpack.c.h.b16 %v4947
      %v5802 = vunpack.c.l.b16 %v4948
      %v5803 = vunpack.c.h.b16 %v4948
      %v5804 = vunpack.c.l.b16 %v4949
      %v5805 = vunpack.c.h.b16 %v4949
      %v5806 = vunpack.c.l.b16 %v4950
      %v5807 = vunpack.c.h.b16 %v4950
      %v5808 = vunpack.c.l.b16 %v4951
      %v5809 = vunpack.c.h.b16 %v4951
      %v5810 = vunpack.c.l.b16 %v4952
      %v5811 = vunpack.c.h.b16 %v4952
      %v5812 = vunpack.c.l.b16 %v4953
      %v5813 = vunpack.c.h.b16 %v4953
      %v5814 = vunpack.c.l.b16 %v4954
      %v5815 = vunpack.c.h.b16 %v4954
      %v5816 = vunpack.c.l.b16 %v4955
      %v5817 = vunpack.c.h.b16 %v4955
      %v5818 = vunpack.c.l.b16 %v4956
      %v5819 = vunpack.c.h.b16 %v4956
      %v5820 = vunpack.c.l.b16 %v4957
      %v5821 = vunpack.c.h.b16 %v4957
      %v5822 = vunpack.c.l.b16 %v4958
      %v5823 = vunpack.c.h.b16 %v4958
      %v5824 = vunpack.c.l.b16 %v4959
      %v5825 = vunpack.c.h.b16 %v4959
      %v5826 = vunpack.c.l.b16 %v4960
      %v5827 = vunpack.c.h.b16 %v4960
      %v5828 = vunpack.c.l.b16 %v4961
      %v5829 = vunpack.c.h.b16 %v4961
      %v5830 = vunpack.c.l.b16 %v4962
      %v5831 = vunpack.c.h.b16 %v4962
      %v5832 = vunpack.c.l.b16 %v4963
      %v5833 = vunpack.c.h.b16 %v4963
      %v5834 = vunpack.c.l.b16 %v4964
      %v5835 = vunpack.c.h.b16 %v4964
      %v5836 = vunpack.c.l.b16 %v4965
      %v5837 = vunpack.c.h.b16 %v4965
      %v5838 = vunpack.c.l.b16 %v4966
      %v5839 = vunpack.c.h.b16 %v4966
      %v5840 = vunpack.c.l.b16 %v4967
      %v5841 = vunpack.c.h.b16 %v4967
      %v5842 = vunpack.c.l.b16 %v4968
      %v5843 = vunpack.c.h.b16 %v4968
      %v5844 = vunpack.c.l.b16 %v4969
      %v5845 = vunpack.c.h.b16 %v4969
      %v5846 = vunpack.c.l.b16 %v4970
      %v5847 = vunpack.c.h.b16 %v4970
      %v5848 = vunpack.c.l.b16 %v4971
      %v5849 = vunpack.c.h.b16 %v4971
      %v5850 = vunpack.c.l.b16 %v4972
      %v5851 = vunpack.c.h.b16 %v4972
      %v5852 = vunpack.c.l.b16 %v4973
      %v5853 = vunpack.c.h.b16 %v4973
      %v5854 = vunpack.c.l.b16 %v4974
      %v5855 = vunpack.c.h.b16 %v4974
      %v5856 = vunpack.c.l.b16 %v4975
      %v5857 = vunpack.c.h.b16 %v4975
      %v5858 = vunpack.c.l.b16 %v4976
      %v5859 = vunpack.c.h.b16 %v4976
      %v5860 = vunpack.c.l.b16 %v4977
      %v5861 = vunpack.c.h.b16 %v4977
      %v5862 = vunpack.c.l.b16 %v4978
      %v5863 = vunpack.c.h.b16 %v4978
      %v5864 = vunpack.c.l.b16 %v4979
      %v5865 = vunpack.c.h.b16 %v4979
      %v5866 = vunpack.c.l.b16 %v4980
      %v5867 = vunpack.c.h.b16 %v4980
      %v5868 = vunpack.c.l.b16 %v4981
      %v5869 = vunpack.c.h.b16 %v4981
      %v5870 = vunpack.c.l.b16 %v4982
      %v5871 = vunpack.c.h.b16 %v4982
      %v5872 = vunpack.c.l.b16 %v4983
      %v5873 = vunpack.c.h.b16 %v4983
      %v5874 = vunpack.c.l.b16 %v4984
      %v5875 = vunpack.c.h.b16 %v4984
      %v5876 = vunpack.c.l.b16 %v4985
      %v5877 = vunpack.c.h.b16 %v4985
      %v5878 = vunpack.c.l.b16 %v4986
      %v5879 = vunpack.c.h.b16 %v4986
      %v5880 = vunpack.c.l.b16 %v4987
      %v5881 = vunpack.c.h.b16 %v4987
      %v5882 = vunpack.c.l.b16 %v4988
      %v5883 = vunpack.c.h.b16 %v4988
      %v5884 = vunpack.c.l.b16 %v4989
      %v5885 = vunpack.c.h.b16 %v4989
      %v5886 = vpack.c.b16 %v5316, %v5310
      %v5887 = vpack.c.b16 %v5317, %v5311
      %v5888 = vpack.c.b16 %v5318, %v5312
      %v5889 = vpack.c.b16 %v5319, %v5313
      %v5890 = vpack.c.b16 %v5320, %v5314
      %v5891 = vpack.c.b16 %v5321, %v5315
      %v5892 = vpack.c.b16 %v5328, %v5322
      %v5893 = vpack.c.b16 %v5329, %v5323
      %v5894 = vpack.c.b16 %v5330, %v5324
      %v5895 = vpack.c.b16 %v5331, %v5325
      %v5896 = vpack.c.b16 %v5332, %v5326
      %v5897 = vpack.c.b16 %v5333, %v5327
      %v5898 = vpack.c.b16 %v5340, %v5334
      %v5899 = vpack.c.b16 %v5341, %v5335
      %v5900 = vpack.c.b16 %v5342, %v5336
      %v5901 = vpack.c.b16 %v5343, %v5337
      %v5902 = vpack.c.b16 %v5344, %v5338
      %v5903 = vpack.c.b16 %v5345, %v5339
      %v5904 = vpack.c.b16 %v5352, %v5346
      %v5905 = vpack.c.b16 %v5353, %v5347
      %v5906 = vpack.c.b16 %v5354, %v5348
      %v5907 = vpack.c.b16 %v5355, %v5349
      %v5908 = vpack.c.b16 %v5356, %v5350
      %v5909 = vpack.c.b16 %v5357, %v5351
      %v5910 = vpack.c.b16 %v5364, %v5358
      %v5911 = vpack.c.b16 %v5365, %v5359
      %v5912 = vpack.c.b16 %v5366, %v5360
      %v5913 = vpack.c.b16 %v5367, %v5361
      %v5914 = vpack.c.b16 %v5368, %v5362
      %v5915 = vpack.c.b16 %v5369, %v5363
      %v5916 = vpack.c.b16 %v5376, %v5370
      %v5917 = vpack.c.b16 %v5377, %v5371
      %v5918 = vpack.c.b16 %v5378, %v5372
      %v5919 = vpack.c.b16 %v5379, %v5373
      %v5920 = vpack.c.b16 %v5380, %v5374
      %v5921 = vpack.c.b16 %v5381, %v5375
      %v5922 = vpack.c.b16 %v5388, %v5382
      %v5923 = vpack.c.b16 %v5389, %v5383
      %v5924 = vpack.c.b16 %v5390, %v5384
      %v5925 = vpack.c.b16 %v5391, %v5385
      %v5926 = vpack.c.b16 %v5392, %v5386
      %v5927 = vpack.c.b16 %v5393, %v5387
      %v5928 = vpack.c.b16 %v5400, %v5394
      %v5929 = vpack.c.b16 %v5401, %v5395
      %v5930 = vpack.c.b16 %v5402, %v5396
      %v5931 = vpack.c.b16 %v5403, %v5397
      %v5932 = vpack.c.b16 %v5404, %v5398
      %v5933 = vpack.c.b16 %v5405, %v5399
      %v5934 = vpack.c.b16 %v5412, %v5406
      %v5935 = vpack.c.b16 %v5413, %v5407
      %v5936 = vpack.c.b16 %v5414, %v5408
      %v5937 = vpack.c.b16 %v5415, %v5409
      %v5938 = vpack.c.b16 %v5416, %v5410
      %v5939 = vpack.c.b16 %v5417, %v5411
      %v5940 = vpack.c.b16 %v5424, %v5418
      %v5941 = vpack.c.b16 %v5425, %v5419
      %v5942 = vpack.c.b16 %v5426, %v5420
      %v5943 = vpack.c.b16 %v5427, %v5421
      %v5944 = vpack.c.b16 %v5428, %v5422
      %v5945 = vpack.c.b16 %v5429, %v5423
      %v5946 = vpack.c.b16 %v5436, %v5430
      %v5947 = vpack.c.b16 %v5437, %v5431
      %v5948 = vpack.c.b16 %v5438, %v5432
      %v5949 = vpack.c.b16 %v5439, %v5433
      %v5950 = vpack.c.b16 %v5440, %v5434
      %v5951 = vpack.c.b16 %v5441, %v5435
      %v5952 = vpack.c.b16 %v5448, %v5442
      %v5953 = vpack.c.b16 %v5449, %v5443
      %v5954 = vpack.c.b16 %v5450, %v5444
      %v5955 = vpack.c.b16 %v5451, %v5445
      %v5956 = vpack.c.b16 %v5452, %v5446
      %v5957 = vpack.c.b16 %v5453, %v5447
      %v5958 = vpack.c.b16 %v5460, %v5454
      %v5959 = vpack.c.b16 %v5461, %v5455
      %v5960 = vpack.c.b16 %v5462, %v5456
      %v5961 = vpack.c.b16 %v5463, %v5457
      %v5962 = vpack.c.b16 %v5464, %v5458
      %v5963 = vpack.c.b16 %v5465, %v5459
      %v5964 = vpack.c.b16 %v5472, %v5466
      %v5965 = vpack.c.b16 %v5473, %v5467
      %v5966 = vpack.c.b16 %v5474, %v5468
      %v5967 = vpack.c.b16 %v5475, %v5469
      %v5968 = vpack.c.b16 %v5476, %v5470
      %v5969 = vpack.c.b16 %v5477, %v5471
      %v5970 = vpack.c.b16 %v5484, %v5478
      %v5971 = vpack.c.b16 %v5485, %v5479
      %v5972 = vpack.c.b16 %v5486, %v5480
      %v5973 = vpack.c.b16 %v5487, %v5481
      %v5974 = vpack.c.b16 %v5488, %v5482
      %v5975 = vpack.c.b16 %v5489, %v5483
      %v5976 = vpack.c.b16 %v5496, %v5490
      %v5977 = vpack.c.b16 %v5497, %v5491
      %v5978 = vpack.c.b16 %v5498, %v5492
      %v5979 = vpack.c.b16 %v5499, %v5493
      %v5980 = vpack.c.b16 %v5500, %v5494
      %v5981 = vpack.c.b16 %v5501, %v5495
      %v5982 = vpack.c.b16 %v5508, %v5502
      %v5983 = vpack.c.b16 %v5509, %v5503
      %v5984 = vpack.c.b16 %v5510, %v5504
      %v5985 = vpack.c.b16 %v5511, %v5505
      %v5986 = vpack.c.b16 %v5512, %v5506
      %v5987 = vpack.c.b16 %v5513, %v5507
      %v5988 = vpack.c.b16 %v5520, %v5514
      %v5989 = vpack.c.b16 %v5521, %v5515
      %v5990 = vpack.c.b16 %v5522, %v5516
      %v5991 = vpack.c.b16 %v5523, %v5517
      %v5992 = vpack.c.b16 %v5524, %v5518
      %v5993 = vpack.c.b16 %v5525, %v5519
      %v5994 = vpack.c.b16 %v5532, %v5526
      %v5995 = vpack.c.b16 %v5533, %v5527
      %v5996 = vpack.c.b16 %v5534, %v5528
      %v5997 = vpack.c.b16 %v5535, %v5529
      %v5998 = vpack.c.b16 %v5536, %v5530
      %v5999 = vpack.c.b16 %v5537, %v5531
      %v6000 = vpack.c.b16 %v5544, %v5538
      %v6001 = vpack.c.b16 %v5545, %v5539
      %v6002 = vpack.c.b16 %v5546, %v5540
      %v6003 = vpack.c.b16 %v5547, %v5541
      %v6004 = vpack.c.b16 %v5548, %v5542
      %v6005 = vpack.c.b16 %v5549, %v5543
      %v6006 = vpack.c.b16 %v5556, %v5550
      %v6007 = vpack.c.b16 %v5557, %v5551
      %v6008 = vpack.c.b16 %v5558, %v5552
      %v6009 = vpack.c.b16 %v5559, %v5553
      %v6010 = vpack.c.b16 %v5560, %v5554
      %v6011 = vpack.c.b16 %v5561, %v5555
      %v6012 = vpack.c.b16 %v5568, %v5562
      %v6013 = vpack.c.b16 %v5569, %v5563
      %v6014 = vpack.c.b16 %v5570, %v5564
      %v6015 = vpack.c.b16 %v5571, %v5565
      %v6016 = vpack.c.b16 %v5572, %v5566
      %v6017 = vpack.c.b16 %v5573, %v5567
      %v6018 = vpack.c.b16 %v5580, %v5574
      %v6019 = vpack.c.b16 %v5581, %v5575
      %v6020 = vpack.c.b16 %v5582, %v5576
      %v6021 = vpack.c.b16 %v5583, %v5577
      %v6022 = vpack.c.b16 %v5584, %v5578
      %v6023 = vpack.c.b16 %v5585, %v5579
      %v6024 = vpack.c.b16 %v5592, %v5586
      %v6025 = vpack.c.b16 %v5593, %v5587
      %v6026 = vpack.c.b16 %v5594, %v5588
      %v6027 = vpack.c.b16 %v5595, %v5589
      %v6028 = vpack.c.b16 %v5596, %v5590
      %v6029 = vpack.c.b16 %v5597, %v5591
      %v6030 = vpack.c.b16 %v5604, %v5598
      %v6031 = vpack.c.b16 %v5605, %v5599
      %v6032 = vpack.c.b16 %v5606, %v5600
      %v6033 = vpack.c.b16 %v5607, %v5601
      %v6034 = vpack.c.b16 %v5608, %v5602
      %v6035 = vpack.c.b16 %v5609, %v5603
      %v6036 = vpack.c.b16 %v5616, %v5610
      %v6037 = vpack.c.b16 %v5617, %v5611
      %v6038 = vpack.c.b16 %v5618, %v5612
      %v6039 = vpack.c.b16 %v5619, %v5613
      %v6040 = vpack.c.b16 %v5620, %v5614
      %v6041 = vpack.c.b16 %v5621, %v5615
      %v6042 = vpack.c.b16 %v5628, %v5622
      %v6043 = vpack.c.b16 %v5629, %v5623
      %v6044 = vpack.c.b16 %v5630, %v5624
      %v6045 = vpack.c.b16 %v5631, %v5625
      %v6046 = vpack.c.b16 %v5632, %v5626
      %v6047 = vpack.c.b16 %v5633, %v5627
      %v6048 = vpack.c.b16 %v5640, %v5634
      %v6049 = vpack.c.b16 %v5641, %v5635
      %v6050 = vpack.c.b16 %v5642, %v5636
      %v6051 = vpack.c.b16 %v5643, %v5637
      %v6052 = vpack.c.b16 %v5644, %v5638
      %v6053 = vpack.c.b16 %v5645, %v5639
      %v6054 = vpack.c.b16 %v5652, %v5646
      %v6055 = vpack.c.b16 %v5653, %v5647
      %v6056 = vpack.c.b16 %v5654, %v5648
      %v6057 = vpack.c.b16 %v5655, %v5649
      %v6058 = vpack.c.b16 %v5656, %v5650
      %v6059 = vpack.c.b16 %v5657, %v5651
      %v6060 = vpack.c.b16 %v5664, %v5658
      %v6061 = vpack.c.b16 %v5665, %v5659
      %v6062 = vpack.c.b16 %v5666, %v5660
      %v6063 = vpack.c.b16 %v5667, %v5661
      %v6064 = vpack.c.b16 %v5668, %v5662
      %v6065 = vpack.c.b16 %v5669, %v5663
      %v6066 = vpack.c.b16 %v5676, %v5670
      %v6067 = vpack.c.b16 %v5677, %v5671
      %v6068 = vpack.c.b16 %v5678, %v5672
      %v6069 = vpack.c.b16 %v5679, %v5673
      %v6070 = vpack.c.b16 %v5680, %v5674
      %v6071 = vpack.c.b16 %v5681, %v5675
      %v6072 = vpack.c.b16 %v5688, %v5682
      %v6073 = vpack.c.b16 %v5689, %v5683
      %v6074 = vpack.c.b16 %v5690, %v5684
      %v6075 = vpack.c.b16 %v5691, %v5685
      %v6076 = vpack.c.b16 %v5692, %v5686
      %v6077 = vpack.c.b16 %v5693, %v5687
      %v6078 = vpack.c.b16 %v5700, %v5694
      %v6079 = vpack.c.b16 %v5701, %v5695
      %v6080 = vpack.c.b16 %v5702, %v5696
      %v6081 = vpack.c.b16 %v5703, %v5697
      %v6082 = vpack.c.b16 %v5704, %v5698
      %v6083 = vpack.c.b16 %v5705, %v5699
      %v6084 = vpack.c.b16 %v5712, %v5706
      %v6085 = vpack.c.b16 %v5713, %v5707
      %v6086 = vpack.c.b16 %v5714, %v5708
      %v6087 = vpack.c.b16 %v5715, %v5709
      %v6088 = vpack.c.b16 %v5716, %v5710
      %v6089 = vpack.c.b16 %v5717, %v5711
      %v6090 = vpack.c.b16 %v5724, %v5718
      %v6091 = vpack.c.b16 %v5725, %v5719
      %v6092 = vpack.c.b16 %v5726, %v5720
      %v6093 = vpack.c.b16 %v5727, %v5721
      %v6094 = vpack.c.b16 %v5728, %v5722
      %v6095 = vpack.c.b16 %v5729, %v5723
      %v6096 = vpack.c.b16 %v5736, %v5730
      %v6097 = vpack.c.b16 %v5737, %v5731
      %v6098 = vpack.c.b16 %v5738, %v5732
      %v6099 = vpack.c.b16 %v5739, %v5733
      %v6100 = vpack.c.b16 %v5740, %v5734
      %v6101 = vpack.c.b16 %v5741, %v5735
      %v6102 = vpack.c.b16 %v5748, %v5742
      %v6103 = vpack.c.b16 %v5749, %v5743
      %v6104 = vpack.c.b16 %v5750, %v5744
      %v6105 = vpack.c.b16 %v5751, %v5745
      %v6106 = vpack.c.b16 %v5752, %v5746
      %v6107 = vpack.c.b16 %v5753, %v5747
      %v6108 = vpack.c.b16 %v5760, %v5754
      %v6109 = vpack.c.b16 %v5761, %v5755
      %v6110 = vpack.c.b16 %v5762, %v5756
      %v6111 = vpack.c.b16 %v5763, %v5757
      %v6112 = vpack.c.b16 %v5764, %v5758
      %v6113 = vpack.c.b16 %v5765, %v5759
      %v6114 = vpack.c.b16 %v5772, %v5766
      %v6115 = vpack.c.b16 %v5773, %v5767
      %v6116 = vpack.c.b16 %v5774, %v5768
      %v6117 = vpack.c.b16 %v5775, %v5769
      %v6118 = vpack.c.b16 %v5776, %v5770
      %v6119 = vpack.c.b16 %v5777, %v5771
      %v6120 = vpack.c.b16 %v5784, %v5778
      %v6121 = vpack.c.b16 %v5785, %v5779
      %v6122 = vpack.c.b16 %v5786, %v5780
      %v6123 = vpack.c.b16 %v5787, %v5781
      %v6124 = vpack.c.b16 %v5788, %v5782
      %v6125 = vpack.c.b16 %v5789, %v5783
      %v6126 = vpack.c.b16 %v5796, %v5790
      %v6127 = vpack.c.b16 %v5797, %v5791
      %v6128 = vpack.c.b16 %v5798, %v5792
      %v6129 = vpack.c.b16 %v5799, %v5793
      %v6130 = vpack.c.b16 %v5800, %v5794
      %v6131 = vpack.c.b16 %v5801, %v5795
      %v6132 = vpack.c.b16 %v5808, %v5802
      %v6133 = vpack.c.b16 %v5809, %v5803
      %v6134 = vpack.c.b16 %v5810, %v5804
      %v6135 = vpack.c.b16 %v5811, %v5805
      %v6136 = vpack.c.b16 %v5812, %v5806
      %v6137 = vpack.c.b16 %v5813, %v5807
      %v6138 = vpack.c.b16 %v5820, %v5814
      %v6139 = vpack.c.b16 %v5821, %v5815
      %v6140 = vpack.c.b16 %v5822, %v5816
      %v6141 = vpack.c.b16 %v5823, %v5817
      %v6142 = vpack.c.b16 %v5824, %v5818
      %v6143 = vpack.c.b16 %v5825, %v5819
      %v6144 = vpack.c.b16 %v5832, %v5826
      %v6145 = vpack.c.b16 %v5833, %v5827
      %v6146 = vpack.c.b16 %v5834, %v5828
      %v6147 = vpack.c.b16 %v5835, %v5829
      %v6148 = vpack.c.b16 %v5836, %v5830
      %v6149 = vpack.c.b16 %v5837, %v5831
      %v6150 = vpack.c.b16 %v5844, %v5838
      %v6151 = vpack.c.b16 %v5845, %v5839
      %v6152 = vpack.c.b16 %v5846, %v5840
      %v6153 = vpack.c.b16 %v5847, %v5841
      %v6154 = vpack.c.b16 %v5848, %v5842
      %v6155 = vpack.c.b16 %v5849, %v5843
      %v6156 = vpack.c.b16 %v5856, %v5850
      %v6157 = vpack.c.b16 %v5857, %v5851
      %v6158 = vpack.c.b16 %v5858, %v5852
      %v6159 = vpack.c.b16 %v5859, %v5853
      %v6160 = vpack.c.b16 %v5860, %v5854
      %v6161 = vpack.c.b16 %v5861, %v5855
      %v6162 = vpack.c.b16 %v5868, %v5862
      %v6163 = vpack.c.b16 %v5869, %v5863
      %v6164 = vpack.c.b16 %v5870, %v5864
      %v6165 = vpack.c.b16 %v5871, %v5865
      %v6166 = vpack.c.b16 %v5872, %v5866
      %v6167 = vpack.c.b16 %v5873, %v5867
      %v6168 = vpack.c.b16 %v5880, %v5874
      %v6169 = vpack.c.b16 %v5881, %v5875
      %v6170 = vpack.c.b16 %v5882, %v5876
      %v6171 = vpack.c.b16 %v5883, %v5877
      %v6172 = vpack.c.b16 %v5884, %v5878
      %v6173 = vpack.c.b16 %v5885, %v5879
      %6462 = vmatprep.subr.bf16.mxu0 %v5887
      %6463 = vmatpush1.bf16.msra.mxu0 %v5886
      %6464 = vmatprep.subr.bf16.mxu0 %v5893
      %6465 = vmatpush1.bf16.msra.mxu0 %v5892
      %6466 = vmatprep.subr.bf16.mxu0 %v5899
      %6467 = vmatpush1.bf16.msra.mxu0 %v5898
      %6468 = vmatprep.subr.bf16.mxu0 %v5905
      %6469 = vmatpush1.bf16.msra.mxu0 %v5904
      %6470 = vmatprep.subr.bf16.mxu0 %v5911
      %6471 = vmatpush1.bf16.msra.mxu0 %v5910
      %6472 = vmatprep.subr.bf16.mxu0 %v5917
      %6473 = vmatpush1.bf16.msra.mxu0 %v5916
      %6474 = vmatprep.subr.bf16.mxu0 %v5923
      %6475 = vmatpush1.bf16.msra.mxu0 %v5922
      %6476 = vmatprep.subr.bf16.mxu0 %v5929
      %6477 = vmatpush1.bf16.msra.mxu0 %v5928
      %6478 = vmatprep.subr.bf16.mxu0 %v5935
      %6479 = vmatpush1.bf16.msra.mxu0 %v5934
      %6480 = vmatprep.subr.bf16.mxu0 %v5941
      %6481 = vmatpush1.bf16.msra.mxu0 %v5940
      %6482 = vmatprep.subr.bf16.mxu0 %v5947
      %6483 = vmatpush1.bf16.msra.mxu0 %v5946
      %6484 = vmatprep.subr.bf16.mxu0 %v5953
      %6485 = vmatpush1.bf16.msra.mxu0 %v5952
      %6486 = vmatprep.subr.bf16.mxu0 %v5959
      %6487 = vmatpush1.bf16.msra.mxu0 %v5958
      %6488 = vmatprep.subr.bf16.mxu0 %v5965
      %6489 = vmatpush1.bf16.msra.mxu0 %v5964
      %6490 = vmatprep.subr.bf16.mxu0 %v5971
      %6491 = vmatpush1.bf16.msra.mxu0 %v5970
      %6492 = vmatprep.subr.bf16.mxu0 %v5977
      %6493 = vmatpush1.bf16.msra.mxu0 %v5976
      %6494 = vmatprep.mubr.bf16.mxu0 %v717
      %6495 = vmatmul.mubr.bf16.gmra.mrb[0].mxu0 %v716
      %v6496 = vpop.f32.mrb[0].mxu0
      %v6497 = vadd.f32 %v4995, %v6496
      %v6498 = vpop.f32.mrb[0].mxu0
      %v6499 = vadd.f32 %v4999, %v6498
      %v6500 = vpop.f32.mrb[0].mxu0
      %v6501 = vadd.f32 %v4995, %v6500
      %v6502 = vpop.f32.mrb[0].mxu0
      %v6503 = vadd.f32 %v4999, %v6502
      %6504 = vdwg.mxu0
      %6505 = vmatprep.subr.bf16.mxu0 %v5983
      %6506 = vmatpush1.bf16.msra.mxu0 %v5982
      %6507 = vmatprep.subr.bf16.mxu0 %v5989
      %6508 = vmatpush1.bf16.msra.mxu0 %v5988
      %6509 = vmatprep.subr.bf16.mxu0 %v5995
      %6510 = vmatpush1.bf16.msra.mxu0 %v5994
      %6511 = vmatprep.subr.bf16.mxu0 %v6001
      %6512 = vmatpush1.bf16.msra.mxu0 %v6000
      %6513 = vmatprep.subr.bf16.mxu0 %v6007
      %6514 = vmatpush1.bf16.msra.mxu0 %v6006
      %6515 = vmatprep.subr.bf16.mxu0 %v6013
      %6516 = vmatpush1.bf16.msra.mxu0 %v6012
      %6517 = vmatprep.subr.bf16.mxu0 %v6019
      %6518 = vmatpush1.bf16.msra.mxu0 %v6018
      %6519 = vmatprep.subr.bf16.mxu0 %v6025
      %6520 = vmatpush1.bf16.msra.mxu0 %v6024
      %6521 = vmatprep.subr.bf16.mxu0 %v6031
      %6522 = vmatpush1.bf16.msra.mxu0 %v6030
      %6523 = vmatprep.subr.bf16.mxu0 %v6037
      %6524 = vmatpush1.bf16.msra.mxu0 %v6036
      %6525 = vmatprep.subr.bf16.mxu0 %v6043
      %6526 = vmatpush1.bf16.msra.mxu0 %v6042
      %6527 = vmatprep.subr.bf16.mxu0 %v6049
      %6528 = vmatpush1.bf16.msra.mxu0 %v6048
      %6529 = vmatprep.subr.bf16.mxu0 %v6055
      %6530 = vmatpush1.bf16.msra.mxu0 %v6054
      %6531 = vmatprep.subr.bf16.mxu0 %v6061
      %6532 = vmatpush1.bf16.msra.mxu0 %v6060
      %6533 = vmatprep.subr.bf16.mxu0 %v6067
      %6534 = vmatpush1.bf16.msra.mxu0 %v6066
      %6535 = vmatprep.subr.bf16.mxu0 %v6073
      %6536 = vmatpush1.bf16.msra.mxu0 %v6072
      %6537 = vmatprep.mubr.bf16.mxu0 %v719
      %6538 = vmatmul.mubr.bf16.gmra.mrb[0].mxu0 %v718
      %v6539 = vpop.f32.mrb[0].mxu0
      %v6540 = vadd.f32 %v6497, %v6539
      %v6541 = vpop.f32.mrb[0].mxu0
      %v6542 = vadd.f32 %v6499, %v6541
      %v6543 = vpop.f32.mrb[0].mxu0
      %v6544 = vadd.f32 %v6501, %v6543
      %v6545 = vpop.f32.mrb[0].mxu0
      %v6546 = vadd.f32 %v6503, %v6545
      %6547 = vdwg.mxu0
      %6548 = vmatprep.subr.bf16.mxu0 %v6079
      %6549 = vmatpush1.bf16.msra.mxu0 %v6078
      %6550 = vmatprep.subr.bf16.mxu0 %v6085
      %6551 = vmatpush1.bf16.msra.mxu0 %v6084
      %6552 = vmatprep.subr.bf16.mxu0 %v6091
      %6553 = vmatpush1.bf16.msra.mxu0 %v6090
      %6554 = vmatprep.subr.bf16.mxu0 %v6097
      %6555 = vmatpush1.bf16.msra.mxu0 %v6096
      %6556 = vmatprep.subr.bf16.mxu0 %v6103
      %6557 = vmatpush1.bf16.msra.mxu0 %v6102
      %6558 = vmatprep.subr.bf16.mxu0 %v6109
      %6559 = vmatpush1.bf16.msra.mxu0 %v6108
      %6560 = vmatprep.subr.bf16.mxu0 %v6115
      %6561 = vmatpush1.bf16.msra.mxu0 %v6114
      %6562 = vmatprep.subr.bf16.mxu0 %v6121
      %6563 = vmatpush1.bf16.msra.mxu0 %v6120
      %6564 = vmatprep.subr.bf16.mxu0 %v6127
      %6565 = vmatpush1.bf16.msra.mxu0 %v6126
      %6566 = vmatprep.subr.bf16.mxu0 %v6133
      %6567 = vmatpush1.bf16.msra.mxu0 %v6132
      %6568 = vmatprep.subr.bf16.mxu0 %v6139
      %6569 = vmatpush1.bf16.msra.mxu0 %v6138
      %6570 = vmatprep.subr.bf16.mxu0 %v6145
      %6571 = vmatpush1.bf16.msra.mxu0 %v6144
      %6572 = vmatprep.subr.bf16.mxu0 %v6151
      %6573 = vmatpush1.bf16.msra.mxu0 %v6150
      %6574 = vmatprep.subr.bf16.mxu0 %v6157
      %6575 = vmatpush1.bf16.msra.mxu0 %v6156
      %6576 = vmatprep.subr.bf16.mxu0 %v6163
      %6577 = vmatpush1.bf16.msra.mxu0 %v6162
      %6578 = vmatprep.subr.bf16.mxu0 %v6169
      %6579 = vmatpush1.bf16.msra.mxu0 %v6168
      %6580 = vmatprep.mubr.bf16.mxu0 %v721
      %6581 = vmatmul.mubr.bf16.gmra.mrb[0].mxu0 %v720
      %v6582 = vpop.f32.mrb[0].mxu0
      %v6583 = vadd.f32 %v6540, %v6582
      %v6584 = vpop.f32.mrb[0].mxu0
      %v6585 = vadd.f32 %v6542, %v6584
      %v6586 = vpop.f32.mrb[0].mxu0
      %v6587 = vadd.f32 %v6544, %v6586
      %v6588 = vpop.f32.mrb[0].mxu0
      %v6589 = vadd.f32 %v6546, %v6588
      %6590 = vdwg.mxu0
      %6591 = vmatprep.subr.bf16.mxu0 %v5889
      %6592 = vmatpush1.bf16.msra.mxu0 %v5888
      %6593 = vmatprep.subr.bf16.mxu0 %v5895
      %6594 = vmatpush1.bf16.msra.mxu0 %v5894
      %6595 = vmatprep.subr.bf16.mxu0 %v5901
      %6596 = vmatpush1.bf16.msra.mxu0 %v5900
      %6597 = vmatprep.subr.bf16.mxu0 %v5907
      %6598 = vmatpush1.bf16.msra.mxu0 %v5906
      %6599 = vmatprep.subr.bf16.mxu0 %v5913
      %6600 = vmatpush1.bf16.msra.mxu0 %v5912
      %6601 = vmatprep.subr.bf16.mxu0 %v5919
      %6602 = vmatpush1.bf16.msra.mxu0 %v5918
      %6603 = vmatprep.subr.bf16.mxu0 %v5925
      %6604 = vmatpush1.bf16.msra.mxu0 %v5924
      %6605 = vmatprep.subr.bf16.mxu0 %v5931
      %6606 = vmatpush1.bf16.msra.mxu0 %v5930
      %6607 = vmatprep.subr.bf16.mxu0 %v5937
      %6608 = vmatpush1.bf16.msra.mxu0 %v5936
      %6609 = vmatprep.subr.bf16.mxu0 %v5943
      %6610 = vmatpush1.bf16.msra.mxu0 %v5942
      %6611 = vmatprep.subr.bf16.mxu0 %v5949
      %6612 = vmatpush1.bf16.msra.mxu0 %v5948
      %6613 = vmatprep.subr.bf16.mxu0 %v5955
      %6614 = vmatpush1.bf16.msra.mxu0 %v5954
      %6615 = vmatprep.subr.bf16.mxu0 %v5961
      %6616 = vmatpush1.bf16.msra.mxu0 %v5960
      %6617 = vmatprep.subr.bf16.mxu0 %v5967
      %6618 = vmatpush1.bf16.msra.mxu0 %v5966
      %6619 = vmatprep.subr.bf16.mxu0 %v5973
      %6620 = vmatpush1.bf16.msra.mxu0 %v5972
      %6621 = vmatprep.subr.bf16.mxu0 %v5979
      %6622 = vmatpush1.bf16.msra.mxu0 %v5978
      %6623 = vmatprep.mubr.bf16.mxu0 %v717
      %6624 = vmatmul.mubr.bf16.gmra.mrb[0].mxu0 %v716
      %v6625 = vpop.f32.mrb[0].mxu0
      %v6626 = vadd.f32 %v5003, %v6625
      %v6627 = vpop.f32.mrb[0].mxu0
      %v6628 = vadd.f32 %v5007, %v6627
      %v6629 = vpop.f32.mrb[0].mxu0
      %v6630 = vadd.f32 %v5003, %v6629
      %v6631 = vpop.f32.mrb[0].mxu0
      %v6632 = vadd.f32 %v5007, %v6631
      %6633 = vdwg.mxu0
      %6634 = vmatprep.subr.bf16.mxu0 %v5985
      %6635 = vmatpush1.bf16.msra.mxu0 %v5984
      %6636 = vmatprep.subr.bf16.mxu0 %v5991
      %6637 = vmatpush1.bf16.msra.mxu0 %v5990
      %6638 = vmatprep.subr.bf16.mxu0 %v5997
      %6639 = vmatpush1.bf16.msra.mxu0 %v5996
      %6640 = vmatprep.subr.bf16.mxu0 %v6003
      %6641 = vmatpush1.bf16.msra.mxu0 %v6002
      %6642 = vmatprep.subr.bf16.mxu0 %v6009
      %6643 = vmatpush1.bf16.msra.mxu0 %v6008
      %6644 = vmatprep.subr.bf16.mxu0 %v6015
      %6645 = vmatpush1.bf16.msra.mxu0 %v6014
      %6646 = vmatprep.subr.bf16.mxu0 %v6021
      %6647 = vmatpush1.bf16.msra.mxu0 %v6020
      %6648 = vmatprep.subr.bf16.mxu0 %v6027
      %6649 = vmatpush1.bf16.msra.mxu0 %v6026
      %6650 = vmatprep.subr.bf16.mxu0 %v6033
      %6651 = vmatpush1.bf16.msra.mxu0 %v6032
      %6652 = vmatprep.subr.bf16.mxu0 %v6039
      %6653 = vmatpush1.bf16.msra.mxu0 %v6038
      %6654 = vmatprep.subr.bf16.mxu0 %v6045
      %6655 = vmatpush1.bf16.msra.mxu0 %v6044
      %6656 = vmatprep.subr.bf16.mxu0 %v6051
      %6657 = vmatpush1.bf16.msra.mxu0 %v6050
      %6658 = vmatprep.subr.bf16.mxu0 %v6057
      %6659 = vmatpush1.bf16.msra.mxu0 %v6056
      %6660 = vmatprep.subr.bf16.mxu0 %v6063
      %6661 = vmatpush1.bf16.msra.mxu0 %v6062
      %6662 = vmatprep.subr.bf16.mxu0 %v6069
      %6663 = vmatpush1.bf16.msra.mxu0 %v6068
      %6664 = vmatprep.subr.bf16.mxu0 %v6075
      %6665 = vmatpush1.bf16.msra.mxu0 %v6074
      %6666 = vmatprep.mubr.bf16.mxu0 %v719
      %6667 = vmatmul.mubr.bf16.gmra.mrb[0].mxu0 %v718
      %v6668 = vpop.f32.mrb[0].mxu0
      %v6669 = vadd.f32 %v6626, %v6668
      %v6670 = vpop.f32.mrb[0].mxu0
      %v6671 = vadd.f32 %v6628, %v6670
      %v6672 = vpop.f32.mrb[0].mxu0
      %v6673 = vadd.f32 %v6630, %v6672
      %v6674 = vpop.f32.mrb[0].mxu0
      %v6675 = vadd.f32 %v6632, %v6674
      %6676 = vdwg.mxu0
      %6677 = vmatprep.subr.bf16.mxu0 %v6081
      %6678 = vmatpush1.bf16.msra.mxu0 %v6080
      %6679 = vmatprep.subr.bf16.mxu0 %v6087
      %6680 = vmatpush1.bf16.msra.mxu0 %v6086
      %6681 = vmatprep.subr.bf16.mxu0 %v6093
      %6682 = vmatpush1.bf16.msra.mxu0 %v6092
      %6683 = vmatprep.subr.bf16.mxu0 %v6099
      %6684 = vmatpush1.bf16.msra.mxu0 %v6098
      %6685 = vmatprep.subr.bf16.mxu0 %v6105
      %6686 = vmatpush1.bf16.msra.mxu0 %v6104
      %6687 = vmatprep.subr.bf16.mxu0 %v6111
      %6688 = vmatpush1.bf16.msra.mxu0 %v6110
      %6689 = vmatprep.subr.bf16.mxu0 %v6117
      %6690 = vmatpush1.bf16.msra.mxu0 %v6116
      %6691 = vmatprep.subr.bf16.mxu0 %v6123
      %6692 = vmatpush1.bf16.msra.mxu0 %v6122
      %6693 = vmatprep.subr.bf16.mxu0 %v6129
      %6694 = vmatpush1.bf16.msra.mxu0 %v6128
      %6695 = vmatprep.subr.bf16.mxu0 %v6135
      %6696 = vmatpush1.bf16.msra.mxu0 %v6134
      %6697 = vmatprep.subr.bf16.mxu0 %v6141
      %6698 = vmatpush1.bf16.msra.mxu0 %v6140
      %6699 = vmatprep.subr.bf16.mxu0 %v6147
      %6700 = vmatpush1.bf16.msra.mxu0 %v6146
      %6701 = vmatprep.subr.bf16.mxu0 %v6153
      %6702 = vmatpush1.bf16.msra.mxu0 %v6152
      %6703 = vmatprep.subr.bf16.mxu0 %v6159
      %6704 = vmatpush1.bf16.msra.mxu0 %v6158
      %6705 = vmatprep.subr.bf16.mxu0 %v6165
      %6706 = vmatpush1.bf16.msra.mxu0 %v6164
      %6707 = vmatprep.subr.bf16.mxu0 %v6171
      %6708 = vmatpush1.bf16.msra.mxu0 %v6170
      %6709 = vmatprep.mubr.bf16.mxu0 %v721
      %6710 = vmatmul.mubr.bf16.gmra.mrb[0].mxu0 %v720
      %v6711 = vpop.f32.mrb[0].mxu0
      %v6712 = vadd.f32 %v6669, %v6711
      %v6713 = vpop.f32.mrb[0].mxu0
      %v6714 = vadd.f32 %v6671, %v6713
      %v6715 = vpop.f32.mrb[0].mxu0
      %v6716 = vadd.f32 %v6673, %v6715
      %v6717 = vpop.f32.mrb[0].mxu0
      %v6718 = vadd.f32 %v6675, %v6717
      %6719 = vdwg.mxu0
      %6720 = vmatprep.subr.bf16.mxu0 %v5891
      %6721 = vmatpush1.bf16.msra.mxu0 %v5890
      %6722 = vmatprep.subr.bf16.mxu0 %v5897
      %6723 = vmatpush1.bf16.msra.mxu0 %v5896
      %6724 = vmatprep.subr.bf16.mxu0 %v5903
      %6725 = vmatpush1.bf16.msra.mxu0 %v5902
      %6726 = vmatprep.subr.bf16.mxu0 %v5909
      %6727 = vmatpush1.bf16.msra.mxu0 %v5908
      %6728 = vmatprep.subr.bf16.mxu0 %v5915
      %6729 = vmatpush1.bf16.msra.mxu0 %v5914
      %6730 = vmatprep.subr.bf16.mxu0 %v5921
      %6731 = vmatpush1.bf16.msra.mxu0 %v5920
      %6732 = vmatprep.subr.bf16.mxu0 %v5927
      %6733 = vmatpush1.bf16.msra.mxu0 %v5926
      %6734 = vmatprep.subr.bf16.mxu0 %v5933
      %6735 = vmatpush1.bf16.msra.mxu0 %v5932
      %6736 = vmatprep.subr.bf16.mxu0 %v5939
      %6737 = vmatpush1.bf16.msra.mxu0 %v5938
      %6738 = vmatprep.subr.bf16.mxu0 %v5945
      %6739 = vmatpush1.bf16.msra.mxu0 %v5944
      %6740 = vmatprep.subr.bf16.mxu0 %v5951
      %6741 = vmatpush1.bf16.msra.mxu0 %v5950
      %6742 = vmatprep.subr.bf16.mxu0 %v5957
      %6743 = vmatpush1.bf16.msra.mxu0 %v5956
      %6744 = vmatprep.subr.bf16.mxu0 %v5963
      %6745 = vmatpush1.bf16.msra.mxu0 %v5962
      %6746 = vmatprep.subr.bf16.mxu0 %v5969
      %6747 = vmatpush1.bf16.msra.mxu0 %v5968
      %6748 = vmatprep.subr.bf16.mxu0 %v5975
      %6749 = vmatpush1.bf16.msra.mxu0 %v5974
      %6750 = vmatprep.subr.bf16.mxu0 %v5981
      %6751 = vmatpush1.bf16.msra.mxu0 %v5980
      %6752 = vmatprep.mubr.bf16.mxu0 %v717
      %6753 = vmatmul.mubr.bf16.gmra.mrb[0].mxu0 %v716
      %v6754 = vpop.f32.mrb[0].mxu0
      %v6755 = vadd.f32 %v5011, %v6754
      %v6756 = vpop.f32.mrb[0].mxu0
      %v6757 = vadd.f32 %v5015, %v6756
      %v6758 = vpop.f32.mrb[0].mxu0
      %v6759 = vadd.f32 %v5011, %v6758
      %v6760 = vpop.f32.mrb[0].mxu0
      %v6761 = vadd.f32 %v5015, %v6760
      %6762 = vdwg.mxu0
      %6763 = vmatprep.subr.bf16.mxu0 %v5987
      %6764 = vmatpush1.bf16.msra.mxu0 %v5986
      %6765 = vmatprep.subr.bf16.mxu0 %v5993
      %6766 = vmatpush1.bf16.msra.mxu0 %v5992
      %6767 = vmatprep.subr.bf16.mxu0 %v5999
      %6768 = vmatpush1.bf16.msra.mxu0 %v5998
      %6769 = vmatprep.subr.bf16.mxu0 %v6005
      %6770 = vmatpush1.bf16.msra.mxu0 %v6004
      %6771 = vmatprep.subr.bf16.mxu0 %v6011
      %6772 = vmatpush1.bf16.msra.mxu0 %v6010
      %6773 = vmatprep.subr.bf16.mxu0 %v6017
      %6774 = vmatpush1.bf16.msra.mxu0 %v6016
      %6775 = vmatprep.subr.bf16.mxu0 %v6023
      %6776 = vmatpush1.bf16.msra.mxu0 %v6022
      %6777 = vmatprep.subr.bf16.mxu0 %v6029
      %6778 = vmatpush1.bf16.msra.mxu0 %v6028
      %6779 = vmatprep.subr.bf16.mxu0 %v6035
      %6780 = vmatpush1.bf16.msra.mxu0 %v6034
      %6781 = vmatprep.subr.bf16.mxu0 %v6041
      %6782 = vmatpush1.bf16.msra.mxu0 %v6040
      %6783 = vmatprep.subr.bf16.mxu0 %v6047
      %6784 = vmatpush1.bf16.msra.mxu0 %v6046
      %6785 = vmatprep.subr.bf16.mxu0 %v6053
      %6786 = vmatpush1.bf16.msra.mxu0 %v6052
      %6787 = vmatprep.subr.bf16.mxu0 %v6059
      %6788 = vmatpush1.bf16.msra.mxu0 %v6058
      %6789 = vmatprep.subr.bf16.mxu0 %v6065
      %6790 = vmatpush1.bf16.msra.mxu0 %v6064
      %6791 = vmatprep.subr.bf16.mxu0 %v6071
      %6792 = vmatpush1.bf16.msra.mxu0 %v6070
      %6793 = vmatprep.subr.bf16.mxu0 %v6077
      %6794 = vmatpush1.bf16.msra.mxu0 %v6076
      %6795 = vmatprep.mubr.bf16.mxu0 %v719
      %6796 = vmatmul.mubr.bf16.gmra.mrb[0].mxu0 %v718
      %v6797 = vpop.f32.mrb[0].mxu0
      %v6798 = vadd.f32 %v6755, %v6797
      %v6799 = vpop.f32.mrb[0].mxu0
      %v6800 = vadd.f32 %v6757, %v6799
      %v6801 = vpop.f32.mrb[0].mxu0
      %v6802 = vadd.f32 %v6759, %v6801
      %v6803 = vpop.f32.mrb[0].mxu0
      %v6804 = vadd.f32 %v6761, %v6803
      %6805 = vdwg.mxu0
      %6806 = vmatprep.subr.bf16.mxu0 %v6083
      %6807 = vmatpush1.bf16.msra.mxu0 %v6082
      %6808 = vmatprep.subr.bf16.mxu0 %v6089
      %6809 = vmatpush1.bf16.msra.mxu0 %v6088
      %6810 = vmatprep.subr.bf16.mxu0 %v6095
      %6811 = vmatpush1.bf16.msra.mxu0 %v6094
      %6812 = vmatprep.subr.bf16.mxu0 %v6101
      %6813 = vmatpush1.bf16.msra.mxu0 %v6100
      %6814 = vmatprep.subr.bf16.mxu0 %v6107
      %6815 = vmatpush1.bf16.msra.mxu0 %v6106
      %6816 = vmatprep.subr.bf16.mxu0 %v6113
      %6817 = vmatpush1.bf16.msra.mxu0 %v6112
      %6818 = vmatprep.subr.bf16.mxu0 %v6119
      %6819 = vmatpush1.bf16.msra.mxu0 %v6118
      %6820 = vmatprep.subr.bf16.mxu0 %v6125
      %6821 = vmatpush1.bf16.msra.mxu0 %v6124
      %6822 = vmatprep.subr.bf16.mxu0 %v6131
      %6823 = vmatpush1.bf16.msra.mxu0 %v6130
      %6824 = vmatprep.subr.bf16.mxu0 %v6137
      %6825 = vmatpush1.bf16.msra.mxu0 %v6136
      %6826 = vmatprep.subr.bf16.mxu0 %v6143
      %6827 = vmatpush1.bf16.msra.mxu0 %v6142
      %6828 = vmatprep.subr.bf16.mxu0 %v6149
      %6829 = vmatpush1.bf16.msra.mxu0 %v6148
      %6830 = vmatprep.subr.bf16.mxu0 %v6155
      %6831 = vmatpush1.bf16.msra.mxu0 %v6154
      %6832 = vmatprep.subr.bf16.mxu0 %v6161
      %6833 = vmatpush1.bf16.msra.mxu0 %v6160
      %6834 = vmatprep.subr.bf16.mxu0 %v6167
      %6835 = vmatpush1.bf16.msra.mxu0 %v6166
      %6836 = vmatprep.subr.bf16.mxu0 %v6173
      %6837 = vmatpush1.bf16.msra.mxu0 %v6172
      %6838 = vmatprep.mubr.bf16.mxu0 %v721
      %6839 = vmatmul.mubr.bf16.gmra.mrb[0].mxu0 %v720
      %v6840 = vpop.f32.mrb[0].mxu0
      %v6841 = vadd.f32 %v6798, %v6840
      %v6842 = vpop.f32.mrb[0].mxu0
      %v6843 = vadd.f32 %v6800, %v6842
      %v6844 = vpop.f32.mrb[0].mxu0
      %v6845 = vadd.f32 %v6802, %v6844
      %v6846 = vpop.f32.mrb[0].mxu0
      %v6847 = vadd.f32 %v6804, %v6846
      %6848 = vdwg.mxu0
      %v6849 = vpack.c.bf16 %v2293, %v2289
      %v6850 = vpack.c.bf16 %v2295, %v2291
      %v6851 = vpack.c.bf16 %v2422, %v2418
      %v6852 = vpack.c.bf16 %v2424, %v2420
      %v6853 = vpack.c.bf16 %v2551, %v2547
      %v6854 = vpack.c.bf16 %v2553, %v2549
      %v6855 = vpack.c.bf16 %v4440, %v4436
      %v6856 = vpack.c.bf16 %v4442, %v4438
      %v6857 = vpack.c.bf16 %v4569, %v4565
      %v6858 = vpack.c.bf16 %v4571, %v4567
      %v6859 = vpack.c.bf16 %v4698, %v4694
      %v6860 = vpack.c.bf16 %v4700, %v4696
      %v6861 = vpack.c.bf16 %v6587, %v6583
      %v6862 = vpack.c.bf16 %v6589, %v6585
      %v6863 = vpack.c.bf16 %v6716, %v6712
      %v6864 = vpack.c.bf16 %v6718, %v6714
      %v6865 = vpack.c.bf16 %v6845, %v6841
      %v6866 = vpack.c.bf16 %v6847, %v6843
      %6867 = vmatprep.subr.bf16.mxu0 %v6856
      %6868 = vmatpush1.bf16.xpose.msra.mxu0 %v6855
      %6869 = vmatprep.subr.bf16.mxu0 0
      %6870 = vmatpush1.bf16.xpose.msra.mxu0 0
      %6871 = vmatprep.subr.bf16.mxu0 0
      %6872 = vmatpush1.bf16.xpose.msra.mxu0 0
      %6873 = vmatprep.subr.bf16.mxu0 0
      %6874 = vmatpush1.bf16.xpose.msra.mxu0 0
      %6875 = vmatprep.subr.bf16.mxu0 0
      %6876 = vmatpush1.bf16.xpose.msra.mxu0 0
      %6877 = vmatprep.subr.bf16.mxu0 0
      %6878 = vmatpush1.bf16.xpose.msra.mxu0 0
      %6879 = vmatprep.subr.bf16.mxu0 0
      %6880 = vmatpush1.bf16.xpose.msra.mxu0 0
      %6881 = vmatprep.subr.bf16.mxu0 0
      %6882 = vmatpush1.bf16.xpose.msra.mxu0 0
      %6883 = vmatprep.subr.bf16.mxu0 0
      %6884 = vmatpush1.bf16.xpose.msra.mxu0 0
      %6885 = vmatprep.subr.bf16.mxu0 0
      %6886 = vmatpush1.bf16.xpose.msra.mxu0 0
      %6887 = vmatprep.subr.bf16.mxu0 0
      %6888 = vmatpush1.bf16.xpose.msra.mxu0 0
      %6889 = vmatprep.subr.bf16.mxu0 0
      %6890 = vmatpush1.bf16.xpose.msra.mxu0 0
      %6891 = vmatprep.subr.bf16.mxu0 0
      %6892 = vmatpush1.bf16.xpose.msra.mxu0 0
      %6893 = vmatprep.subr.bf16.mxu0 0
      %6894 = vmatpush1.bf16.xpose.msra.mxu0 0
      %6895 = vmatprep.subr.bf16.mxu0 0
      %6896 = vmatpush1.bf16.xpose.msra.mxu0 0
      %6897 = vmatprep.subr.bf16.mxu0 0
      %6898 = vmatpush1.bf16.xpose.msra.mxu0 0
      %6899 = vmatprep.mubr.bf16.mxu0 %v6850
      %6900 = vmatmul.mubr.bf16.gmra.mrb[0].mxu0 %v6849
      %v6901 = vpop.f32.mrb[0].mxu0
      %v6902 = vadd.f32 0.0, %v6901
      %v6903 = vpop.f32.mrb[0].mxu0
      %v6904 = vpop.f32.mrb[0].mxu0
      %v6905 = vadd.f32 0.0, %v6904
      %v6906 = vpop.f32.mrb[0].mxu0
      %6907 = vdwg.mxu0
      %6908 = vmatprep.subr.bf16.mxu0 %v6858
      %6909 = vmatpush1.bf16.xpose.msra.mxu0 %v6857
      %6910 = vmatprep.subr.bf16.mxu0 0
      %6911 = vmatpush1.bf16.xpose.msra.mxu0 0
      %6912 = vmatprep.subr.bf16.mxu0 0
      %6913 = vmatpush1.bf16.xpose.msra.mxu0 0
      %6914 = vmatprep.subr.bf16.mxu0 0
      %6915 = vmatpush1.bf16.xpose.msra.mxu0 0
      %6916 = vmatprep.subr.bf16.mxu0 0
      %6917 = vmatpush1.bf16.xpose.msra.mxu0 0
      %6918 = vmatprep.subr.bf16.mxu0 0
      %6919 = vmatpush1.bf16.xpose.msra.mxu0 0
      %6920 = vmatprep.subr.bf16.mxu0 0
      %6921 = vmatpush1.bf16.xpose.msra.mxu0 0
      %6922 = vmatprep.subr.bf16.mxu0 0
      %6923 = vmatpush1.bf16.xpose.msra.mxu0 0
      %6924 = vmatprep.subr.bf16.mxu0 0
      %6925 = vmatpush1.bf16.xpose.msra.mxu0 0
      %6926 = vmatprep.subr.bf16.mxu0 0
      %6927 = vmatpush1.bf16.xpose.msra.mxu0 0
      %6928 = vmatprep.subr.bf16.mxu0 0
      %6929 = vmatpush1.bf16.xpose.msra.mxu0 0
      %6930 = vmatprep.subr.bf16.mxu0 0
      %6931 = vmatpush1.bf16.xpose.msra.mxu0 0
      %6932 = vmatprep.subr.bf16.mxu0 0
      %6933 = vmatpush1.bf16.xpose.msra.mxu0 0
      %6934 = vmatprep.subr.bf16.mxu0 0
      %6935 = vmatpush1.bf16.xpose.msra.mxu0 0
      %6936 = vmatprep.subr.bf16.mxu0 0
      %6937 = vmatpush1.bf16.xpose.msra.mxu0 0
      %6938 = vmatprep.subr.bf16.mxu0 0
      %6939 = vmatpush1.bf16.xpose.msra.mxu0 0
      %6940 = vmatprep.mubr.bf16.mxu0 %v6852
      %6941 = vmatmul.mubr.bf16.gmra.mrb[0].mxu0 %v6851
      %v6942 = vpop.f32.mrb[0].mxu0
      %v6943 = vadd.f32 %v6902, %v6942
      %v6944 = vpop.f32.mrb[0].mxu0
      %v6945 = vpop.f32.mrb[0].mxu0
      %v6946 = vadd.f32 %v6905, %v6945
      %v6947 = vpop.f32.mrb[0].mxu0
      %6948 = vdwg.mxu0
      %6949 = vmatprep.subr.bf16.mxu0 %v6860
      %6950 = vmatpush1.bf16.xpose.msra.mxu0 %v6859
      %6951 = vmatprep.subr.bf16.mxu0 0
      %6952 = vmatpush1.bf16.xpose.msra.mxu0 0
      %6953 = vmatprep.subr.bf16.mxu0 0
      %6954 = vmatpush1.bf16.xpose.msra.mxu0 0
      %6955 = vmatprep.subr.bf16.mxu0 0
      %6956 = vmatpush1.bf16.xpose.msra.mxu0 0
      %6957 = vmatprep.subr.bf16.mxu0 0
      %6958 = vmatpush1.bf16.xpose.msra.mxu0 0
      %6959 = vmatprep.subr.bf16.mxu0 0
      %6960 = vmatpush1.bf16.xpose.msra.mxu0 0
      %6961 = vmatprep.subr.bf16.mxu0 0
      %6962 = vmatpush1.bf16.xpose.msra.mxu0 0
      %6963 = vmatprep.subr.bf16.mxu0 0
      %6964 = vmatpush1.bf16.xpose.msra.mxu0 0
      %6965 = vmatprep.subr.bf16.mxu0 0
      %6966 = vmatpush1.bf16.xpose.msra.mxu0 0
      %6967 = vmatprep.subr.bf16.mxu0 0
      %6968 = vmatpush1.bf16.xpose.msra.mxu0 0
      %6969 = vmatprep.subr.bf16.mxu0 0
      %6970 = vmatpush1.bf16.xpose.msra.mxu0 0
      %6971 = vmatprep.subr.bf16.mxu0 0
      %6972 = vmatpush1.bf16.xpose.msra.mxu0 0
      %6973 = vmatprep.subr.bf16.mxu0 0
      %6974 = vmatpush1.bf16.xpose.msra.mxu0 0
      %6975 = vmatprep.subr.bf16.mxu0 0
      %6976 = vmatpush1.bf16.xpose.msra.mxu0 0
      %6977 = vmatprep.subr.bf16.mxu0 0
      %6978 = vmatpush1.bf16.xpose.msra.mxu0 0
      %6979 = vmatprep.subr.bf16.mxu0 0
      %6980 = vmatpush1.bf16.xpose.msra.mxu0 0
      %6981 = vmatprep.mubr.bf16.mxu0 %v6854
      %6982 = vmatmul.mubr.bf16.gmra.mrb[0].mxu0 %v6853
      %v6983 = vpop.f32.mrb[0].mxu0
      %v6984 = vadd.f32 %v6943, %v6983
      %v6985 = vpop.f32.mrb[0].mxu0
      %v6986 = vpop.f32.mrb[0].mxu0
      %v6987 = vadd.f32 %v6946, %v6986
      %v6988 = vpop.f32.mrb[0].mxu0
      %6989 = vdwg.mxu0
      %v6990 = vmul.f32 %v6984, 0.03608439
      %v6991 = vmul.f32 %v6987, 0.03608439
      %vm6992 = vcmask 130048
      %6993 = vst.msk [vmem:[%s370] sm:$0xff] %vm6992, %v6990
      %6994 = vst.msk [vmem:[%s370 + $0x8] sm:$0xff] %vm6992, %v6991
      %v6995 = vlaneseq
      %v6996 = vand.u32 %v6995, 127
      %vm6997 = vcmp.lt.s32.totalorder %v6996, 9
      %v6998 = vsel %vm6997, %v6990, -1e+30
      %vm6999 = vcmask 122880
      %v7000 = vsel %vm6999, %v6998, -inf
      %7001 = vmax.xlane.f32.xlu0 %v7000
      %v7002 = vpop.xlane.xlu0 %7001
      %v7003 = vsub.f32 %v6998, %v7002
      %v7004 = vmul.f32 %v7003, 1.442695
      %v7005 = vpow.pop %v7004
      %v7006 = vsel %vm6999, %v7005, 0.0
      %7007 = vadd.xlane.f32.xlu0 %v7006
      %v7008 = vpop.xlane.xlu0 %7007
      %v7009 = vrcp.pop %v7008
      %v7010 = vmul.f32 %v7005, %v7009
      %v7011 = vpack.c.bf16 %v7010, %v7010
      %v7013 = vsel %vm6992, %v7011, 0
      %7015 = vmatprep.subr.bf16.mxu0 %v6862
      %7016 = vmatpush1.bf16.msra.mxu0 %v6861
      %7017 = vmatprep.subr.bf16.mxu0 0
      %7018 = vmatpush1.bf16.msra.mxu0 0
      %7019 = vmatprep.subr.bf16.mxu0 0
      %7020 = vmatpush1.bf16.msra.mxu0 0
      %7021 = vmatprep.subr.bf16.mxu0 0
      %7022 = vmatpush1.bf16.msra.mxu0 0
      %7023 = vmatprep.subr.bf16.mxu0 0
      %7024 = vmatpush1.bf16.msra.mxu0 0
      %7025 = vmatprep.subr.bf16.mxu0 0
      %7026 = vmatpush1.bf16.msra.mxu0 0
      %7027 = vmatprep.subr.bf16.mxu0 0
      %7028 = vmatpush1.bf16.msra.mxu0 0
      %7029 = vmatprep.subr.bf16.mxu0 0
      %7030 = vmatpush1.bf16.msra.mxu0 0
      %7031 = vmatprep.subr.bf16.mxu0 0
      %7032 = vmatpush1.bf16.msra.mxu0 0
      %7033 = vmatprep.subr.bf16.mxu0 0
      %7034 = vmatpush1.bf16.msra.mxu0 0
      %7035 = vmatprep.subr.bf16.mxu0 0
      %7036 = vmatpush1.bf16.msra.mxu0 0
      %7037 = vmatprep.subr.bf16.mxu0 0
      %7038 = vmatpush1.bf16.msra.mxu0 0
      %7039 = vmatprep.subr.bf16.mxu0 0
      %7040 = vmatpush1.bf16.msra.mxu0 0
      %7041 = vmatprep.subr.bf16.mxu0 0
      %7042 = vmatpush1.bf16.msra.mxu0 0
      %7043 = vmatprep.subr.bf16.mxu0 0
      %7044 = vmatpush1.bf16.msra.mxu0 0
      %7045 = vmatprep.subr.bf16.mxu0 0
      %7046 = vmatpush1.bf16.msra.mxu0 0
      %7047 = vmatprep.mubr.bf16.mxu0 0
      %7048 = vmatmul.mubr.bf16.gmra.mrb[0].mxu0 %v7013
      %v7049 = vpop.f32.mrb[0].mxu0
      %v7050 = vadd.f32 0.0, %v7049
      %v7051 = vpop.f32.mrb[0].mxu0
      %v7052 = vadd.f32 0.0, %v7051
      %v7053 = vpop.f32.mrb[0].mxu0
      %v7054 = vpop.f32.mrb[0].mxu0
      %7055 = vdwg.mxu0
      %7056 = vmatprep.subr.bf16.mxu0 %v6864
      %7057 = vmatpush1.bf16.msra.mxu0 %v6863
      %7058 = vmatprep.subr.bf16.mxu0 0
      %7059 = vmatpush1.bf16.msra.mxu0 0
      %7060 = vmatprep.subr.bf16.mxu0 0
      %7061 = vmatpush1.bf16.msra.mxu0 0
      %7062 = vmatprep.subr.bf16.mxu0 0
      %7063 = vmatpush1.bf16.msra.mxu0 0
      %7064 = vmatprep.subr.bf16.mxu0 0
      %7065 = vmatpush1.bf16.msra.mxu0 0
      %7066 = vmatprep.subr.bf16.mxu0 0
      %7067 = vmatpush1.bf16.msra.mxu0 0
      %7068 = vmatprep.subr.bf16.mxu0 0
      %7069 = vmatpush1.bf16.msra.mxu0 0
      %7070 = vmatprep.subr.bf16.mxu0 0
      %7071 = vmatpush1.bf16.msra.mxu0 0
      %7072 = vmatprep.subr.bf16.mxu0 0
      %7073 = vmatpush1.bf16.msra.mxu0 0
      %7074 = vmatprep.subr.bf16.mxu0 0
      %7075 = vmatpush1.bf16.msra.mxu0 0
      %7076 = vmatprep.subr.bf16.mxu0 0
      %7077 = vmatpush1.bf16.msra.mxu0 0
      %7078 = vmatprep.subr.bf16.mxu0 0
      %7079 = vmatpush1.bf16.msra.mxu0 0
      %7080 = vmatprep.subr.bf16.mxu0 0
      %7081 = vmatpush1.bf16.msra.mxu0 0
      %7082 = vmatprep.subr.bf16.mxu0 0
      %7083 = vmatpush1.bf16.msra.mxu0 0
      %7084 = vmatprep.subr.bf16.mxu0 0
      %7085 = vmatpush1.bf16.msra.mxu0 0
      %7086 = vmatprep.subr.bf16.mxu0 0
      %7087 = vmatpush1.bf16.msra.mxu0 0
      %7088 = vmatprep.mubr.bf16.mxu0 0
      %7089 = vmatmul.mubr.bf16.gmra.mrb[0].mxu0 %v7013
      %v7090 = vpop.f32.mrb[0].mxu0
      %v7091 = vadd.f32 0.0, %v7090
      %v7092 = vpop.f32.mrb[0].mxu0
      %v7093 = vadd.f32 0.0, %v7092
      %v7094 = vpop.f32.mrb[0].mxu0
      %v7095 = vpop.f32.mrb[0].mxu0
      %7096 = vdwg.mxu0
      %7097 = vmatprep.subr.bf16.mxu0 %v6866
      %7098 = vmatpush1.bf16.msra.mxu0 %v6865
      %7099 = vmatprep.subr.bf16.mxu0 0
      %7100 = vmatpush1.bf16.msra.mxu0 0
      %7101 = vmatprep.subr.bf16.mxu0 0
      %7102 = vmatpush1.bf16.msra.mxu0 0
      %7103 = vmatprep.subr.bf16.mxu0 0
      %7104 = vmatpush1.bf16.msra.mxu0 0
      %7105 = vmatprep.subr.bf16.mxu0 0
      %7106 = vmatpush1.bf16.msra.mxu0 0
      %7107 = vmatprep.subr.bf16.mxu0 0
      %7108 = vmatpush1.bf16.msra.mxu0 0
      %7109 = vmatprep.subr.bf16.mxu0 0
      %7110 = vmatpush1.bf16.msra.mxu0 0
      %7111 = vmatprep.subr.bf16.mxu0 0
      %7112 = vmatpush1.bf16.msra.mxu0 0
      %7113 = vmatprep.subr.bf16.mxu0 0
      %7114 = vmatpush1.bf16.msra.mxu0 0
      %7115 = vmatprep.subr.bf16.mxu0 0
      %7116 = vmatpush1.bf16.msra.mxu0 0
      %7117 = vmatprep.subr.bf16.mxu0 0
      %7118 = vmatpush1.bf16.msra.mxu0 0
      %7119 = vmatprep.subr.bf16.mxu0 0
      %7120 = vmatpush1.bf16.msra.mxu0 0
      %7121 = vmatprep.subr.bf16.mxu0 0
      %7122 = vmatpush1.bf16.msra.mxu0 0
      %7123 = vmatprep.subr.bf16.mxu0 0
      %7124 = vmatpush1.bf16.msra.mxu0 0
      %7125 = vmatprep.subr.bf16.mxu0 0
      %7126 = vmatpush1.bf16.msra.mxu0 0
      %7127 = vmatprep.subr.bf16.mxu0 0
      %7128 = vmatpush1.bf16.msra.mxu0 0
      %7129 = vmatprep.mubr.bf16.mxu0 0
      %7130 = vmatmul.mubr.bf16.gmra.mrb[0].mxu0 %v7013
      %v7131 = vpop.f32.mrb[0].mxu0
      %v7132 = vadd.f32 0.0, %v7131
      %v7133 = vpop.f32.mrb[0].mxu0
      %v7134 = vadd.f32 0.0, %v7133
      %v7135 = vpop.f32.mrb[0].mxu0
      %v7136 = vpop.f32.mrb[0].mxu0
      %7137 = vdwg.mxu0
      %v7138 = vld [vmem:[%s7] sm:$0xff]
      %v7139 = vld [vmem:[%s7 + $0x8] sm:$0xff]
      %v7140 = vld [vmem:[%s7 + $0x10] sm:$0xff]
      %v7141 = vld [vmem:[%s7 + $0x18] sm:$0xff]
      %v7142 = vld [vmem:[%s7 + $0x20] sm:$0xff]
      %v7143 = vld [vmem:[%s7 + $0x28] sm:$0xff]
      %v7144 = vld [vmem:[%s7 + $0x30] sm:$0xff]
      %v7145 = vld [vmem:[%s7 + $0x38] sm:$0xff]
      %v7146 = vld [vmem:[%s7 + $0x40] sm:$0xff]
      %v7147 = vld [vmem:[%s7 + $0x48] sm:$0xff]
      %v7148 = vld [vmem:[%s7 + $0x50] sm:$0xff]
      %v7149 = vld [vmem:[%s7 + $0x58] sm:$0xff]
      %v7150 = vld [vmem:[%s7 + $0x60] sm:$0xff]
      %v7151 = vld [vmem:[%s7 + $0x68] sm:$0xff]
      %v7152 = vld [vmem:[%s7 + $0x70] sm:$0xff]
      %v7153 = vld [vmem:[%s7 + $0x78] sm:$0xff]
      %v7154 = vld [vmem:[%s7 + $0x80] sm:$0xff]
      %v7155 = vld [vmem:[%s7 + $0x88] sm:$0xff]
      %v7156 = vld [vmem:[%s7 + $0x90] sm:$0xff]
      %v7157 = vld [vmem:[%s7 + $0x98] sm:$0xff]
      %v7158 = vld [vmem:[%s7 + $0xa0] sm:$0xff]
      %v7159 = vld [vmem:[%s7 + $0xa8] sm:$0xff]
      %v7160 = vld [vmem:[%s7 + $0xb0] sm:$0xff]
      %v7161 = vld [vmem:[%s7 + $0xb8] sm:$0xff]
      %v7162 = vld [vmem:[%s7 + $0xc0] sm:$0xff]
      %v7163 = vld [vmem:[%s7 + $0xc8] sm:$0xff]
      %v7164 = vld [vmem:[%s7 + $0xd0] sm:$0xff]
      %v7165 = vld [vmem:[%s7 + $0xd8] sm:$0xff]
      %v7166 = vld [vmem:[%s7 + $0xe0] sm:$0xff]
      %v7167 = vld [vmem:[%s7 + $0xe8] sm:$0xff]
      %v7168 = vld [vmem:[%s7 + $0xf0] sm:$0xff]
      %v7169 = vld [vmem:[%s7 + $0xf8] sm:$0xff]
      %v7170 = vld [vmem:[%s7 + $0x100] sm:$0xff]
      %v7171 = vld [vmem:[%s7 + $0x108] sm:$0xff]
      %v7172 = vld [vmem:[%s7 + $0x110] sm:$0xff]
      %v7173 = vld [vmem:[%s7 + $0x118] sm:$0xff]
      %v7174 = vld [vmem:[%s7 + $0x120] sm:$0xff]
      %v7175 = vld [vmem:[%s7 + $0x128] sm:$0xff]
      %v7176 = vld [vmem:[%s7 + $0x130] sm:$0xff]
      %v7177 = vld [vmem:[%s7 + $0x138] sm:$0xff]
      %v7178 = vld [vmem:[%s7 + $0x140] sm:$0xff]
      %v7179 = vld [vmem:[%s7 + $0x148] sm:$0xff]
      %v7180 = vld [vmem:[%s7 + $0x150] sm:$0xff]
      %v7181 = vld [vmem:[%s7 + $0x158] sm:$0xff]
      %v7182 = vld [vmem:[%s7 + $0x160] sm:$0xff]
      %v7183 = vld [vmem:[%s7 + $0x168] sm:$0xff]
      %v7184 = vld [vmem:[%s7 + $0x170] sm:$0xff]
      %v7185 = vld [vmem:[%s7 + $0x178] sm:$0xff]
      %v7186 = vld [vmem:[%s7 + $0x180] sm:$0xff]
      %v7187 = vld [vmem:[%s7 + $0x188] sm:$0xff]
      %v7188 = vld [vmem:[%s7 + $0x190] sm:$0xff]
      %v7189 = vld [vmem:[%s7 + $0x198] sm:$0xff]
      %v7190 = vld [vmem:[%s7 + $0x1a0] sm:$0xff]
      %v7191 = vld [vmem:[%s7 + $0x1a8] sm:$0xff]
      %v7192 = vld [vmem:[%s7 + $0x1b0] sm:$0xff]
      %v7193 = vld [vmem:[%s7 + $0x1b8] sm:$0xff]
      %v7194 = vld [vmem:[%s7 + $0x1c0] sm:$0xff]
      %v7195 = vld [vmem:[%s7 + $0x1c8] sm:$0xff]
      %v7196 = vld [vmem:[%s7 + $0x1d0] sm:$0xff]
      %v7197 = vld [vmem:[%s7 + $0x1d8] sm:$0xff]
      %v7198 = vld [vmem:[%s7 + $0x1e0] sm:$0xff]
      %v7199 = vld [vmem:[%s7 + $0x1e8] sm:$0xff]
      %v7200 = vld [vmem:[%s7 + $0x1f0] sm:$0xff]
      %v7201 = vld [vmem:[%s7 + $0x1f8] sm:$0xff]
      %v7202 = vld [vmem:[%s7 + $0x200] sm:$0xff]
      %v7203 = vld [vmem:[%s7 + $0x208] sm:$0xff]
      %v7204 = vld [vmem:[%s7 + $0x210] sm:$0xff]
      %v7205 = vld [vmem:[%s7 + $0x218] sm:$0xff]
      %v7206 = vld [vmem:[%s7 + $0x220] sm:$0xff]
      %v7207 = vld [vmem:[%s7 + $0x228] sm:$0xff]
      %v7208 = vld [vmem:[%s7 + $0x230] sm:$0xff]
      %v7209 = vld [vmem:[%s7 + $0x238] sm:$0xff]
      %v7210 = vld [vmem:[%s7 + $0x240] sm:$0xff]
      %v7211 = vld [vmem:[%s7 + $0x248] sm:$0xff]
      %v7212 = vld [vmem:[%s7 + $0x250] sm:$0xff]
      %v7213 = vld [vmem:[%s7 + $0x258] sm:$0xff]
      %v7214 = vld [vmem:[%s7 + $0x260] sm:$0xff]
      %v7215 = vld [vmem:[%s7 + $0x268] sm:$0xff]
      %v7216 = vld [vmem:[%s7 + $0x270] sm:$0xff]
      %v7217 = vld [vmem:[%s7 + $0x278] sm:$0xff]
      %v7218 = vld [vmem:[%s7 + $0x280] sm:$0xff]
      %v7219 = vld [vmem:[%s7 + $0x288] sm:$0xff]
      %v7220 = vld [vmem:[%s7 + $0x290] sm:$0xff]
      %v7221 = vld [vmem:[%s7 + $0x298] sm:$0xff]
      %v7222 = vld [vmem:[%s7 + $0x2a0] sm:$0xff]
      %v7223 = vld [vmem:[%s7 + $0x2a8] sm:$0xff]
      %v7224 = vld [vmem:[%s7 + $0x2b0] sm:$0xff]
      %v7225 = vld [vmem:[%s7 + $0x2b8] sm:$0xff]
      %v7226 = vld [vmem:[%s7 + $0x2c0] sm:$0xff]
      %v7227 = vld [vmem:[%s7 + $0x2c8] sm:$0xff]
      %v7228 = vld [vmem:[%s7 + $0x2d0] sm:$0xff]
      %v7229 = vld [vmem:[%s7 + $0x2d8] sm:$0xff]
      %v7230 = vld [vmem:[%s7 + $0x2e0] sm:$0xff]
      %v7231 = vld [vmem:[%s7 + $0x2e8] sm:$0xff]
      %v7232 = vld [vmem:[%s7 + $0x2f0] sm:$0xff]
      %v7233 = vld [vmem:[%s7 + $0x2f8] sm:$0xff]
      %v7234 = vld [vmem:[#allocation2] sm:$0x1]
      %7235 = vmatprep.subr.mxu0 0.0
      %7236 = vmatpush1.msra.mxu0 %v7138
      %7237 = vmatprep.subr.mxu0 0.0
      %7238 = vmatpush1.msra.mxu0 %v7139
      %7239 = vmatprep.subr.mxu0 0.0
      %7240 = vmatpush1.msra.mxu0 %v7140
      %7241 = vmatprep.subr.mxu0 0.0
      %7242 = vmatpush1.msra.mxu0 %v7141
      %7243 = vmatprep.subr.mxu0 0.0
      %7244 = vmatpush1.msra.mxu0 %v7142
      %7245 = vmatprep.subr.mxu0 0.0
      %7246 = vmatpush1.msra.mxu0 %v7143
      %7247 = vmatprep.subr.mxu0 0.0
      %7248 = vmatpush1.msra.mxu0 %v7144
      %7249 = vmatprep.subr.mxu0 0.0
      %7250 = vmatpush1.msra.mxu0 %v7145
      %7251 = vmatprep.subr.mxu0 0.0
      %7252 = vmatpush1.msra.mxu0 %v7146
      %7253 = vmatprep.subr.mxu0 0.0
      %7254 = vmatpush1.msra.mxu0 %v7147
      %7255 = vmatprep.subr.mxu0 0.0
      %7256 = vmatpush1.msra.mxu0 %v7148
      %7257 = vmatprep.subr.mxu0 0.0
      %7258 = vmatpush1.msra.mxu0 %v7149
      %7259 = vmatprep.subr.mxu0 0.0
      %7260 = vmatpush1.msra.mxu0 %v7150
      %7261 = vmatprep.subr.mxu0 0.0
      %7262 = vmatpush1.msra.mxu0 %v7151
      %7263 = vmatprep.subr.mxu0 0.0
      %7264 = vmatpush1.msra.mxu0 %v7152
      %7265 = vmatprep.subr.mxu0 0.0
      %7266 = vmatpush1.msra.mxu0 %v7153
      %7267 = vmatprep.subr.mxu0 0.0
      %7268 = vmatpush1.msra.mxu0 %v7154
      %7269 = vmatprep.subr.mxu0 0.0
      %7270 = vmatpush1.msra.mxu0 %v7155
      %7271 = vmatprep.subr.mxu0 0.0
      %7272 = vmatpush1.msra.mxu0 %v7156
      %7273 = vmatprep.subr.mxu0 0.0
      %7274 = vmatpush1.msra.mxu0 %v7157
      %7275 = vmatprep.subr.mxu0 0.0
      %7276 = vmatpush1.msra.mxu0 %v7158
      %7277 = vmatprep.subr.mxu0 0.0
      %7278 = vmatpush1.msra.mxu0 %v7159
      %7279 = vmatprep.subr.mxu0 0.0
      %7280 = vmatpush1.msra.mxu0 %v7160
      %7281 = vmatprep.subr.mxu0 0.0
      %7282 = vmatpush1.msra.mxu0 %v7161
      %7283 = vmatprep.subr.mxu0 0.0
      %7284 = vmatpush1.msra.mxu0 %v7162
      %7285 = vmatprep.subr.mxu0 0.0
      %7286 = vmatpush1.msra.mxu0 %v7163
      %7287 = vmatprep.subr.mxu0 0.0
      %7288 = vmatpush1.msra.mxu0 %v7164
      %7289 = vmatprep.subr.mxu0 0.0
      %7290 = vmatpush1.msra.mxu0 %v7165
      %7291 = vmatprep.subr.mxu0 0.0
      %7292 = vmatpush1.msra.mxu0 %v7166
      %7293 = vmatprep.subr.mxu0 0.0
      %7294 = vmatpush1.msra.mxu0 %v7167
      %7295 = vmatprep.subr.mxu0 0.0
      %7296 = vmatpush1.msra.mxu0 %v7168
      %7297 = vmatprep.subr.mxu0 0.0
      %7298 = vmatpush1.msra.mxu0 %v7169
      %7299 = vmatprep.mubr.f32.mxu0 %v7052
      %7300 = vmatmul.mubr.f32.gmra.mrb[0].mxu0 %v7050
      %v7301 = vpop.f32.mrb[0].mxu0
      %v7302 = vadd.f32 %v7234, %v7301
      %v7303 = vpop.f32.mrb[0].mxu0
      %7304 = vdwg.mxu0
      %7305 = vmatprep.subr.mxu0 0.0
      %7306 = vmatpush1.msra.mxu0 %v7170
      %7307 = vmatprep.subr.mxu0 0.0
      %7308 = vmatpush1.msra.mxu0 %v7171
      %7309 = vmatprep.subr.mxu0 0.0
      %7310 = vmatpush1.msra.mxu0 %v7172
      %7311 = vmatprep.subr.mxu0 0.0
      %7312 = vmatpush1.msra.mxu0 %v7173
      %7313 = vmatprep.subr.mxu0 0.0
      %7314 = vmatpush1.msra.mxu0 %v7174
      %7315 = vmatprep.subr.mxu0 0.0
      %7316 = vmatpush1.msra.mxu0 %v7175
      %7317 = vmatprep.subr.mxu0 0.0
      %7318 = vmatpush1.msra.mxu0 %v7176
      %7319 = vmatprep.subr.mxu0 0.0
      %7320 = vmatpush1.msra.mxu0 %v7177
      %7321 = vmatprep.subr.mxu0 0.0
      %7322 = vmatpush1.msra.mxu0 %v7178
      %7323 = vmatprep.subr.mxu0 0.0
      %7324 = vmatpush1.msra.mxu0 %v7179
      %7325 = vmatprep.subr.mxu0 0.0
      %7326 = vmatpush1.msra.mxu0 %v7180
      %7327 = vmatprep.subr.mxu0 0.0
      %7328 = vmatpush1.msra.mxu0 %v7181
      %7329 = vmatprep.subr.mxu0 0.0
      %7330 = vmatpush1.msra.mxu0 %v7182
      %7331 = vmatprep.subr.mxu0 0.0
      %7332 = vmatpush1.msra.mxu0 %v7183
      %7333 = vmatprep.subr.mxu0 0.0
      %7334 = vmatpush1.msra.mxu0 %v7184
      %7335 = vmatprep.subr.mxu0 0.0
      %7336 = vmatpush1.msra.mxu0 %v7185
      %7337 = vmatprep.subr.mxu0 0.0
      %7338 = vmatpush1.msra.mxu0 %v7186
      %7339 = vmatprep.subr.mxu0 0.0
      %7340 = vmatpush1.msra.mxu0 %v7187
      %7341 = vmatprep.subr.mxu0 0.0
      %7342 = vmatpush1.msra.mxu0 %v7188
      %7343 = vmatprep.subr.mxu0 0.0
      %7344 = vmatpush1.msra.mxu0 %v7189
      %7345 = vmatprep.subr.mxu0 0.0
      %7346 = vmatpush1.msra.mxu0 %v7190
      %7347 = vmatprep.subr.mxu0 0.0
      %7348 = vmatpush1.msra.mxu0 %v7191
      %7349 = vmatprep.subr.mxu0 0.0
      %7350 = vmatpush1.msra.mxu0 %v7192
      %7351 = vmatprep.subr.mxu0 0.0
      %7352 = vmatpush1.msra.mxu0 %v7193
      %7353 = vmatprep.subr.mxu0 0.0
      %7354 = vmatpush1.msra.mxu0 %v7194
      %7355 = vmatprep.subr.mxu0 0.0
      %7356 = vmatpush1.msra.mxu0 %v7195
      %7357 = vmatprep.subr.mxu0 0.0
      %7358 = vmatpush1.msra.mxu0 %v7196
      %7359 = vmatprep.subr.mxu0 0.0
      %7360 = vmatpush1.msra.mxu0 %v7197
      %7361 = vmatprep.subr.mxu0 0.0
      %7362 = vmatpush1.msra.mxu0 %v7198
      %7363 = vmatprep.subr.mxu0 0.0
      %7364 = vmatpush1.msra.mxu0 %v7199
      %7365 = vmatprep.subr.mxu0 0.0
      %7366 = vmatpush1.msra.mxu0 %v7200
      %7367 = vmatprep.subr.mxu0 0.0
      %7368 = vmatpush1.msra.mxu0 %v7201
      %7369 = vmatprep.mubr.f32.mxu0 %v7093
      %7370 = vmatmul.mubr.f32.gmra.mrb[0].mxu0 %v7091
      %v7371 = vpop.f32.mrb[0].mxu0
      %v7372 = vadd.f32 %v7302, %v7371
      %v7373 = vpop.f32.mrb[0].mxu0
      %7374 = vdwg.mxu0
      %7375 = vmatprep.subr.mxu0 0.0
      %7376 = vmatpush1.msra.mxu0 %v7202
      %7377 = vmatprep.subr.mxu0 0.0
      %7378 = vmatpush1.msra.mxu0 %v7203
      %7379 = vmatprep.subr.mxu0 0.0
      %7380 = vmatpush1.msra.mxu0 %v7204
      %7381 = vmatprep.subr.mxu0 0.0
      %7382 = vmatpush1.msra.mxu0 %v7205
      %7383 = vmatprep.subr.mxu0 0.0
      %7384 = vmatpush1.msra.mxu0 %v7206
      %7385 = vmatprep.subr.mxu0 0.0
      %7386 = vmatpush1.msra.mxu0 %v7207
      %7387 = vmatprep.subr.mxu0 0.0
      %7388 = vmatpush1.msra.mxu0 %v7208
      %7389 = vmatprep.subr.mxu0 0.0
      %7390 = vmatpush1.msra.mxu0 %v7209
      %7391 = vmatprep.subr.mxu0 0.0
      %7392 = vmatpush1.msra.mxu0 %v7210
      %7393 = vmatprep.subr.mxu0 0.0
      %7394 = vmatpush1.msra.mxu0 %v7211
      %7395 = vmatprep.subr.mxu0 0.0
      %7396 = vmatpush1.msra.mxu0 %v7212
      %7397 = vmatprep.subr.mxu0 0.0
      %7398 = vmatpush1.msra.mxu0 %v7213
      %7399 = vmatprep.subr.mxu0 0.0
      %7400 = vmatpush1.msra.mxu0 %v7214
      %7401 = vmatprep.subr.mxu0 0.0
      %7402 = vmatpush1.msra.mxu0 %v7215
      %7403 = vmatprep.subr.mxu0 0.0
      %7404 = vmatpush1.msra.mxu0 %v7216
      %7405 = vmatprep.subr.mxu0 0.0
      %7406 = vmatpush1.msra.mxu0 %v7217
      %7407 = vmatprep.subr.mxu0 0.0
      %7408 = vmatpush1.msra.mxu0 %v7218
      %7409 = vmatprep.subr.mxu0 0.0
      %7410 = vmatpush1.msra.mxu0 %v7219
      %7411 = vmatprep.subr.mxu0 0.0
      %7412 = vmatpush1.msra.mxu0 %v7220
      %7413 = vmatprep.subr.mxu0 0.0
      %7414 = vmatpush1.msra.mxu0 %v7221
      %7415 = vmatprep.subr.mxu0 0.0
      %7416 = vmatpush1.msra.mxu0 %v7222
      %7417 = vmatprep.subr.mxu0 0.0
      %7418 = vmatpush1.msra.mxu0 %v7223
      %7419 = vmatprep.subr.mxu0 0.0
      %7420 = vmatpush1.msra.mxu0 %v7224
      %7421 = vmatprep.subr.mxu0 0.0
      %7422 = vmatpush1.msra.mxu0 %v7225
      %7423 = vmatprep.subr.mxu0 0.0
      %7424 = vmatpush1.msra.mxu0 %v7226
      %7425 = vmatprep.subr.mxu0 0.0
      %7426 = vmatpush1.msra.mxu0 %v7227
      %7427 = vmatprep.subr.mxu0 0.0
      %7428 = vmatpush1.msra.mxu0 %v7228
      %7429 = vmatprep.subr.mxu0 0.0
      %7430 = vmatpush1.msra.mxu0 %v7229
      %7431 = vmatprep.subr.mxu0 0.0
      %7432 = vmatpush1.msra.mxu0 %v7230
      %7433 = vmatprep.subr.mxu0 0.0
      %7434 = vmatpush1.msra.mxu0 %v7231
      %7435 = vmatprep.subr.mxu0 0.0
      %7436 = vmatpush1.msra.mxu0 %v7232
      %7437 = vmatprep.subr.mxu0 0.0
      %7438 = vmatpush1.msra.mxu0 %v7233
      %7439 = vmatprep.mubr.f32.mxu0 %v7134
      %7440 = vmatmul.mubr.f32.gmra.mrb[0].mxu0 %v7132
      %v7441 = vpop.f32.mrb[0].mxu0
      %v7442 = vadd.f32 %v7372, %v7441
      %v7443 = vpop.f32.mrb[0].mxu0
      %7444 = vdwg.mxu0
      %vm7445 = vcmask 0
      %7446 = vst.msk [vmem:[%s365] sm:$0x1] %vm7445, %v7442
      %p7447 = scmp.lt.s32.totalorder %s24, 1
      %s7448 = scalar_select %p7447, %s24, 1
      %s7449 = scalar_lea.vmem %s9, %s7448
      %p7450 = scmp.lt.s32.totalorder %s24, 1
      %s7451 = scalar_select %p7450, %s24, 1
      %s7452 = smul.addr %s7451, 2
      %s7453 = smul.addr %s7452, 8
      %s7454 = scalar_lea.vmem %s10, %s7453
      // Predicated region
      $region57: #{_head_arrays.1} parent=55 // pred_check
        %p7455 = pneg %p236
      $region58: #{_head_arrays.1} parent=55 // pred_check_branch
        %7457 = sbr.rel (%p7455) target = $region60
      $region59: #{_head_arrays.1} parent=55 // pred_region
        _
      $region60: #{_head_arrays.1} parent=55 // pred_fallthru
        _
      // Predicated region
      $region61: #{_head_arrays.1} parent=55 // pred_check
        %p7458 = pneg %p262
      $region62: #{_head_arrays.1} parent=55 // pred_check_branch
        %7460 = sbr.rel (%p7458) target = $region64
      $region63: #{_head_arrays.1} parent=55 // pred_region
        _
      $region64: #{_head_arrays.1} parent=55 // pred_fallthru
        _
    $region56: #{_head_arrays.1} parent=5 // pred_fallthru
      _
    %p7461 = scmp.le.s32.totalorder 2, %s19
    // Predicated region
    $region65: #{_head_arrays.1} parent=5 // pred_check
      %p7462 = pneg %p7461
    $region66: #{_head_arrays.1} parent=5 // pred_check_branch
      %7464 = sbr.rel (%p7462) target = $region68
    $region67: #{_head_arrays.1} parent=5 // pred_region
      %s7465 = ssub.s32 %s19, 2
      // Predicated region
      $region69: #{_head_arrays.1} parent=67 // pred_check
        %p7466 = pneg %p242
      $region70: #{_head_arrays.1} parent=67 // pred_check_branch
        %7468 = sbr.rel (%p7466) target = $region72
      $region71: #{_head_arrays.1} parent=67 // pred_region
        %p7469 = scmp.lt.s32.totalorder %s25, 1
        %s7470 = scalar_select %p7469, %s25, 1
        %s7471 = scalar_lea.vmem %s9, %s7470
      $region72: #{_head_arrays.1} parent=67 // pred_fallthru
        _
      // Predicated region
      $region73: #{_head_arrays.1} parent=67 // pred_check
        %p7472 = pneg %p268
      $region74: #{_head_arrays.1} parent=67 // pred_check_branch
        %7474 = sbr.rel (%p7472) target = $region76
      $region75: #{_head_arrays.1} parent=67 // pred_region
        %p7475 = scmp.lt.s32.totalorder %s25, 1
        %s7476 = scalar_select %p7475, %s25, 1
        %s7477 = smul.addr %s7476, 2
        %s7478 = smul.addr %s7477, 8
        %s7479 = scalar_lea.vmem %s10, %s7478
      $region76: #{_head_arrays.1} parent=67 // pred_fallthru
        _
    $region68: #{_head_arrays.1} parent=5 // pred_fallthru
      _
  $region6: #{_head_arrays.1} parent=0 // loop_footer
    %s23 = sadd.s32 1, %s19
  $region7: #{_head_arrays.1} parent=0 // loop_footer_branch
    %18 = sbr.rel target = $region3
  $region8: #{_head_arrays.1} parent=0 // loop_exit
    _

</llo_original>
